<compile_context>
chip_gen: v7x
topology: tpu7x:2x2x1
jax: 0.10.0
libtpu: 0.0.40
codegen_flags: <defaults>
</compile_context>

<pallas_src>
import jax
import jax.numpy as jnp
from jax.experimental import pallas as pl
from jax.experimental.pallas import tpu as pltpu


def _round_up(x, m):
    return (x + m - 1) // m * m


# ----------------------------- fused kernel -----------------------------------

def _make_fused_kernel(num_layers, seq_len, b_pad, hidden):
    """Builds the fused stacked-LSTM + FC kernel for static (L, S, Bp, H)."""
    S, Bp, H = seq_len, b_pad, hidden

    def _sigmoid(x):
        # Exact sigmoid via a single EUP tanh pass: sigmoid(x) = 0.5*(tanh(x/2)+1).
        return 0.5 * jnp.tanh(0.5 * x) + 0.5

    def _cell(gates, c_prev):
        # gates: (Bp, 4H) with columns pre-reordered to (i, f, o, g).
        sig = _sigmoid(gates[:, : 3 * H])          # one EUP pass over 3H columns
        g_g = jnp.tanh(gates[:, 3 * H:])           # one EUP pass over H columns
        i_g = sig[:, 0 * H: 1 * H]
        f_g = sig[:, 1 * H: 2 * H]
        o_g = sig[:, 2 * H: 3 * H]
        c_new = f_g * c_prev + i_g * g_g
        h_new = o_g * jnp.tanh(c_new)
        return h_new, c_new

    def kernel(*refs):
        it = iter(refs)
        x_ref = next(it)                                         # (S*Bp, D) time-major
        wih0_ref = next(it)                                      # (D, 4H)
        whh0_ref = next(it)                                      # (H, 4H)
        b0_ref = next(it)                                        # (1, 4H)
        upper = [(next(it), next(it), next(it))                  # (H,4H),(H,4H),(1,4H)
                 for _ in range(num_layers - 1)]
        fc_w_ref = next(it)                                      # (H, Op)
        fc_b_ref = next(it)                                      # (1, Op)
        out_ref = next(it)                                       # (Bp, Op)
        g0_sc = next(it)                                         # (S*Bp, 4H) scratch

        # Layer-0 input projection hoisted off the serial critical path:
        # one well-shaped MXU matmul over the whole sequence.
        g0_sc[...] = (
            jnp.dot(x_ref[...], wih0_ref[...], preferred_element_type=jnp.float32)
            + b0_ref[...]
        )

        zeros = jnp.zeros((Bp, H), jnp.float32)
        h = [zeros] * num_layers          # loop-carried in vregs, never hits VMEM
        c = [zeros] * num_layers

        # Wavefront recurrence: time outer, layers inner.  Step (l, t) depends only on
        # (l-1, t) and (l, t-1), so adjacent layers' MXU/EUP latencies can overlap.
        for t in range(S):
            # ---- layer 0: precomputed input projection + recurrent matmul ----
            gates0 = g0_sc[pl.ds(t * Bp, Bp), :] + jnp.dot(
                h[0], whh0_ref[...], preferred_element_type=jnp.float32)
            h[0], c[0] = _cell(gates0, c[0])

            # ---- layers 1..L-1: per-step input projection (same shape as h matmul) ----
            for l in range(1, num_layers):
                wih_ref, whh_ref, b_ref = upper[l - 1]
                gates = (
                    jnp.dot(h[l - 1], wih_ref[...], preferred_element_type=jnp.float32)
                    + jnp.dot(h[l], whh_ref[...], preferred_element_type=jnp.float32)
                    + b_ref[...]
                )
                h[l], c[l] = _cell(gates, c[l])

        # Final Linear on the last hidden state (lane-padded output slab).
        out_ref[...] = (
            jnp.dot(h[num_layers - 1], fc_w_ref[...], preferred_element_type=jnp.float32)
            + fc_b_ref[...]
        ).astype(out_ref.dtype)

    return kernel


# ------------------------------- forward wrapper -------------------------------

def _reorder_gates(w):
    """Reorder the 4H gate axis from PyTorch (i, f, g, o) to kernel (i, f, o, g)."""
    i, f, g, o = jnp.split(w, 4, axis=-1)
    return jnp.concatenate([i, f, o, g], axis=-1)


@jax.jit
def stacked_lstm_forward(x_bsd, params):
    """x_bsd: (batch, seq, input_size) batch-first, like nn.LSTM(batch_first=True)."""
    B, S, D = x_bsd.shape
    layers = params["layers"]
    L = len(layers)
    H = layers[0]["whh_t"].shape[0]
    O = params["fc_w_t"].shape[1]
    Bp = _round_up(max(B, 8), 8)          # pad batch to the f32 sublane quantum
    Op = _round_up(max(O, 128), 128)      # pad FC output lanes -> unmasked vst

    # Tiny HBM-side layout prep (pad + time-major flatten) so every per-step access
    # inside the serial recurrence is a static, sublane-aligned slice.
    xp = jnp.pad(x_bsd.astype(jnp.float32), ((0, Bp - B), (0, 0), (0, 0)))
    x2d = jnp.transpose(xp, (1, 0, 2)).reshape(S * Bp, D)       # (S*Bp, D)

    in_arrays = [x2d]
    in_specs = [pl.BlockSpec((S * Bp, D), lambda: (0, 0))]
    for lp in layers:
        d_in = lp["wih_t"].shape[0]
        # Gate reorder is cheap weight-shape work; at production, pre-reorder once offline.
        in_arrays += [
            _reorder_gates(lp["wih_t"]),
            _reorder_gates(lp["whh_t"]),
            _reorder_gates(lp["bias"]),
        ]
        in_specs += [
            pl.BlockSpec((d_in, 4 * H), lambda: (0, 0)),
            pl.BlockSpec((H, 4 * H), lambda: (0, 0)),
            pl.BlockSpec((1, 4 * H), lambda: (0, 0)),
        ]
    fc_w_pad = jnp.pad(params["fc_w_t"], ((0, 0), (0, Op - O)))
    fc_b_pad = jnp.pad(params["fc_b"], ((0, 0), (0, Op - O)))
    in_arrays += [fc_w_pad, fc_b_pad]
    in_specs += [
        pl.BlockSpec((H, Op), lambda: (0, 0)),
        pl.BlockSpec((1, Op), lambda: (0, 0)),
    ]

    kernel = _make_fused_kernel(L, S, Bp, H)

    out_padded = pl.pallas_call(
        kernel,
        out_shape=jax.ShapeDtypeStruct((Bp, Op), jnp.float32),
        in_specs=in_specs,
        out_specs=pl.BlockSpec((Bp, Op), lambda: (0, 0)),
        scratch_shapes=[
            pltpu.VMEM((S * Bp, 4 * H), jnp.float32),   # hoisted layer-0 gate projection
        ],
        compiler_params=pltpu.CompilerParams(
            vmem_limit_bytes=32 * 1024 * 1024,
        ),
    )(*in_arrays)

    return out_padded[:B, :O]                            # drop batch & lane padding


# ------------------------------- params & reference ----------------------------

def init_params(key, input_size, hidden_size, num_layers, output_size):
    """Deterministic params matching nn.LSTM / nn.Linear shapes (uniform +-1/sqrt(H))."""
    H = hidden_size
    bound = 1.0 / jnp.sqrt(jnp.float32(H))
    params = {"layers": []}
    for layer in range(num_layers):
        d_in = input_size if layer == 0 else hidden_size
        key, k1, k2, k3, k4 = jax.random.split(key, 5)
        w_ih = jax.random.uniform(k1, (4 * H, d_in), jnp.float32, -bound, bound)
        w_hh = jax.random.uniform(k2, (4 * H, H), jnp.float32, -bound, bound)
        b_ih = jax.random.uniform(k3, (4 * H,), jnp.float32, -bound, bound)
        b_hh = jax.random.uniform(k4, (4 * H,), jnp.float32, -bound, bound)
        params["layers"].append(
            {
                "wih_t": w_ih.T,                    # (d_in, 4H)  PyTorch gate order (i,f,g,o)
                "whh_t": w_hh.T,                    # (H, 4H)
                "bias": (b_ih + b_hh)[None, :],     # (1, 4H)
            }
        )
    key, k5, k6 = jax.random.split(key, 3)
    w_fc = jax.random.uniform(k5, (output_size, H), jnp.float32, -bound, bound)
    b_fc = jax.random.uniform(k6, (output_size,), jnp.float32, -bound, bound)
    params["fc_w_t"] = w_fc.T                       # (H, O)
    params["fc_b"] = b_fc[None, :]                  # (1, O)
    return params


def stacked_lstm_reference(x_bsd, params):
    """Pure-JAX reference (eval-mode nn.LSTM + Linear on last step), PyTorch gate order."""
    x_seq = jnp.transpose(x_bsd, (1, 0, 2))
    for layer_p in params["layers"]:
        S, B, _ = x_seq.shape
        H = layer_p["whh_t"].shape[0]
        h = jnp.zeros((B, H), jnp.float32)
        c = jnp.zeros((B, H), jnp.float32)
        outs = []
        for t in range(S):
            gates = x_seq[t] @ layer_p["wih_t"] + h @ layer_p["whh_t"] + layer_p["bias"]
            i = jax.nn.sigmoid(gates[:, 0 * H:1 * H])
            f = jax.nn.sigmoid(gates[:, 1 * H:2 * H])
            g = jnp.tanh(gates[:, 2 * H:3 * H])
            o = jax.nn.sigmoid(gates[:, 3 * H:4 * H])
            c = f * c + i * g
            h = o * jnp.tanh(c)
            outs.append(h)
        x_seq = jnp.stack(outs, axis=0)
    return x_seq[-1] @ params["fc_w_t"] + params["fc_b"]


if __name__ == "__main__":
    BATCH, SEQ, INPUT_SIZE, HIDDEN, LAYERS, OUTPUT_SIZE = 2, 8, 16, 32, 2, 4

    key = jax.random.PRNGKey(0)
    key, kx = jax.random.split(key)
    x = jax.random.normal(kx, (BATCH, SEQ, INPUT_SIZE), jnp.float32)

    params = init_params(key, INPUT_SIZE, HIDDEN, LAYERS, OUTPUT_SIZE)

    out = stacked_lstm_forward(x, params)
    out = jax.block_until_ready(out)

    ref = stacked_lstm_reference(x, params)
    assert out.shape == (BATCH, OUTPUT_SIZE), out.shape
    assert jnp.allclose(out, ref, atol=1e-4, rtol=1e-4), (out, ref)

    print("KERNEL_OK")
</pallas_src>

<mosaic_0001>
module attributes {stable_mosaic.version = 11 : i64} {
  func.func @kernel(%arg0: memref<64x16xf32, #tpu.memory_space<vmem>>, %arg1: memref<16x128xf32, #tpu.memory_space<vmem>>, %arg2: memref<32x128xf32, #tpu.memory_space<vmem>>, %arg3: memref<1x128xf32, #tpu.memory_space<vmem>>, %arg4: memref<32x128xf32, #tpu.memory_space<vmem>>, %arg5: memref<32x128xf32, #tpu.memory_space<vmem>>, %arg6: memref<1x128xf32, #tpu.memory_space<vmem>>, %arg7: memref<32x128xf32, #tpu.memory_space<vmem>>, %arg8: memref<1x128xf32, #tpu.memory_space<vmem>>, %arg9: memref<8x128xf32, #tpu.memory_space<vmem>>, %arg10: memref<64x128xf32, #tpu.memory_space<vmem>>) attributes {dimension_semantics = [], scalar_prefetch = 0 : i64, scratch_operands = 1 : i64, tpu.core_type = #tpu.core_type<tc>} {
    %c0 = arith.constant 0 : index
    %c0_0 = arith.constant 0 : index
    %0 = vector.load %arg0[%c0, %c0_0] : memref<64x16xf32, #tpu.memory_space<vmem>>, vector<64x16xf32>
    %c0_1 = arith.constant 0 : index
    %c0_2 = arith.constant 0 : index
    %1 = vector.load %arg1[%c0_1, %c0_2] : memref<16x128xf32, #tpu.memory_space<vmem>>, vector<16x128xf32>
    %cst = arith.constant dense<0.000000e+00> : vector<64x128xf32>
    %2 = tpu.matmul %0, %1, %cst {dimension_numbers = #tpu.dot_dimension_numbers<[1], [0], [0], [1], [0, 0, 1, 1], [], []>} : vector<64x16xf32>, vector<16x128xf32>, vector<64x128xf32> -> vector<64x128xf32>
    %c0_3 = arith.constant 0 : index
    %c0_4 = arith.constant 0 : index
    %3 = vector.load %arg3[%c0_3, %c0_4] : memref<1x128xf32, #tpu.memory_space<vmem>>, vector<1x128xf32>
    %4 = vector.broadcast %3 : vector<1x128xf32> to vector<64x128xf32>
    %5 = arith.addf %2, %4 : vector<64x128xf32>
    %c0_5 = arith.constant 0 : index
    %c0_6 = arith.constant 0 : index
    %6 = vector.load %arg10[%c0_5, %c0_6] : memref<64x128xf32, #tpu.memory_space<vmem>>, vector<64x128xf32>
    tpu.vector_store %arg10[%c0_5, %c0_6], %5 {strides = array<i32>} : memref<64x128xf32, #tpu.memory_space<vmem>>, vector<64x128xf32>,
    %cst_7 = arith.constant 0.000000e+00 : f32
    %7 = vector.broadcast %cst_7 : f32 to vector<8x32xf32>
    %c0_8 = arith.constant 0 : index
    %c0_9 = arith.constant 0 : index
    %8 = vector.load %arg10[%c0_8, %c0_9] : memref<64x128xf32, #tpu.memory_space<vmem>>, vector<8x128xf32>
    %c0_10 = arith.constant 0 : index
    %c0_11 = arith.constant 0 : index
    %9 = vector.load %arg2[%c0_10, %c0_11] : memref<32x128xf32, #tpu.memory_space<vmem>>, vector<32x128xf32>
    %cst_12 = arith.constant dense<0.000000e+00> : vector<8x128xf32>
    %10 = tpu.matmul %7, %9, %cst_12 {dimension_numbers = #tpu.dot_dimension_numbers<[1], [0], [0], [1], [0, 0, 1, 1], [], []>} : vector<8x32xf32>, vector<32x128xf32>, vector<8x128xf32> -> vector<8x128xf32>
    %11 = arith.addf %8, %10 : vector<8x128xf32>
    %12 = vector.extract_strided_slice %11 {offsets = [0, 0], sizes = [8, 96], strides = [1, 1]} : vector<8x128xf32> to vector<8x96xf32>
    %cst_13 = arith.constant 5.000000e-01 : f32
    %13 = vector.broadcast %cst_13 : f32 to vector<8x96xf32>
    %14 = arith.mulf %13, %12 : vector<8x96xf32>
    %15 = math.tanh %14 : vector<8x96xf32>
    %cst_14 = arith.constant 5.000000e-01 : f32
    %16 = vector.broadcast %cst_14 : f32 to vector<8x96xf32>
    %17 = arith.mulf %16, %15 : vector<8x96xf32>
    %cst_15 = arith.constant 5.000000e-01 : f32
    %18 = vector.broadcast %cst_15 : f32 to vector<8x96xf32>
    %19 = arith.addf %17, %18 : vector<8x96xf32>
    %20 = vector.extract_strided_slice %11 {offsets = [0, 96], sizes = [8, 32], strides = [1, 1]} : vector<8x128xf32> to vector<8x32xf32>
    %21 = math.tanh %20 : vector<8x32xf32>
    %22 = vector.extract_strided_slice %19 {offsets = [0, 0], sizes = [8, 32], strides = [1, 1]} : vector<8x96xf32> to vector<8x32xf32>
    %23 = vector.extract_strided_slice %19 {offsets = [0, 32], sizes = [8, 32], strides = [1, 1]} : vector<8x96xf32> to vector<8x32xf32>
    %24 = vector.extract_strided_slice %19 {offsets = [0, 64], sizes = [8, 32], strides = [1, 1]} : vector<8x96xf32> to vector<8x32xf32>
    %25 = arith.mulf %23, %7 : vector<8x32xf32>
    %26 = arith.mulf %22, %21 : vector<8x32xf32>
    %27 = arith.addf %25, %26 : vector<8x32xf32>
    %28 = math.tanh %27 : vector<8x32xf32>
    %29 = arith.mulf %24, %28 : vector<8x32xf32>
    %c0_16 = arith.constant 0 : index
    %c0_17 = arith.constant 0 : index
    %30 = vector.load %arg4[%c0_16, %c0_17] : memref<32x128xf32, #tpu.memory_space<vmem>>, vector<32x128xf32>
    %cst_18 = arith.constant dense<0.000000e+00> : vector<8x128xf32>
    %31 = tpu.matmul %29, %30, %cst_18 {dimension_numbers = #tpu.dot_dimension_numbers<[1], [0], [0], [1], [0, 0, 1, 1], [], []>} : vector<8x32xf32>, vector<32x128xf32>, vector<8x128xf32> -> vector<8x128xf32>
    %c0_19 = arith.constant 0 : index
    %c0_20 = arith.constant 0 : index
    %32 = vector.load %arg5[%c0_19, %c0_20] : memref<32x128xf32, #tpu.memory_space<vmem>>, vector<32x128xf32>
    %cst_21 = arith.constant dense<0.000000e+00> : vector<8x128xf32>
    %33 = tpu.matmul %7, %32, %cst_21 {dimension_numbers = #tpu.dot_dimension_numbers<[1], [0], [0], [1], [0, 0, 1, 1], [], []>} : vector<8x32xf32>, vector<32x128xf32>, vector<8x128xf32> -> vector<8x128xf32>
    %34 = arith.addf %31, %33 : vector<8x128xf32>
    %c0_22 = arith.constant 0 : index
    %c0_23 = arith.constant 0 : index
    %35 = vector.load %arg6[%c0_22, %c0_23] : memref<1x128xf32, #tpu.memory_space<vmem>>, vector<1x128xf32>
    %36 = vector.broadcast %35 : vector<1x128xf32> to vector<8x128xf32>
    %37 = arith.addf %34, %36 : vector<8x128xf32>
    %38 = vector.extract_strided_slice %37 {offsets = [0, 0], sizes = [8, 96], strides = [1, 1]} : vector<8x128xf32> to vector<8x96xf32>
    %cst_24 = arith.constant 5.000000e-01 : f32
    %39 = vector.broadcast %cst_24 : f32 to vector<8x96xf32>
    %40 = arith.mulf %39, %38 : vector<8x96xf32>
    %41 = math.tanh %40 : vector<8x96xf32>
    %cst_25 = arith.constant 5.000000e-01 : f32
    %42 = vector.broadcast %cst_25 : f32 to vector<8x96xf32>
    %43 = arith.mulf %42, %41 : vector<8x96xf32>
    %cst_26 = arith.constant 5.000000e-01 : f32
    %44 = vector.broadcast %cst_26 : f32 to vector<8x96xf32>
    %45 = arith.addf %43, %44 : vector<8x96xf32>
    %46 = vector.extract_strided_slice %37 {offsets = [0, 96], sizes = [8, 32], strides = [1, 1]} : vector<8x128xf32> to vector<8x32xf32>
    %47 = math.tanh %46 : vector<8x32xf32>
    %48 = vector.extract_strided_slice %45 {offsets = [0, 0], sizes = [8, 32], strides = [1, 1]} : vector<8x96xf32> to vector<8x32xf32>
    %49 = vector.extract_strided_slice %45 {offsets = [0, 32], sizes = [8, 32], strides = [1, 1]} : vector<8x96xf32> to vector<8x32xf32>
    %50 = vector.extract_strided_slice %45 {offsets = [0, 64], sizes = [8, 32], strides = [1, 1]} : vector<8x96xf32> to vector<8x32xf32>
    %51 = arith.mulf %49, %7 : vector<8x32xf32>
    %52 = arith.mulf %48, %47 : vector<8x32xf32>
    %53 = arith.addf %51, %52 : vector<8x32xf32>
    %54 = math.tanh %53 : vector<8x32xf32>
    %55 = arith.mulf %50, %54 : vector<8x32xf32>
    %c8 = arith.constant 8 : index
    %c0_27 = arith.constant 0 : index
    %56 = vector.load %arg10[%c8, %c0_27] : memref<64x128xf32, #tpu.memory_space<vmem>>, vector<8x128xf32>
    %c0_28 = arith.constant 0 : index
    %c0_29 = arith.constant 0 : index
    %57 = vector.load %arg2[%c0_28, %c0_29] : memref<32x128xf32, #tpu.memory_space<vmem>>, vector<32x128xf32>
    %cst_30 = arith.constant dense<0.000000e+00> : vector<8x128xf32>
    %58 = tpu.matmul %29, %57, %cst_30 {dimension_numbers = #tpu.dot_dimension_numbers<[1], [0], [0], [1], [0, 0, 1, 1], [], []>} : vector<8x32xf32>, vector<32x128xf32>, vector<8x128xf32> -> vector<8x128xf32>
    %59 = arith.addf %56, %58 : vector<8x128xf32>
    %60 = vector.extract_strided_slice %59 {offsets = [0, 0], sizes = [8, 96], strides = [1, 1]} : vector<8x128xf32> to vector<8x96xf32>
    %cst_31 = arith.constant 5.000000e-01 : f32
    %61 = vector.broadcast %cst_31 : f32 to vector<8x96xf32>
    %62 = arith.mulf %61, %60 : vector<8x96xf32>
    %63 = math.tanh %62 : vector<8x96xf32>
    %cst_32 = arith.constant 5.000000e-01 : f32
    %64 = vector.broadcast %cst_32 : f32 to vector<8x96xf32>
    %65 = arith.mulf %64, %63 : vector<8x96xf32>
    %cst_33 = arith.constant 5.000000e-01 : f32
    %66 = vector.broadcast %cst_33 : f32 to vector<8x96xf32>
    %67 = arith.addf %65, %66 : vector<8x96xf32>
    %68 = vector.extract_strided_slice %59 {offsets = [0, 96], sizes = [8, 32], strides = [1, 1]} : vector<8x128xf32> to vector<8x32xf32>
    %69 = math.tanh %68 : vector<8x32xf32>
    %70 = vector.extract_strided_slice %67 {offsets = [0, 0], sizes = [8, 32], strides = [1, 1]} : vector<8x96xf32> to vector<8x32xf32>
    %71 = vector.extract_strided_slice %67 {offsets = [0, 32], sizes = [8, 32], strides = [1, 1]} : vector<8x96xf32> to vector<8x32xf32>
    %72 = vector.extract_strided_slice %67 {offsets = [0, 64], sizes = [8, 32], strides = [1, 1]} : vector<8x96xf32> to vector<8x32xf32>
    %73 = arith.mulf %71, %27 : vector<8x32xf32>
    %74 = arith.mulf %70, %69 : vector<8x32xf32>
    %75 = arith.addf %73, %74 : vector<8x32xf32>
    %76 = math.tanh %75 : vector<8x32xf32>
    %77 = arith.mulf %72, %76 : vector<8x32xf32>
    %c0_34 = arith.constant 0 : index
    %c0_35 = arith.constant 0 : index
    %78 = vector.load %arg4[%c0_34, %c0_35] : memref<32x128xf32, #tpu.memory_space<vmem>>, vector<32x128xf32>
    %cst_36 = arith.constant dense<0.000000e+00> : vector<8x128xf32>
    %79 = tpu.matmul %77, %78, %cst_36 {dimension_numbers = #tpu.dot_dimension_numbers<[1], [0], [0], [1], [0, 0, 1, 1], [], []>} : vector<8x32xf32>, vector<32x128xf32>, vector<8x128xf32> -> vector<8x128xf32>
    %c0_37 = arith.constant 0 : index
    %c0_38 = arith.constant 0 : index
    %80 = vector.load %arg5[%c0_37, %c0_38] : memref<32x128xf32, #tpu.memory_space<vmem>>, vector<32x128xf32>
    %cst_39 = arith.constant dense<0.000000e+00> : vector<8x128xf32>
    %81 = tpu.matmul %55, %80, %cst_39 {dimension_numbers = #tpu.dot_dimension_numbers<[1], [0], [0], [1], [0, 0, 1, 1], [], []>} : vector<8x32xf32>, vector<32x128xf32>, vector<8x128xf32> -> vector<8x128xf32>
    %82 = arith.addf %79, %81 : vector<8x128xf32>
    %c0_40 = arith.constant 0 : index
    %c0_41 = arith.constant 0 : index
    %83 = vector.load %arg6[%c0_40, %c0_41] : memref<1x128xf32, #tpu.memory_space<vmem>>, vector<1x128xf32>
    %84 = vector.broadcast %83 : vector<1x128xf32> to vector<8x128xf32>
    %85 = arith.addf %82, %84 : vector<8x128xf32>
    %86 = vector.extract_strided_slice %85 {offsets = [0, 0], sizes = [8, 96], strides = [1, 1]} : vector<8x128xf32> to vector<8x96xf32>
    %cst_42 = arith.constant 5.000000e-01 : f32
    %87 = vector.broadcast %cst_42 : f32 to vector<8x96xf32>
    %88 = arith.mulf %87, %86 : vector<8x96xf32>
    %89 = math.tanh %88 : vector<8x96xf32>
    %cst_43 = arith.constant 5.000000e-01 : f32
    %90 = vector.broadcast %cst_43 : f32 to vector<8x96xf32>
    %91 = arith.mulf %90, %89 : vector<8x96xf32>
    %cst_44 = arith.constant 5.000000e-01 : f32
    %92 = vector.broadcast %cst_44 : f32 to vector<8x96xf32>
    %93 = arith.addf %91, %92 : vector<8x96xf32>
    %94 = vector.extract_strided_slice %85 {offsets = [0, 96], sizes = [8, 32], strides = [1, 1]} : vector<8x128xf32> to vector<8x32xf32>
    %95 = math.tanh %94 : vector<8x32xf32>
    %96 = vector.extract_strided_slice %93 {offsets = [0, 0], sizes = [8, 32], strides = [1, 1]} : vector<8x96xf32> to vector<8x32xf32>
    %97 = vector.extract_strided_slice %93 {offsets = [0, 32], sizes = [8, 32], strides = [1, 1]} : vector<8x96xf32> to vector<8x32xf32>
    %98 = vector.extract_strided_slice %93 {offsets = [0, 64], sizes = [8, 32], strides = [1, 1]} : vector<8x96xf32> to vector<8x32xf32>
    %99 = arith.mulf %97, %53 : vector<8x32xf32>
    %100 = arith.mulf %96, %95 : vector<8x32xf32>
    %101 = arith.addf %99, %100 : vector<8x32xf32>
    %102 = math.tanh %101 : vector<8x32xf32>
    %103 = arith.mulf %98, %102 : vector<8x32xf32>
    %c16 = arith.constant 16 : index
    %c0_45 = arith.constant 0 : index
    %104 = vector.load %arg10[%c16, %c0_45] : memref<64x128xf32, #tpu.memory_space<vmem>>, vector<8x128xf32>
    %c0_46 = arith.constant 0 : index
    %c0_47 = arith.constant 0 : index
    %105 = vector.load %arg2[%c0_46, %c0_47] : memref<32x128xf32, #tpu.memory_space<vmem>>, vector<32x128xf32>
    %cst_48 = arith.constant dense<0.000000e+00> : vector<8x128xf32>
    %106 = tpu.matmul %77, %105, %cst_48 {dimension_numbers = #tpu.dot_dimension_numbers<[1], [0], [0], [1], [0, 0, 1, 1], [], []>} : vector<8x32xf32>, vector<32x128xf32>, vector<8x128xf32> -> vector<8x128xf32>
    %107 = arith.addf %104, %106 : vector<8x128xf32>
    %108 = vector.extract_strided_slice %107 {offsets = [0, 0], sizes = [8, 96], strides = [1, 1]} : vector<8x128xf32> to vector<8x96xf32>
    %cst_49 = arith.constant 5.000000e-01 : f32
    %109 = vector.broadcast %cst_49 : f32 to vector<8x96xf32>
    %110 = arith.mulf %109, %108 : vector<8x96xf32>
    %111 = math.tanh %110 : vector<8x96xf32>
    %cst_50 = arith.constant 5.000000e-01 : f32
    %112 = vector.broadcast %cst_50 : f32 to vector<8x96xf32>
    %113 = arith.mulf %112, %111 : vector<8x96xf32>
    %cst_51 = arith.constant 5.000000e-01 : f32
    %114 = vector.broadcast %cst_51 : f32 to vector<8x96xf32>
    %115 = arith.addf %113, %114 : vector<8x96xf32>
    %116 = vector.extract_strided_slice %107 {offsets = [0, 96], sizes = [8, 32], strides = [1, 1]} : vector<8x128xf32> to vector<8x32xf32>
    %117 = math.tanh %116 : vector<8x32xf32>
    %118 = vector.extract_strided_slice %115 {offsets = [0, 0], sizes = [8, 32], strides = [1, 1]} : vector<8x96xf32> to vector<8x32xf32>
    %119 = vector.extract_strided_slice %115 {offsets = [0, 32], sizes = [8, 32], strides = [1, 1]} : vector<8x96xf32> to vector<8x32xf32>
    %120 = vector.extract_strided_slice %115 {offsets = [0, 64], sizes = [8, 32], strides = [1, 1]} : vector<8x96xf32> to vector<8x32xf32>
    %121 = arith.mulf %119, %75 : vector<8x32xf32>
    %122 = arith.mulf %118, %117 : vector<8x32xf32>
    %123 = arith.addf %121, %122 : vector<8x32xf32>
    %124 = math.tanh %123 : vector<8x32xf32>
    %125 = arith.mulf %120, %124 : vector<8x32xf32>
    %c0_52 = arith.constant 0 : index
    %c0_53 = arith.constant 0 : index
    %126 = vector.load %arg4[%c0_52, %c0_53] : memref<32x128xf32, #tpu.memory_space<vmem>>, vector<32x128xf32>
    %cst_54 = arith.constant dense<0.000000e+00> : vector<8x128xf32>
    %127 = tpu.matmul %125, %126, %cst_54 {dimension_numbers = #tpu.dot_dimension_numbers<[1], [0], [0], [1], [0, 0, 1, 1], [], []>} : vector<8x32xf32>, vector<32x128xf32>, vector<8x128xf32> -> vector<8x128xf32>
    %c0_55 = arith.constant 0 : index
    %c0_56 = arith.constant 0 : index
    %128 = vector.load %arg5[%c0_55, %c0_56] : memref<32x128xf32, #tpu.memory_space<vmem>>, vector<32x128xf32>
    %cst_57 = arith.constant dense<0.000000e+00> : vector<8x128xf32>
    %129 = tpu.matmul %103, %128, %cst_57 {dimension_numbers = #tpu.dot_dimension_numbers<[1], [0], [0], [1], [0, 0, 1, 1], [], []>} : vector<8x32xf32>, vector<32x128xf32>, vector<8x128xf32> -> vector<8x128xf32>
    %130 = arith.addf %127, %129 : vector<8x128xf32>
    %c0_58 = arith.constant 0 : index
    %c0_59 = arith.constant 0 : index
    %131 = vector.load %arg6[%c0_58, %c0_59] : memref<1x128xf32, #tpu.memory_space<vmem>>, vector<1x128xf32>
    %132 = vector.broadcast %131 : vector<1x128xf32> to vector<8x128xf32>
    %133 = arith.addf %130, %132 : vector<8x128xf32>
    %134 = vector.extract_strided_slice %133 {offsets = [0, 0], sizes = [8, 96], strides = [1, 1]} : vector<8x128xf32> to vector<8x96xf32>
    %cst_60 = arith.constant 5.000000e-01 : f32
    %135 = vector.broadcast %cst_60 : f32 to vector<8x96xf32>
    %136 = arith.mulf %135, %134 : vector<8x96xf32>
    %137 = math.tanh %136 : vector<8x96xf32>
    %cst_61 = arith.constant 5.000000e-01 : f32
    %138 = vector.broadcast %cst_61 : f32 to vector<8x96xf32>
    %139 = arith.mulf %138, %137 : vector<8x96xf32>
    %cst_62 = arith.constant 5.000000e-01 : f32
    %140 = vector.broadcast %cst_62 : f32 to vector<8x96xf32>
    %141 = arith.addf %139, %140 : vector<8x96xf32>
    %142 = vector.extract_strided_slice %133 {offsets = [0, 96], sizes = [8, 32], strides = [1, 1]} : vector<8x128xf32> to vector<8x32xf32>
    %143 = math.tanh %142 : vector<8x32xf32>
    %144 = vector.extract_strided_slice %141 {offsets = [0, 0], sizes = [8, 32], strides = [1, 1]} : vector<8x96xf32> to vector<8x32xf32>
    %145 = vector.extract_strided_slice %141 {offsets = [0, 32], sizes = [8, 32], strides = [1, 1]} : vector<8x96xf32> to vector<8x32xf32>
    %146 = vector.extract_strided_slice %141 {offsets = [0, 64], sizes = [8, 32], strides = [1, 1]} : vector<8x96xf32> to vector<8x32xf32>
    %147 = arith.mulf %145, %101 : vector<8x32xf32>
    %148 = arith.mulf %144, %143 : vector<8x32xf32>
    %149 = arith.addf %147, %148 : vector<8x32xf32>
    %150 = math.tanh %149 : vector<8x32xf32>
    %151 = arith.mulf %146, %150 : vector<8x32xf32>
    %c24 = arith.constant 24 : index
    %c0_63 = arith.constant 0 : index
    %152 = vector.load %arg10[%c24, %c0_63] : memref<64x128xf32, #tpu.memory_space<vmem>>, vector<8x128xf32>
    %c0_64 = arith.constant 0 : index
    %c0_65 = arith.constant 0 : index
    %153 = vector.load %arg2[%c0_64, %c0_65] : memref<32x128xf32, #tpu.memory_space<vmem>>, vector<32x128xf32>
    %cst_66 = arith.constant dense<0.000000e+00> : vector<8x128xf32>
    %154 = tpu.matmul %125, %153, %cst_66 {dimension_numbers = #tpu.dot_dimension_numbers<[1], [0], [0], [1], [0, 0, 1, 1], [], []>} : vector<8x32xf32>, vector<32x128xf32>, vector<8x128xf32> -> vector<8x128xf32>
    %155 = arith.addf %152, %154 : vector<8x128xf32>
    %156 = vector.extract_strided_slice %155 {offsets = [0, 0], sizes = [8, 96], strides = [1, 1]} : vector<8x128xf32> to vector<8x96xf32>
    %cst_67 = arith.constant 5.000000e-01 : f32
    %157 = vector.broadcast %cst_67 : f32 to vector<8x96xf32>
    %158 = arith.mulf %157, %156 : vector<8x96xf32>
    %159 = math.tanh %158 : vector<8x96xf32>
    %cst_68 = arith.constant 5.000000e-01 : f32
    %160 = vector.broadcast %cst_68 : f32 to vector<8x96xf32>
    %161 = arith.mulf %160, %159 : vector<8x96xf32>
    %cst_69 = arith.constant 5.000000e-01 : f32
    %162 = vector.broadcast %cst_69 : f32 to vector<8x96xf32>
    %163 = arith.addf %161, %162 : vector<8x96xf32>
    %164 = vector.extract_strided_slice %155 {offsets = [0, 96], sizes = [8, 32], strides = [1, 1]} : vector<8x128xf32> to vector<8x32xf32>
    %165 = math.tanh %164 : vector<8x32xf32>
    %166 = vector.extract_strided_slice %163 {offsets = [0, 0], sizes = [8, 32], strides = [1, 1]} : vector<8x96xf32> to vector<8x32xf32>
    %167 = vector.extract_strided_slice %163 {offsets = [0, 32], sizes = [8, 32], strides = [1, 1]} : vector<8x96xf32> to vector<8x32xf32>
    %168 = vector.extract_strided_slice %163 {offsets = [0, 64], sizes = [8, 32], strides = [1, 1]} : vector<8x96xf32> to vector<8x32xf32>
    %169 = arith.mulf %167, %123 : vector<8x32xf32>
    %170 = arith.mulf %166, %165 : vector<8x32xf32>
    %171 = arith.addf %169, %170 : vector<8x32xf32>
    %172 = math.tanh %171 : vector<8x32xf32>
    %173 = arith.mulf %168, %172 : vector<8x32xf32>
    %c0_70 = arith.constant 0 : index
    %c0_71 = arith.constant 0 : index
    %174 = vector.load %arg4[%c0_70, %c0_71] : memref<32x128xf32, #tpu.memory_space<vmem>>, vector<32x128xf32>
    %cst_72 = arith.constant dense<0.000000e+00> : vector<8x128xf32>
    %175 = tpu.matmul %173, %174, %cst_72 {dimension_numbers = #tpu.dot_dimension_numbers<[1], [0], [0], [1], [0, 0, 1, 1], [], []>} : vector<8x32xf32>, vector<32x128xf32>, vector<8x128xf32> -> vector<8x128xf32>
    %c0_73 = arith.constant 0 : index
    %c0_74 = arith.constant 0 : index
    %176 = vector.load %arg5[%c0_73, %c0_74] : memref<32x128xf32, #tpu.memory_space<vmem>>, vector<32x128xf32>
    %cst_75 = arith.constant dense<0.000000e+00> : vector<8x128xf32>
    %177 = tpu.matmul %151, %176, %cst_75 {dimension_numbers = #tpu.dot_dimension_numbers<[1], [0], [0], [1], [0, 0, 1, 1], [], []>} : vector<8x32xf32>, vector<32x128xf32>, vector<8x128xf32> -> vector<8x128xf32>
    %178 = arith.addf %175, %177 : vector<8x128xf32>
    %c0_76 = arith.constant 0 : index
    %c0_77 = arith.constant 0 : index
    %179 = vector.load %arg6[%c0_76, %c0_77] : memref<1x128xf32, #tpu.memory_space<vmem>>, vector<1x128xf32>
    %180 = vector.broadcast %179 : vector<1x128xf32> to vector<8x128xf32>
    %181 = arith.addf %178, %180 : vector<8x128xf32>
    %182 = vector.extract_strided_slice %181 {offsets = [0, 0], sizes = [8, 96], strides = [1, 1]} : vector<8x128xf32> to vector<8x96xf32>
    %cst_78 = arith.constant 5.000000e-01 : f32
    %183 = vector.broadcast %cst_78 : f32 to vector<8x96xf32>
    %184 = arith.mulf %183, %182 : vector<8x96xf32>
    %185 = math.tanh %184 : vector<8x96xf32>
    %cst_79 = arith.constant 5.000000e-01 : f32
    %186 = vector.broadcast %cst_79 : f32 to vector<8x96xf32>
    %187 = arith.mulf %186, %185 : vector<8x96xf32>
    %cst_80 = arith.constant 5.000000e-01 : f32
    %188 = vector.broadcast %cst_80 : f32 to vector<8x96xf32>
    %189 = arith.addf %187, %188 : vector<8x96xf32>
    %190 = vector.extract_strided_slice %181 {offsets = [0, 96], sizes = [8, 32], strides = [1, 1]} : vector<8x128xf32> to vector<8x32xf32>
    %191 = math.tanh %190 : vector<8x32xf32>
    %192 = vector.extract_strided_slice %189 {offsets = [0, 0], sizes = [8, 32], strides = [1, 1]} : vector<8x96xf32> to vector<8x32xf32>
    %193 = vector.extract_strided_slice %189 {offsets = [0, 32], sizes = [8, 32], strides = [1, 1]} : vector<8x96xf32> to vector<8x32xf32>
    %194 = vector.extract_strided_slice %189 {offsets = [0, 64], sizes = [8, 32], strides = [1, 1]} : vector<8x96xf32> to vector<8x32xf32>
    %195 = arith.mulf %193, %149 : vector<8x32xf32>
    %196 = arith.mulf %192, %191 : vector<8x32xf32>
    %197 = arith.addf %195, %196 : vector<8x32xf32>
    %198 = math.tanh %197 : vector<8x32xf32>
    %199 = arith.mulf %194, %198 : vector<8x32xf32>
    %c32 = arith.constant 32 : index
    %c0_81 = arith.constant 0 : index
    %200 = vector.load %arg10[%c32, %c0_81] : memref<64x128xf32, #tpu.memory_space<vmem>>, vector<8x128xf32>
    %c0_82 = arith.constant 0 : index
    %c0_83 = arith.constant 0 : index
    %201 = vector.load %arg2[%c0_82, %c0_83] : memref<32x128xf32, #tpu.memory_space<vmem>>, vector<32x128xf32>
    %cst_84 = arith.constant dense<0.000000e+00> : vector<8x128xf32>
    %202 = tpu.matmul %173, %201, %cst_84 {dimension_numbers = #tpu.dot_dimension_numbers<[1], [0], [0], [1], [0, 0, 1, 1], [], []>} : vector<8x32xf32>, vector<32x128xf32>, vector<8x128xf32> -> vector<8x128xf32>
    %203 = arith.addf %200, %202 : vector<8x128xf32>
    %204 = vector.extract_strided_slice %203 {offsets = [0, 0], sizes = [8, 96], strides = [1, 1]} : vector<8x128xf32> to vector<8x96xf32>
    %cst_85 = arith.constant 5.000000e-01 : f32
    %205 = vector.broadcast %cst_85 : f32 to vector<8x96xf32>
    %206 = arith.mulf %205, %204 : vector<8x96xf32>
    %207 = math.tanh %206 : vector<8x96xf32>
    %cst_86 = arith.constant 5.000000e-01 : f32
    %208 = vector.broadcast %cst_86 : f32 to vector<8x96xf32>
    %209 = arith.mulf %208, %207 : vector<8x96xf32>
    %cst_87 = arith.constant 5.000000e-01 : f32
    %210 = vector.broadcast %cst_87 : f32 to vector<8x96xf32>
    %211 = arith.addf %209, %210 : vector<8x96xf32>
    %212 = vector.extract_strided_slice %203 {offsets = [0, 96], sizes = [8, 32], strides = [1, 1]} : vector<8x128xf32> to vector<8x32xf32>
    %213 = math.tanh %212 : vector<8x32xf32>
    %214 = vector.extract_strided_slice %211 {offsets = [0, 0], sizes = [8, 32], strides = [1, 1]} : vector<8x96xf32> to vector<8x32xf32>
    %215 = vector.extract_strided_slice %211 {offsets = [0, 32], sizes = [8, 32], strides = [1, 1]} : vector<8x96xf32> to vector<8x32xf32>
    %216 = vector.extract_strided_slice %211 {offsets = [0, 64], sizes = [8, 32], strides = [1, 1]} : vector<8x96xf32> to vector<8x32xf32>
    %217 = arith.mulf %215, %171 : vector<8x32xf32>
    %218 = arith.mulf %214, %213 : vector<8x32xf32>
    %219 = arith.addf %217, %218 : vector<8x32xf32>
    %220 = math.tanh %219 : vector<8x32xf32>
    %221 = arith.mulf %216, %220 : vector<8x32xf32>
    %c0_88 = arith.constant 0 : index
    %c0_89 = arith.constant 0 : index
    %222 = vector.load %arg4[%c0_88, %c0_89] : memref<32x128xf32, #tpu.memory_space<vmem>>, vector<32x128xf32>
    %cst_90 = arith.constant dense<0.000000e+00> : vector<8x128xf32>
    %223 = tpu.matmul %221, %222, %cst_90 {dimension_numbers = #tpu.dot_dimension_numbers<[1], [0], [0], [1], [0, 0, 1, 1], [], []>} : vector<8x32xf32>, vector<32x128xf32>, vector<8x128xf32> -> vector<8x128xf32>
    %c0_91 = arith.constant 0 : index
    %c0_92 = arith.constant 0 : index
    %224 = vector.load %arg5[%c0_91, %c0_92] : memref<32x128xf32, #tpu.memory_space<vmem>>, vector<32x128xf32>
    %cst_93 = arith.constant dense<0.000000e+00> : vector<8x128xf32>
    %225 = tpu.matmul %199, %224, %cst_93 {dimension_numbers = #tpu.dot_dimension_numbers<[1], [0], [0], [1], [0, 0, 1, 1], [], []>} : vector<8x32xf32>, vector<32x128xf32>, vector<8x128xf32> -> vector<8x128xf32>
    %226 = arith.addf %223, %225 : vector<8x128xf32>
    %c0_94 = arith.constant 0 : index
    %c0_95 = arith.constant 0 : index
    %227 = vector.load %arg6[%c0_94, %c0_95] : memref<1x128xf32, #tpu.memory_space<vmem>>, vector<1x128xf32>
    %228 = vector.broadcast %227 : vector<1x128xf32> to vector<8x128xf32>
    %229 = arith.addf %226, %228 : vector<8x128xf32>
    %230 = vector.extract_strided_slice %229 {offsets = [0, 0], sizes = [8, 96], strides = [1, 1]} : vector<8x128xf32> to vector<8x96xf32>
    %cst_96 = arith.constant 5.000000e-01 : f32
    %231 = vector.broadcast %cst_96 : f32 to vector<8x96xf32>
    %232 = arith.mulf %231, %230 : vector<8x96xf32>
    %233 = math.tanh %232 : vector<8x96xf32>
    %cst_97 = arith.constant 5.000000e-01 : f32
    %234 = vector.broadcast %cst_97 : f32 to vector<8x96xf32>
    %235 = arith.mulf %234, %233 : vector<8x96xf32>
    %cst_98 = arith.constant 5.000000e-01 : f32
    %236 = vector.broadcast %cst_98 : f32 to vector<8x96xf32>
    %237 = arith.addf %235, %236 : vector<8x96xf32>
    %238 = vector.extract_strided_slice %229 {offsets = [0, 96], sizes = [8, 32], strides = [1, 1]} : vector<8x128xf32> to vector<8x32xf32>
    %239 = math.tanh %238 : vector<8x32xf32>
    %240 = vector.extract_strided_slice %237 {offsets = [0, 0], sizes = [8, 32], strides = [1, 1]} : vector<8x96xf32> to vector<8x32xf32>
    %241 = vector.extract_strided_slice %237 {offsets = [0, 32], sizes = [8, 32], strides = [1, 1]} : vector<8x96xf32> to vector<8x32xf32>
    %242 = vector.extract_strided_slice %237 {offsets = [0, 64], sizes = [8, 32], strides = [1, 1]} : vector<8x96xf32> to vector<8x32xf32>
    %243 = arith.mulf %241, %197 : vector<8x32xf32>
    %244 = arith.mulf %240, %239 : vector<8x32xf32>
    %245 = arith.addf %243, %244 : vector<8x32xf32>
    %246 = math.tanh %245 : vector<8x32xf32>
    %247 = arith.mulf %242, %246 : vector<8x32xf32>
    %c40 = arith.constant 40 : index
    %c0_99 = arith.constant 0 : index
    %248 = vector.load %arg10[%c40, %c0_99] : memref<64x128xf32, #tpu.memory_space<vmem>>, vector<8x128xf32>
    %c0_100 = arith.constant 0 : index
    %c0_101 = arith.constant 0 : index
    %249 = vector.load %arg2[%c0_100, %c0_101] : memref<32x128xf32, #tpu.memory_space<vmem>>, vector<32x128xf32>
    %cst_102 = arith.constant dense<0.000000e+00> : vector<8x128xf32>
    %250 = tpu.matmul %221, %249, %cst_102 {dimension_numbers = #tpu.dot_dimension_numbers<[1], [0], [0], [1], [0, 0, 1, 1], [], []>} : vector<8x32xf32>, vector<32x128xf32>, vector<8x128xf32> -> vector<8x128xf32>
    %251 = arith.addf %248, %250 : vector<8x128xf32>
    %252 = vector.extract_strided_slice %251 {offsets = [0, 0], sizes = [8, 96], strides = [1, 1]} : vector<8x128xf32> to vector<8x96xf32>
    %cst_103 = arith.constant 5.000000e-01 : f32
    %253 = vector.broadcast %cst_103 : f32 to vector<8x96xf32>
    %254 = arith.mulf %253, %252 : vector<8x96xf32>
    %255 = math.tanh %254 : vector<8x96xf32>
    %cst_104 = arith.constant 5.000000e-01 : f32
    %256 = vector.broadcast %cst_104 : f32 to vector<8x96xf32>
    %257 = arith.mulf %256, %255 : vector<8x96xf32>
    %cst_105 = arith.constant 5.000000e-01 : f32
    %258 = vector.broadcast %cst_105 : f32 to vector<8x96xf32>
    %259 = arith.addf %257, %258 : vector<8x96xf32>
    %260 = vector.extract_strided_slice %251 {offsets = [0, 96], sizes = [8, 32], strides = [1, 1]} : vector<8x128xf32> to vector<8x32xf32>
    %261 = math.tanh %260 : vector<8x32xf32>
    %262 = vector.extract_strided_slice %259 {offsets = [0, 0], sizes = [8, 32], strides = [1, 1]} : vector<8x96xf32> to vector<8x32xf32>
    %263 = vector.extract_strided_slice %259 {offsets = [0, 32], sizes = [8, 32], strides = [1, 1]} : vector<8x96xf32> to vector<8x32xf32>
    %264 = vector.extract_strided_slice %259 {offsets = [0, 64], sizes = [8, 32], strides = [1, 1]} : vector<8x96xf32> to vector<8x32xf32>
    %265 = arith.mulf %263, %219 : vector<8x32xf32>
    %266 = arith.mulf %262, %261 : vector<8x32xf32>
    %267 = arith.addf %265, %266 : vector<8x32xf32>
    %268 = math.tanh %267 : vector<8x32xf32>
    %269 = arith.mulf %264, %268 : vector<8x32xf32>
    %c0_106 = arith.constant 0 : index
    %c0_107 = arith.constant 0 : index
    %270 = vector.load %arg4[%c0_106, %c0_107] : memref<32x128xf32, #tpu.memory_space<vmem>>, vector<32x128xf32>
    %cst_108 = arith.constant dense<0.000000e+00> : vector<8x128xf32>
    %271 = tpu.matmul %269, %270, %cst_108 {dimension_numbers = #tpu.dot_dimension_numbers<[1], [0], [0], [1], [0, 0, 1, 1], [], []>} : vector<8x32xf32>, vector<32x128xf32>, vector<8x128xf32> -> vector<8x128xf32>
    %c0_109 = arith.constant 0 : index
    %c0_110 = arith.constant 0 : index
    %272 = vector.load %arg5[%c0_109, %c0_110] : memref<32x128xf32, #tpu.memory_space<vmem>>, vector<32x128xf32>
    %cst_111 = arith.constant dense<0.000000e+00> : vector<8x128xf32>
    %273 = tpu.matmul %247, %272, %cst_111 {dimension_numbers = #tpu.dot_dimension_numbers<[1], [0], [0], [1], [0, 0, 1, 1], [], []>} : vector<8x32xf32>, vector<32x128xf32>, vector<8x128xf32> -> vector<8x128xf32>
    %274 = arith.addf %271, %273 : vector<8x128xf32>
    %c0_112 = arith.constant 0 : index
    %c0_113 = arith.constant 0 : index
    %275 = vector.load %arg6[%c0_112, %c0_113] : memref<1x128xf32, #tpu.memory_space<vmem>>, vector<1x128xf32>
    %276 = vector.broadcast %275 : vector<1x128xf32> to vector<8x128xf32>
    %277 = arith.addf %274, %276 : vector<8x128xf32>
    %278 = vector.extract_strided_slice %277 {offsets = [0, 0], sizes = [8, 96], strides = [1, 1]} : vector<8x128xf32> to vector<8x96xf32>
    %cst_114 = arith.constant 5.000000e-01 : f32
    %279 = vector.broadcast %cst_114 : f32 to vector<8x96xf32>
    %280 = arith.mulf %279, %278 : vector<8x96xf32>
    %281 = math.tanh %280 : vector<8x96xf32>
    %cst_115 = arith.constant 5.000000e-01 : f32
    %282 = vector.broadcast %cst_115 : f32 to vector<8x96xf32>
    %283 = arith.mulf %282, %281 : vector<8x96xf32>
    %cst_116 = arith.constant 5.000000e-01 : f32
    %284 = vector.broadcast %cst_116 : f32 to vector<8x96xf32>
    %285 = arith.addf %283, %284 : vector<8x96xf32>
    %286 = vector.extract_strided_slice %277 {offsets = [0, 96], sizes = [8, 32], strides = [1, 1]} : vector<8x128xf32> to vector<8x32xf32>
    %287 = math.tanh %286 : vector<8x32xf32>
    %288 = vector.extract_strided_slice %285 {offsets = [0, 0], sizes = [8, 32], strides = [1, 1]} : vector<8x96xf32> to vector<8x32xf32>
    %289 = vector.extract_strided_slice %285 {offsets = [0, 32], sizes = [8, 32], strides = [1, 1]} : vector<8x96xf32> to vector<8x32xf32>
    %290 = vector.extract_strided_slice %285 {offsets = [0, 64], sizes = [8, 32], strides = [1, 1]} : vector<8x96xf32> to vector<8x32xf32>
    %291 = arith.mulf %289, %245 : vector<8x32xf32>
    %292 = arith.mulf %288, %287 : vector<8x32xf32>
    %293 = arith.addf %291, %292 : vector<8x32xf32>
    %294 = math.tanh %293 : vector<8x32xf32>
    %295 = arith.mulf %290, %294 : vector<8x32xf32>
    %c48 = arith.constant 48 : index
    %c0_117 = arith.constant 0 : index
    %296 = vector.load %arg10[%c48, %c0_117] : memref<64x128xf32, #tpu.memory_space<vmem>>, vector<8x128xf32>
    %c0_118 = arith.constant 0 : index
    %c0_119 = arith.constant 0 : index
    %297 = vector.load %arg2[%c0_118, %c0_119] : memref<32x128xf32, #tpu.memory_space<vmem>>, vector<32x128xf32>
    %cst_120 = arith.constant dense<0.000000e+00> : vector<8x128xf32>
    %298 = tpu.matmul %269, %297, %cst_120 {dimension_numbers = #tpu.dot_dimension_numbers<[1], [0], [0], [1], [0, 0, 1, 1], [], []>} : vector<8x32xf32>, vector<32x128xf32>, vector<8x128xf32> -> vector<8x128xf32>
    %299 = arith.addf %296, %298 : vector<8x128xf32>
    %300 = vector.extract_strided_slice %299 {offsets = [0, 0], sizes = [8, 96], strides = [1, 1]} : vector<8x128xf32> to vector<8x96xf32>
    %cst_121 = arith.constant 5.000000e-01 : f32
    %301 = vector.broadcast %cst_121 : f32 to vector<8x96xf32>
    %302 = arith.mulf %301, %300 : vector<8x96xf32>
    %303 = math.tanh %302 : vector<8x96xf32>
    %cst_122 = arith.constant 5.000000e-01 : f32
    %304 = vector.broadcast %cst_122 : f32 to vector<8x96xf32>
    %305 = arith.mulf %304, %303 : vector<8x96xf32>
    %cst_123 = arith.constant 5.000000e-01 : f32
    %306 = vector.broadcast %cst_123 : f32 to vector<8x96xf32>
    %307 = arith.addf %305, %306 : vector<8x96xf32>
    %308 = vector.extract_strided_slice %299 {offsets = [0, 96], sizes = [8, 32], strides = [1, 1]} : vector<8x128xf32> to vector<8x32xf32>
    %309 = math.tanh %308 : vector<8x32xf32>
    %310 = vector.extract_strided_slice %307 {offsets = [0, 0], sizes = [8, 32], strides = [1, 1]} : vector<8x96xf32> to vector<8x32xf32>
    %311 = vector.extract_strided_slice %307 {offsets = [0, 32], sizes = [8, 32], strides = [1, 1]} : vector<8x96xf32> to vector<8x32xf32>
    %312 = vector.extract_strided_slice %307 {offsets = [0, 64], sizes = [8, 32], strides = [1, 1]} : vector<8x96xf32> to vector<8x32xf32>
    %313 = arith.mulf %311, %267 : vector<8x32xf32>
    %314 = arith.mulf %310, %309 : vector<8x32xf32>
    %315 = arith.addf %313, %314 : vector<8x32xf32>
    %316 = math.tanh %315 : vector<8x32xf32>
    %317 = arith.mulf %312, %316 : vector<8x32xf32>
    %c0_124 = arith.constant 0 : index
    %c0_125 = arith.constant 0 : index
    %318 = vector.load %arg4[%c0_124, %c0_125] : memref<32x128xf32, #tpu.memory_space<vmem>>, vector<32x128xf32>
    %cst_126 = arith.constant dense<0.000000e+00> : vector<8x128xf32>
    %319 = tpu.matmul %317, %318, %cst_126 {dimension_numbers = #tpu.dot_dimension_numbers<[1], [0], [0], [1], [0, 0, 1, 1], [], []>} : vector<8x32xf32>, vector<32x128xf32>, vector<8x128xf32> -> vector<8x128xf32>
    %c0_127 = arith.constant 0 : index
    %c0_128 = arith.constant 0 : index
    %320 = vector.load %arg5[%c0_127, %c0_128] : memref<32x128xf32, #tpu.memory_space<vmem>>, vector<32x128xf32>
    %cst_129 = arith.constant dense<0.000000e+00> : vector<8x128xf32>
    %321 = tpu.matmul %295, %320, %cst_129 {dimension_numbers = #tpu.dot_dimension_numbers<[1], [0], [0], [1], [0, 0, 1, 1], [], []>} : vector<8x32xf32>, vector<32x128xf32>, vector<8x128xf32> -> vector<8x128xf32>
    %322 = arith.addf %319, %321 : vector<8x128xf32>
    %c0_130 = arith.constant 0 : index
    %c0_131 = arith.constant 0 : index
    %323 = vector.load %arg6[%c0_130, %c0_131] : memref<1x128xf32, #tpu.memory_space<vmem>>, vector<1x128xf32>
    %324 = vector.broadcast %323 : vector<1x128xf32> to vector<8x128xf32>
    %325 = arith.addf %322, %324 : vector<8x128xf32>
    %326 = vector.extract_strided_slice %325 {offsets = [0, 0], sizes = [8, 96], strides = [1, 1]} : vector<8x128xf32> to vector<8x96xf32>
    %cst_132 = arith.constant 5.000000e-01 : f32
    %327 = vector.broadcast %cst_132 : f32 to vector<8x96xf32>
    %328 = arith.mulf %327, %326 : vector<8x96xf32>
    %329 = math.tanh %328 : vector<8x96xf32>
    %cst_133 = arith.constant 5.000000e-01 : f32
    %330 = vector.broadcast %cst_133 : f32 to vector<8x96xf32>
    %331 = arith.mulf %330, %329 : vector<8x96xf32>
    %cst_134 = arith.constant 5.000000e-01 : f32
    %332 = vector.broadcast %cst_134 : f32 to vector<8x96xf32>
    %333 = arith.addf %331, %332 : vector<8x96xf32>
    %334 = vector.extract_strided_slice %325 {offsets = [0, 96], sizes = [8, 32], strides = [1, 1]} : vector<8x128xf32> to vector<8x32xf32>
    %335 = math.tanh %334 : vector<8x32xf32>
    %336 = vector.extract_strided_slice %333 {offsets = [0, 0], sizes = [8, 32], strides = [1, 1]} : vector<8x96xf32> to vector<8x32xf32>
    %337 = vector.extract_strided_slice %333 {offsets = [0, 32], sizes = [8, 32], strides = [1, 1]} : vector<8x96xf32> to vector<8x32xf32>
    %338 = vector.extract_strided_slice %333 {offsets = [0, 64], sizes = [8, 32], strides = [1, 1]} : vector<8x96xf32> to vector<8x32xf32>
    %339 = arith.mulf %337, %293 : vector<8x32xf32>
    %340 = arith.mulf %336, %335 : vector<8x32xf32>
    %341 = arith.addf %339, %340 : vector<8x32xf32>
    %342 = math.tanh %341 : vector<8x32xf32>
    %343 = arith.mulf %338, %342 : vector<8x32xf32>
    %c56 = arith.constant 56 : index
    %c0_135 = arith.constant 0 : index
    %344 = vector.load %arg10[%c56, %c0_135] : memref<64x128xf32, #tpu.memory_space<vmem>>, vector<8x128xf32>
    %c0_136 = arith.constant 0 : index
    %c0_137 = arith.constant 0 : index
    %345 = vector.load %arg2[%c0_136, %c0_137] : memref<32x128xf32, #tpu.memory_space<vmem>>, vector<32x128xf32>
    %cst_138 = arith.constant dense<0.000000e+00> : vector<8x128xf32>
    %346 = tpu.matmul %317, %345, %cst_138 {dimension_numbers = #tpu.dot_dimension_numbers<[1], [0], [0], [1], [0, 0, 1, 1], [], []>} : vector<8x32xf32>, vector<32x128xf32>, vector<8x128xf32> -> vector<8x128xf32>
    %347 = arith.addf %344, %346 : vector<8x128xf32>
    %348 = vector.extract_strided_slice %347 {offsets = [0, 0], sizes = [8, 96], strides = [1, 1]} : vector<8x128xf32> to vector<8x96xf32>
    %cst_139 = arith.constant 5.000000e-01 : f32
    %349 = vector.broadcast %cst_139 : f32 to vector<8x96xf32>
    %350 = arith.mulf %349, %348 : vector<8x96xf32>
    %351 = math.tanh %350 : vector<8x96xf32>
    %cst_140 = arith.constant 5.000000e-01 : f32
    %352 = vector.broadcast %cst_140 : f32 to vector<8x96xf32>
    %353 = arith.mulf %352, %351 : vector<8x96xf32>
    %cst_141 = arith.constant 5.000000e-01 : f32
    %354 = vector.broadcast %cst_141 : f32 to vector<8x96xf32>
    %355 = arith.addf %353, %354 : vector<8x96xf32>
    %356 = vector.extract_strided_slice %347 {offsets = [0, 96], sizes = [8, 32], strides = [1, 1]} : vector<8x128xf32> to vector<8x32xf32>
    %357 = math.tanh %356 : vector<8x32xf32>
    %358 = vector.extract_strided_slice %355 {offsets = [0, 0], sizes = [8, 32], strides = [1, 1]} : vector<8x96xf32> to vector<8x32xf32>
    %359 = vector.extract_strided_slice %355 {offsets = [0, 32], sizes = [8, 32], strides = [1, 1]} : vector<8x96xf32> to vector<8x32xf32>
    %360 = vector.extract_strided_slice %355 {offsets = [0, 64], sizes = [8, 32], strides = [1, 1]} : vector<8x96xf32> to vector<8x32xf32>
    %361 = arith.mulf %359, %315 : vector<8x32xf32>
    %362 = arith.mulf %358, %357 : vector<8x32xf32>
    %363 = arith.addf %361, %362 : vector<8x32xf32>
    %364 = math.tanh %363 : vector<8x32xf32>
    %365 = arith.mulf %360, %364 : vector<8x32xf32>
    %c0_142 = arith.constant 0 : index
    %c0_143 = arith.constant 0 : index
    %366 = vector.load %arg4[%c0_142, %c0_143] : memref<32x128xf32, #tpu.memory_space<vmem>>, vector<32x128xf32>
    %cst_144 = arith.constant dense<0.000000e+00> : vector<8x128xf32>
    %367 = tpu.matmul %365, %366, %cst_144 {dimension_numbers = #tpu.dot_dimension_numbers<[1], [0], [0], [1], [0, 0, 1, 1], [], []>} : vector<8x32xf32>, vector<32x128xf32>, vector<8x128xf32> -> vector<8x128xf32>
    %c0_145 = arith.constant 0 : index
    %c0_146 = arith.constant 0 : index
    %368 = vector.load %arg5[%c0_145, %c0_146] : memref<32x128xf32, #tpu.memory_space<vmem>>, vector<32x128xf32>
    %cst_147 = arith.constant dense<0.000000e+00> : vector<8x128xf32>
    %369 = tpu.matmul %343, %368, %cst_147 {dimension_numbers = #tpu.dot_dimension_numbers<[1], [0], [0], [1], [0, 0, 1, 1], [], []>} : vector<8x32xf32>, vector<32x128xf32>, vector<8x128xf32> -> vector<8x128xf32>
    %370 = arith.addf %367, %369 : vector<8x128xf32>
    %c0_148 = arith.constant 0 : index
    %c0_149 = arith.constant 0 : index
    %371 = vector.load %arg6[%c0_148, %c0_149] : memref<1x128xf32, #tpu.memory_space<vmem>>, vector<1x128xf32>
    %372 = vector.broadcast %371 : vector<1x128xf32> to vector<8x128xf32>
    %373 = arith.addf %370, %372 : vector<8x128xf32>
    %374 = vector.extract_strided_slice %373 {offsets = [0, 0], sizes = [8, 96], strides = [1, 1]} : vector<8x128xf32> to vector<8x96xf32>
    %cst_150 = arith.constant 5.000000e-01 : f32
    %375 = vector.broadcast %cst_150 : f32 to vector<8x96xf32>
    %376 = arith.mulf %375, %374 : vector<8x96xf32>
    %377 = math.tanh %376 : vector<8x96xf32>
    %cst_151 = arith.constant 5.000000e-01 : f32
    %378 = vector.broadcast %cst_151 : f32 to vector<8x96xf32>
    %379 = arith.mulf %378, %377 : vector<8x96xf32>
    %cst_152 = arith.constant 5.000000e-01 : f32
    %380 = vector.broadcast %cst_152 : f32 to vector<8x96xf32>
    %381 = arith.addf %379, %380 : vector<8x96xf32>
    %382 = vector.extract_strided_slice %373 {offsets = [0, 96], sizes = [8, 32], strides = [1, 1]} : vector<8x128xf32> to vector<8x32xf32>
    %383 = math.tanh %382 : vector<8x32xf32>
    %384 = vector.extract_strided_slice %381 {offsets = [0, 0], sizes = [8, 32], strides = [1, 1]} : vector<8x96xf32> to vector<8x32xf32>
    %385 = vector.extract_strided_slice %381 {offsets = [0, 32], sizes = [8, 32], strides = [1, 1]} : vector<8x96xf32> to vector<8x32xf32>
    %386 = vector.extract_strided_slice %381 {offsets = [0, 64], sizes = [8, 32], strides = [1, 1]} : vector<8x96xf32> to vector<8x32xf32>
    %387 = arith.mulf %385, %341 : vector<8x32xf32>
    %388 = arith.mulf %384, %383 : vector<8x32xf32>
    %389 = arith.addf %387, %388 : vector<8x32xf32>
    %390 = math.tanh %389 : vector<8x32xf32>
    %391 = arith.mulf %386, %390 : vector<8x32xf32>
    %c0_153 = arith.constant 0 : index
    %c0_154 = arith.constant 0 : index
    %392 = vector.load %arg7[%c0_153, %c0_154] : memref<32x128xf32, #tpu.memory_space<vmem>>, vector<32x128xf32>
    %cst_155 = arith.constant dense<0.000000e+00> : vector<8x128xf32>
    %393 = tpu.matmul %391, %392, %cst_155 {dimension_numbers = #tpu.dot_dimension_numbers<[1], [0], [0], [1], [0, 0, 1, 1], [], []>} : vector<8x32xf32>, vector<32x128xf32>, vector<8x128xf32> -> vector<8x128xf32>
    %c0_156 = arith.constant 0 : index
    %c0_157 = arith.constant 0 : index
    %394 = vector.load %arg8[%c0_156, %c0_157] : memref<1x128xf32, #tpu.memory_space<vmem>>, vector<1x128xf32>
    %395 = vector.broadcast %394 : vector<1x128xf32> to vector<8x128xf32>
    %396 = arith.addf %393, %395 : vector<8x128xf32>
    %c0_158 = arith.constant 0 : index
    %c0_159 = arith.constant 0 : index
    %397 = vector.load %arg9[%c0_158, %c0_159] : memref<8x128xf32, #tpu.memory_space<vmem>>, vector<8x128xf32>
    tpu.vector_store %arg9[%c0_158, %c0_159], %396 {strides = array<i32>} : memref<8x128xf32, #tpu.memory_space<vmem>>, vector<8x128xf32>,
    return
  }
}

</mosaic_0001>

<llo_original>
// kernel: stacked_lstm_forward.1
$region0: #{stacked_lstm_forward.1}
  #allocation0 [shape = 'u32[]', space=smem, size = 0x4, offset = 0x4, fixed_abs, tag = 'smem constant byte address 0x4 - core index']
  #allocation1 [shape = 'u32[144,128]{1,0:T(1,128)}', space=vmem, size = 0x12000, scoped, tag = 'internal scratch']
  #allocation2 [shape = 'f32[64,128]{1,0:T(8,128)}', space=vmem, size = 0x8000, scoped, tag = 'scratch operand']
  %s0 = inlined_call_operand.vmem [shape: f32[64,16], index: 0, kind: input, shape index: {}]
  %s1 = inlined_call_operand.vmem [shape: f32[16,128], index: 1, kind: input, shape index: {}]
  %s2 = inlined_call_operand.vmem [shape: f32[32,128], index: 2, kind: input, shape index: {}]
  %s3 = inlined_call_operand.vmem [shape: f32[1,128], index: 3, kind: input, shape index: {}]
  %s4 = inlined_call_operand.vmem [shape: f32[32,128], index: 4, kind: input, shape index: {}]
  %s5 = inlined_call_operand.vmem [shape: f32[32,128], index: 5, kind: input, shape index: {}]
  %s6 = inlined_call_operand.vmem [shape: f32[1,128], index: 6, kind: input, shape index: {}]
  %s7 = inlined_call_operand.vmem [shape: f32[32,128], index: 7, kind: input, shape index: {}]
  %s8 = inlined_call_operand.vmem [shape: f32[1,128], index: 8, kind: input, shape index: {}]
  %s9 = inlined_call_operand.vmem [shape: f32[8,128], index: 9, kind: output, shape index: {}]
  %s10 = sld [smem:[#allocation0]]
  $region46: #{stacked_lstm_forward.1} parent=0
    _
  %s12 = ssub.s32 1, %s10
  %s13 = scalar_select 0, %s12, %s10
  // Predicated region
  $region2: #{stacked_lstm_forward.1} parent=0 // pred_check
    _
  $region3: #{stacked_lstm_forward.1} parent=0 // pred_check_branch
    %15 = sbr.rel (0) target = $region5
  $region4: #{stacked_lstm_forward.1} parent=0 // pred_region
    _
  $region5: #{stacked_lstm_forward.1} parent=0 // pred_fallthru
    _
  // Predicated region
  $region6: #{stacked_lstm_forward.1} parent=0 // pred_check
    _
  $region7: #{stacked_lstm_forward.1} parent=0 // pred_check_branch
    %17 = sbr.rel (0) target = $region9
  $region8: #{stacked_lstm_forward.1} parent=0 // pred_region
    _
  $region9: #{stacked_lstm_forward.1} parent=0 // pred_fallthru
    _
  // Predicated region
  $region10: #{stacked_lstm_forward.1} parent=0 // pred_check
    _
  $region11: #{stacked_lstm_forward.1} parent=0 // pred_check_branch
    %19 = sbr.rel (0) target = $region13
  $region12: #{stacked_lstm_forward.1} parent=0 // pred_region
    _
  $region13: #{stacked_lstm_forward.1} parent=0 // pred_fallthru
    _
  // Predicated region
  $region14: #{stacked_lstm_forward.1} parent=0 // pred_check
    _
  $region15: #{stacked_lstm_forward.1} parent=0 // pred_check_branch
    %21 = sbr.rel (0) target = $region17
  $region16: #{stacked_lstm_forward.1} parent=0 // pred_region
    _
  $region17: #{stacked_lstm_forward.1} parent=0 // pred_fallthru
    _
  // Predicated region
  $region18: #{stacked_lstm_forward.1} parent=0 // pred_check
    _
  $region19: #{stacked_lstm_forward.1} parent=0 // pred_check_branch
    %23 = sbr.rel (0) target = $region21
  $region20: #{stacked_lstm_forward.1} parent=0 // pred_region
    _
  $region21: #{stacked_lstm_forward.1} parent=0 // pred_fallthru
    _
  // Predicated region
  $region22: #{stacked_lstm_forward.1} parent=0 // pred_check
    _
  $region23: #{stacked_lstm_forward.1} parent=0 // pred_check_branch
    %25 = sbr.rel (0) target = $region25
  $region24: #{stacked_lstm_forward.1} parent=0 // pred_region
    _
  $region25: #{stacked_lstm_forward.1} parent=0 // pred_fallthru
    _
  // Predicated region
  $region26: #{stacked_lstm_forward.1} parent=0 // pred_check
    _
  $region27: #{stacked_lstm_forward.1} parent=0 // pred_check_branch
    %27 = sbr.rel (0) target = $region29
  $region28: #{stacked_lstm_forward.1} parent=0 // pred_region
    _
  $region29: #{stacked_lstm_forward.1} parent=0 // pred_fallthru
    _
  // Predicated region
  $region30: #{stacked_lstm_forward.1} parent=0 // pred_check
    _
  $region31: #{stacked_lstm_forward.1} parent=0 // pred_check_branch
    %29 = sbr.rel (0) target = $region33
  $region32: #{stacked_lstm_forward.1} parent=0 // pred_region
    _
  $region33: #{stacked_lstm_forward.1} parent=0 // pred_fallthru
    _
  // Predicated region
  $region34: #{stacked_lstm_forward.1} parent=0 // pred_check
    _
  $region35: #{stacked_lstm_forward.1} parent=0 // pred_check_branch
    %31 = sbr.rel (0) target = $region37
  $region36: #{stacked_lstm_forward.1} parent=0 // pred_region
    _
  $region37: #{stacked_lstm_forward.1} parent=0 // pred_fallthru
    _
  %v32 = vld [vmem:[%s0] sm:$0xff]
  %v33 = vld [vmem:[%s0 + $0x8] sm:$0xff]
  %v34 = vld [vmem:[%s0 + $0x10] sm:$0xff]
  %v35 = vld [vmem:[%s0 + $0x18] sm:$0xff]
  %v36 = vld [vmem:[%s0 + $0x20] sm:$0xff]
  %v37 = vld [vmem:[%s0 + $0x28] sm:$0xff]
  %v38 = vld [vmem:[%s0 + $0x30] sm:$0xff]
  %v39 = vld [vmem:[%s0 + $0x38] sm:$0xff]
  %v40 = vld [vmem:[%s1] sm:$0xff]
  %v41 = vld [vmem:[%s1 + $0x8] sm:$0xff]
  %v42 = vld [vmem:[%s3] sm:$0x1]
  %v44 = vlaneseq
  %v45 = vshrl.u32 %v44, 7
  %v46 = vsub.s32 0, %v45
  %v47 = vrot.slane %v42, %v46
  %vm49 = vcmask 130048
  %v51 = vsel %vm49, %v32, 0
  %v54 = vsel %vm49, %v33, 0
  %v57 = vsel %vm49, %v34, 0
  %v60 = vsel %vm49, %v35, 0
  %v63 = vsel %vm49, %v36, 0
  %v66 = vsel %vm49, %v37, 0
  %v69 = vsel %vm49, %v38, 0
  %v72 = vsel %vm49, %v39, 0
  %74 = vmatprep.subr.mxu0 0.0
  %75 = vmatpush1.msra.mxu0 %v40
  %76 = vmatprep.subr.mxu0 0.0
  %77 = vmatpush1.msra.mxu0 %v41
  %78 = vmatprep.subr.mxu0 0.0
  %79 = vmatpush1.msra.mxu0 0.0
  %80 = vmatprep.subr.mxu0 0.0
  %81 = vmatpush1.msra.mxu0 0.0
  %82 = vmatprep.subr.mxu0 0.0
  %83 = vmatpush1.msra.mxu0 0.0
  %84 = vmatprep.subr.mxu0 0.0
  %85 = vmatpush1.msra.mxu0 0.0
  %86 = vmatprep.subr.mxu0 0.0
  %87 = vmatpush1.msra.mxu0 0.0
  %88 = vmatprep.subr.mxu0 0.0
  %89 = vmatpush1.msra.mxu0 0.0
  %90 = vmatprep.subr.mxu0 0.0
  %91 = vmatpush1.msra.mxu0 0.0
  %92 = vmatprep.subr.mxu0 0.0
  %93 = vmatpush1.msra.mxu0 0.0
  %94 = vmatprep.subr.mxu0 0.0
  %95 = vmatpush1.msra.mxu0 0.0
  %96 = vmatprep.subr.mxu0 0.0
  %97 = vmatpush1.msra.mxu0 0.0
  %98 = vmatprep.subr.mxu0 0.0
  %99 = vmatpush1.msra.mxu0 0.0
  %100 = vmatprep.subr.mxu0 0.0
  %101 = vmatpush1.msra.mxu0 0.0
  %102 = vmatprep.subr.mxu0 0.0
  %103 = vmatpush1.msra.mxu0 0.0
  %104 = vmatprep.subr.mxu0 0.0
  %105 = vmatpush1.msra.mxu0 0.0
  %106 = vmatprep.subr.mxu0 0.0
  %107 = vmatpush1.msra.mxu0 0.0
  %108 = vmatprep.subr.mxu0 0.0
  %109 = vmatpush1.msra.mxu0 0.0
  %110 = vmatprep.subr.mxu0 0.0
  %111 = vmatpush1.msra.mxu0 0.0
  %112 = vmatprep.subr.mxu0 0.0
  %113 = vmatpush1.msra.mxu0 0.0
  %114 = vmatprep.subr.mxu0 0.0
  %115 = vmatpush1.msra.mxu0 0.0
  %116 = vmatprep.subr.mxu0 0.0
  %117 = vmatpush1.msra.mxu0 0.0
  %118 = vmatprep.subr.mxu0 0.0
  %119 = vmatpush1.msra.mxu0 0.0
  %120 = vmatprep.subr.mxu0 0.0
  %121 = vmatpush1.msra.mxu0 0.0
  %122 = vmatprep.subr.mxu0 0.0
  %123 = vmatpush1.msra.mxu0 0.0
  %124 = vmatprep.subr.mxu0 0.0
  %125 = vmatpush1.msra.mxu0 0.0
  %126 = vmatprep.subr.mxu0 0.0
  %127 = vmatpush1.msra.mxu0 0.0
  %128 = vmatprep.subr.mxu0 0.0
  %129 = vmatpush1.msra.mxu0 0.0
  %130 = vmatprep.subr.mxu0 0.0
  %131 = vmatpush1.msra.mxu0 0.0
  %132 = vmatprep.subr.mxu0 0.0
  %133 = vmatpush1.msra.mxu0 0.0
  %134 = vmatprep.subr.mxu0 0.0
  %135 = vmatpush1.msra.mxu0 0.0
  %136 = vmatprep.subr.mxu0 0.0
  %137 = vmatpush1.msra.mxu0 0.0
  %138 = vmatprep.mubr.f32.mxu0 0.0
  %139 = vmatmul.mubr.f32.gmra.mrb[0].mxu0 %v51
  %v140 = vpop.f32.mrb[0].mxu0
  %v141 = vadd.f32 %v47, %v140
  %v142 = vpop.f32.mrb[0].mxu0
  %143 = vmatprep.mubr.f32.mxu0 0.0
  %144 = vmatmul.mubr.f32.gmra.mrb[0].mxu0 %v54
  %v145 = vpop.f32.mrb[0].mxu0
  %v146 = vadd.f32 %v47, %v145
  %v147 = vpop.f32.mrb[0].mxu0
  %148 = vmatprep.mubr.f32.mxu0 0.0
  %149 = vmatmul.mubr.f32.gmra.mrb[0].mxu0 %v57
  %v150 = vpop.f32.mrb[0].mxu0
  %v151 = vadd.f32 %v47, %v150
  %v152 = vpop.f32.mrb[0].mxu0
  %153 = vmatprep.mubr.f32.mxu0 0.0
  %154 = vmatmul.mubr.f32.gmra.mrb[0].mxu0 %v60
  %v155 = vpop.f32.mrb[0].mxu0
  %v156 = vadd.f32 %v47, %v155
  %v157 = vpop.f32.mrb[0].mxu0
  %158 = vmatprep.mubr.f32.mxu0 0.0
  %159 = vmatmul.mubr.f32.gmra.mrb[0].mxu0 %v63
  %v160 = vpop.f32.mrb[0].mxu0
  %v161 = vadd.f32 %v47, %v160
  %v162 = vpop.f32.mrb[0].mxu0
  %163 = vmatprep.mubr.f32.mxu0 0.0
  %164 = vmatmul.mubr.f32.gmra.mrb[0].mxu0 %v66
  %v165 = vpop.f32.mrb[0].mxu0
  %v166 = vadd.f32 %v47, %v165
  %v167 = vpop.f32.mrb[0].mxu0
  %168 = vmatprep.mubr.f32.mxu0 0.0
  %169 = vmatmul.mubr.f32.gmra.mrb[0].mxu0 %v69
  %v170 = vpop.f32.mrb[0].mxu0
  %v171 = vadd.f32 %v47, %v170
  %v172 = vpop.f32.mrb[0].mxu0
  %173 = vmatprep.mubr.f32.mxu0 0.0
  %174 = vmatmul.mubr.f32.gmra.mrb[0].mxu0 %v72
  %v175 = vpop.f32.mrb[0].mxu0
  %v176 = vadd.f32 %v47, %v175
  %v177 = vpop.f32.mrb[0].mxu0
  %178 = vdwg.mxu0
  %179 = vst [vmem:[#allocation2] sm:$0xff] %v141
  %180 = vst [vmem:[#allocation2 + $0x8] sm:$0xff] %v146
  %181 = vst [vmem:[#allocation2 + $0x10] sm:$0xff] %v151
  %182 = vst [vmem:[#allocation2 + $0x18] sm:$0xff] %v156
  %183 = vst [vmem:[#allocation2 + $0x20] sm:$0xff] %v161
  %184 = vst [vmem:[#allocation2 + $0x28] sm:$0xff] %v166
  %185 = vst [vmem:[#allocation2 + $0x30] sm:$0xff] %v171
  %186 = vst [vmem:[#allocation2 + $0x38] sm:$0xff] %v176
  %v187 = vld [vmem:[#allocation2] sm:$0xff]
  %v188 = vld [vmem:[%s2] sm:$0xff]
  %v189 = vld [vmem:[%s2 + $0x8] sm:$0xff]
  %v190 = vld [vmem:[%s2 + $0x10] sm:$0xff]
  %v191 = vld [vmem:[%s2 + $0x18] sm:$0xff]
  %vm192 = vcmask 261120
  %v194 = vsel %vm192, 0.0, 0
  %196 = vmatprep.subr.mxu0 0.0
  %197 = vmatpush1.msra.mxu0 %v188
  %198 = vmatprep.subr.mxu0 0.0
  %199 = vmatpush1.msra.mxu0 %v189
  %200 = vmatprep.subr.mxu0 0.0
  %201 = vmatpush1.msra.mxu0 %v190
  %202 = vmatprep.subr.mxu0 0.0
  %203 = vmatpush1.msra.mxu0 %v191
  %204 = vmatprep.subr.mxu0 0.0
  %205 = vmatpush1.msra.mxu0 0.0
  %206 = vmatprep.subr.mxu0 0.0
  %207 = vmatpush1.msra.mxu0 0.0
  %208 = vmatprep.subr.mxu0 0.0
  %209 = vmatpush1.msra.mxu0 0.0
  %210 = vmatprep.subr.mxu0 0.0
  %211 = vmatpush1.msra.mxu0 0.0
  %212 = vmatprep.subr.mxu0 0.0
  %213 = vmatpush1.msra.mxu0 0.0
  %214 = vmatprep.subr.mxu0 0.0
  %215 = vmatpush1.msra.mxu0 0.0
  %216 = vmatprep.subr.mxu0 0.0
  %217 = vmatpush1.msra.mxu0 0.0
  %218 = vmatprep.subr.mxu0 0.0
  %219 = vmatpush1.msra.mxu0 0.0
  %220 = vmatprep.subr.mxu0 0.0
  %221 = vmatpush1.msra.mxu0 0.0
  %222 = vmatprep.subr.mxu0 0.0
  %223 = vmatpush1.msra.mxu0 0.0
  %224 = vmatprep.subr.mxu0 0.0
  %225 = vmatpush1.msra.mxu0 0.0
  %226 = vmatprep.subr.mxu0 0.0
  %227 = vmatpush1.msra.mxu0 0.0
  %228 = vmatprep.subr.mxu0 0.0
  %229 = vmatpush1.msra.mxu0 0.0
  %230 = vmatprep.subr.mxu0 0.0
  %231 = vmatpush1.msra.mxu0 0.0
  %232 = vmatprep.subr.mxu0 0.0
  %233 = vmatpush1.msra.mxu0 0.0
  %234 = vmatprep.subr.mxu0 0.0
  %235 = vmatpush1.msra.mxu0 0.0
  %236 = vmatprep.subr.mxu0 0.0
  %237 = vmatpush1.msra.mxu0 0.0
  %238 = vmatprep.subr.mxu0 0.0
  %239 = vmatpush1.msra.mxu0 0.0
  %240 = vmatprep.subr.mxu0 0.0
  %241 = vmatpush1.msra.mxu0 0.0
  %242 = vmatprep.subr.mxu0 0.0
  %243 = vmatpush1.msra.mxu0 0.0
  %244 = vmatprep.subr.mxu0 0.0
  %245 = vmatpush1.msra.mxu0 0.0
  %246 = vmatprep.subr.mxu0 0.0
  %247 = vmatpush1.msra.mxu0 0.0
  %248 = vmatprep.subr.mxu0 0.0
  %249 = vmatpush1.msra.mxu0 0.0
  %250 = vmatprep.subr.mxu0 0.0
  %251 = vmatpush1.msra.mxu0 0.0
  %252 = vmatprep.subr.mxu0 0.0
  %253 = vmatpush1.msra.mxu0 0.0
  %254 = vmatprep.subr.mxu0 0.0
  %255 = vmatpush1.msra.mxu0 0.0
  %256 = vmatprep.subr.mxu0 0.0
  %257 = vmatpush1.msra.mxu0 0.0
  %258 = vmatprep.subr.mxu0 0.0
  %259 = vmatpush1.msra.mxu0 0.0
  %260 = vmatprep.mubr.f32.mxu0 0.0
  %261 = vmatmul.mubr.f32.gmra.mrb[0].mxu0 %v194
  %v262 = vpop.f32.mrb[0].mxu0
  %v263 = vadd.f32 0.0, %v262
  %v264 = vpop.f32.mrb[0].mxu0
  %265 = vdwg.mxu0
  %v266 = vadd.f32 %v187, %v263
  %v267 = vmul.f32 %v266, 0.5
  %v268 = vtanh.pop %v267
  %v269 = vmul.f32 %v268, 0.5
  %v270 = vadd.f32 %v269, 0.5
  %v271 = vtanh.pop %v266
  %v272 = vmul.f32 %v270, 0.0
  %274 = vrot.lane.b32.xlu0 %v271, 32
  %v275 = vpop.permute.xlu0 %274
  %v277 = vmul.f32 %v270, %v275
  %279 = vrot.lane.b32.xlu0 %v277, 32
  %v280 = vpop.permute.xlu0 %279
  %v282 = vadd.f32 %v272, %v280
  %v283 = vtanh.pop %v282
  %285 = vrot.lane.b32.xlu0 %v283, 32
  %v286 = vpop.permute.xlu0 %285
  %v288 = vmul.f32 %v270, %v286
  %v289 = vld [vmem:[%s4] sm:$0xff]
  %v290 = vld [vmem:[%s4 + $0x8] sm:$0xff]
  %v291 = vld [vmem:[%s4 + $0x10] sm:$0xff]
  %v292 = vld [vmem:[%s4 + $0x18] sm:$0xff]
  %v293 = vld [vmem:[%s5] sm:$0xff]
  %v294 = vld [vmem:[%s5 + $0x8] sm:$0xff]
  %v295 = vld [vmem:[%s5 + $0x10] sm:$0xff]
  %v296 = vld [vmem:[%s5 + $0x18] sm:$0xff]
  %297 = vmatprep.subr.mxu0 0.0
  %298 = vmatpush1.msra.mxu0 %v293
  %299 = vmatprep.subr.mxu0 0.0
  %300 = vmatpush1.msra.mxu0 %v294
  %301 = vmatprep.subr.mxu0 0.0
  %302 = vmatpush1.msra.mxu0 %v295
  %303 = vmatprep.subr.mxu0 0.0
  %304 = vmatpush1.msra.mxu0 %v296
  %305 = vmatprep.subr.mxu0 0.0
  %306 = vmatpush1.msra.mxu0 0.0
  %307 = vmatprep.subr.mxu0 0.0
  %308 = vmatpush1.msra.mxu0 0.0
  %309 = vmatprep.subr.mxu0 0.0
  %310 = vmatpush1.msra.mxu0 0.0
  %311 = vmatprep.subr.mxu0 0.0
  %312 = vmatpush1.msra.mxu0 0.0
  %313 = vmatprep.subr.mxu0 0.0
  %314 = vmatpush1.msra.mxu0 0.0
  %315 = vmatprep.subr.mxu0 0.0
  %316 = vmatpush1.msra.mxu0 0.0
  %317 = vmatprep.subr.mxu0 0.0
  %318 = vmatpush1.msra.mxu0 0.0
  %319 = vmatprep.subr.mxu0 0.0
  %320 = vmatpush1.msra.mxu0 0.0
  %321 = vmatprep.subr.mxu0 0.0
  %322 = vmatpush1.msra.mxu0 0.0
  %323 = vmatprep.subr.mxu0 0.0
  %324 = vmatpush1.msra.mxu0 0.0
  %325 = vmatprep.subr.mxu0 0.0
  %326 = vmatpush1.msra.mxu0 0.0
  %327 = vmatprep.subr.mxu0 0.0
  %328 = vmatpush1.msra.mxu0 0.0
  %329 = vmatprep.subr.mxu0 0.0
  %330 = vmatpush1.msra.mxu0 0.0
  %331 = vmatprep.subr.mxu0 0.0
  %332 = vmatpush1.msra.mxu0 0.0
  %333 = vmatprep.subr.mxu0 0.0
  %334 = vmatpush1.msra.mxu0 0.0
  %335 = vmatprep.subr.mxu0 0.0
  %336 = vmatpush1.msra.mxu0 0.0
  %337 = vmatprep.subr.mxu0 0.0
  %338 = vmatpush1.msra.mxu0 0.0
  %339 = vmatprep.subr.mxu0 0.0
  %340 = vmatpush1.msra.mxu0 0.0
  %341 = vmatprep.subr.mxu0 0.0
  %342 = vmatpush1.msra.mxu0 0.0
  %343 = vmatprep.subr.mxu0 0.0
  %344 = vmatpush1.msra.mxu0 0.0
  %345 = vmatprep.subr.mxu0 0.0
  %346 = vmatpush1.msra.mxu0 0.0
  %347 = vmatprep.subr.mxu0 0.0
  %348 = vmatpush1.msra.mxu0 0.0
  %349 = vmatprep.subr.mxu0 0.0
  %350 = vmatpush1.msra.mxu0 0.0
  %351 = vmatprep.subr.mxu0 0.0
  %352 = vmatpush1.msra.mxu0 0.0
  %353 = vmatprep.subr.mxu0 0.0
  %354 = vmatpush1.msra.mxu0 0.0
  %355 = vmatprep.subr.mxu0 0.0
  %356 = vmatpush1.msra.mxu0 0.0
  %357 = vmatprep.subr.mxu0 0.0
  %358 = vmatpush1.msra.mxu0 0.0
  %359 = vmatprep.subr.mxu0 0.0
  %360 = vmatpush1.msra.mxu0 0.0
  %361 = vmatprep.mubr.f32.mxu0 0.0
  %362 = vmatmul.mubr.f32.gmra.mrb[0].mxu0 %v194
  %v363 = vpop.f32.mrb[0].mxu0
  %v364 = vadd.f32 0.0, %v363
  %v365 = vpop.f32.mrb[0].mxu0
  %366 = vdwg.mxu0
  %368 = vrot.lane.b32.xlu0 %v288, 64
  %v369 = vpop.permute.xlu0 %368
  %v370 = vsel %vm192, %v369, 0
  %372 = vmatprep.subr.mxu0 0.0
  %373 = vmatpush1.msra.mxu0 %v289
  %374 = vmatprep.subr.mxu0 0.0
  %375 = vmatpush1.msra.mxu0 %v290
  %376 = vmatprep.subr.mxu0 0.0
  %377 = vmatpush1.msra.mxu0 %v291
  %378 = vmatprep.subr.mxu0 0.0
  %379 = vmatpush1.msra.mxu0 %v292
  %380 = vmatprep.subr.mxu0 0.0
  %381 = vmatpush1.msra.mxu0 0.0
  %382 = vmatprep.subr.mxu0 0.0
  %383 = vmatpush1.msra.mxu0 0.0
  %384 = vmatprep.subr.mxu0 0.0
  %385 = vmatpush1.msra.mxu0 0.0
  %386 = vmatprep.subr.mxu0 0.0
  %387 = vmatpush1.msra.mxu0 0.0
  %388 = vmatprep.subr.mxu0 0.0
  %389 = vmatpush1.msra.mxu0 0.0
  %390 = vmatprep.subr.mxu0 0.0
  %391 = vmatpush1.msra.mxu0 0.0
  %392 = vmatprep.subr.mxu0 0.0
  %393 = vmatpush1.msra.mxu0 0.0
  %394 = vmatprep.subr.mxu0 0.0
  %395 = vmatpush1.msra.mxu0 0.0
  %396 = vmatprep.subr.mxu0 0.0
  %397 = vmatpush1.msra.mxu0 0.0
  %398 = vmatprep.subr.mxu0 0.0
  %399 = vmatpush1.msra.mxu0 0.0
  %400 = vmatprep.subr.mxu0 0.0
  %401 = vmatpush1.msra.mxu0 0.0
  %402 = vmatprep.subr.mxu0 0.0
  %403 = vmatpush1.msra.mxu0 0.0
  %404 = vmatprep.subr.mxu0 0.0
  %405 = vmatpush1.msra.mxu0 0.0
  %406 = vmatprep.subr.mxu0 0.0
  %407 = vmatpush1.msra.mxu0 0.0
  %408 = vmatprep.subr.mxu0 0.0
  %409 = vmatpush1.msra.mxu0 0.0
  %410 = vmatprep.subr.mxu0 0.0
  %411 = vmatpush1.msra.mxu0 0.0
  %412 = vmatprep.subr.mxu0 0.0
  %413 = vmatpush1.msra.mxu0 0.0
  %414 = vmatprep.subr.mxu0 0.0
  %415 = vmatpush1.msra.mxu0 0.0
  %416 = vmatprep.subr.mxu0 0.0
  %417 = vmatpush1.msra.mxu0 0.0
  %418 = vmatprep.subr.mxu0 0.0
  %419 = vmatpush1.msra.mxu0 0.0
  %420 = vmatprep.subr.mxu0 0.0
  %421 = vmatpush1.msra.mxu0 0.0
  %422 = vmatprep.subr.mxu0 0.0
  %423 = vmatpush1.msra.mxu0 0.0
  %424 = vmatprep.subr.mxu0 0.0
  %425 = vmatpush1.msra.mxu0 0.0
  %426 = vmatprep.subr.mxu0 0.0
  %427 = vmatpush1.msra.mxu0 0.0
  %428 = vmatprep.subr.mxu0 0.0
  %429 = vmatpush1.msra.mxu0 0.0
  %430 = vmatprep.subr.mxu0 0.0
  %431 = vmatpush1.msra.mxu0 0.0
  %432 = vmatprep.subr.mxu0 0.0
  %433 = vmatpush1.msra.mxu0 0.0
  %434 = vmatprep.subr.mxu0 0.0
  %435 = vmatpush1.msra.mxu0 0.0
  %436 = vmatprep.mubr.f32.mxu0 0.0
  %437 = vmatmul.mubr.f32.gmra.mrb[0].mxu0 %v370
  %v438 = vpop.f32.mrb[0].mxu0
  %v439 = vadd.f32 %v364, %v438
  %v440 = vpop.f32.mrb[0].mxu0
  %441 = vdwg.mxu0
  %v442 = vld [vmem:[%s6] sm:$0x1]
  %v444 = vlaneseq
  %v445 = vshrl.u32 %v444, 7
  %v446 = vsub.s32 0, %v445
  %v447 = vrot.slane %v442, %v446
  %v449 = vadd.f32 %v439, %v447
  %v450 = vmul.f32 %v449, 0.5
  %v451 = vtanh.pop %v450
  %v452 = vmul.f32 %v451, 0.5
  %v453 = vadd.f32 %v452, 0.5
  %v454 = vtanh.pop %v449
  %v455 = vmul.f32 %v453, 0.0
  %457 = vrot.lane.b32.xlu0 %v454, 32
  %v458 = vpop.permute.xlu0 %457
  %v460 = vmul.f32 %v453, %v458
  %462 = vrot.lane.b32.xlu0 %v460, 32
  %v463 = vpop.permute.xlu0 %462
  %v465 = vadd.f32 %v455, %v463
  %v466 = vtanh.pop %v465
  %468 = vrot.lane.b32.xlu0 %v466, 32
  %v469 = vpop.permute.xlu0 %468
  %v471 = vmul.f32 %v453, %v469
  %v472 = vld [vmem:[#allocation2 + $0x8] sm:$0xff]
  %473 = vmatprep.subr.mxu0 0.0
  %474 = vmatpush1.msra.mxu0 %v188
  %475 = vmatprep.subr.mxu0 0.0
  %476 = vmatpush1.msra.mxu0 %v189
  %477 = vmatprep.subr.mxu0 0.0
  %478 = vmatpush1.msra.mxu0 %v190
  %479 = vmatprep.subr.mxu0 0.0
  %480 = vmatpush1.msra.mxu0 %v191
  %481 = vmatprep.subr.mxu0 0.0
  %482 = vmatpush1.msra.mxu0 0.0
  %483 = vmatprep.subr.mxu0 0.0
  %484 = vmatpush1.msra.mxu0 0.0
  %485 = vmatprep.subr.mxu0 0.0
  %486 = vmatpush1.msra.mxu0 0.0
  %487 = vmatprep.subr.mxu0 0.0
  %488 = vmatpush1.msra.mxu0 0.0
  %489 = vmatprep.subr.mxu0 0.0
  %490 = vmatpush1.msra.mxu0 0.0
  %491 = vmatprep.subr.mxu0 0.0
  %492 = vmatpush1.msra.mxu0 0.0
  %493 = vmatprep.subr.mxu0 0.0
  %494 = vmatpush1.msra.mxu0 0.0
  %495 = vmatprep.subr.mxu0 0.0
  %496 = vmatpush1.msra.mxu0 0.0
  %497 = vmatprep.subr.mxu0 0.0
  %498 = vmatpush1.msra.mxu0 0.0
  %499 = vmatprep.subr.mxu0 0.0
  %500 = vmatpush1.msra.mxu0 0.0
  %501 = vmatprep.subr.mxu0 0.0
  %502 = vmatpush1.msra.mxu0 0.0
  %503 = vmatprep.subr.mxu0 0.0
  %504 = vmatpush1.msra.mxu0 0.0
  %505 = vmatprep.subr.mxu0 0.0
  %506 = vmatpush1.msra.mxu0 0.0
  %507 = vmatprep.subr.mxu0 0.0
  %508 = vmatpush1.msra.mxu0 0.0
  %509 = vmatprep.subr.mxu0 0.0
  %510 = vmatpush1.msra.mxu0 0.0
  %511 = vmatprep.subr.mxu0 0.0
  %512 = vmatpush1.msra.mxu0 0.0
  %513 = vmatprep.subr.mxu0 0.0
  %514 = vmatpush1.msra.mxu0 0.0
  %515 = vmatprep.subr.mxu0 0.0
  %516 = vmatpush1.msra.mxu0 0.0
  %517 = vmatprep.subr.mxu0 0.0
  %518 = vmatpush1.msra.mxu0 0.0
  %519 = vmatprep.subr.mxu0 0.0
  %520 = vmatpush1.msra.mxu0 0.0
  %521 = vmatprep.subr.mxu0 0.0
  %522 = vmatpush1.msra.mxu0 0.0
  %523 = vmatprep.subr.mxu0 0.0
  %524 = vmatpush1.msra.mxu0 0.0
  %525 = vmatprep.subr.mxu0 0.0
  %526 = vmatpush1.msra.mxu0 0.0
  %527 = vmatprep.subr.mxu0 0.0
  %528 = vmatpush1.msra.mxu0 0.0
  %529 = vmatprep.subr.mxu0 0.0
  %530 = vmatpush1.msra.mxu0 0.0
  %531 = vmatprep.subr.mxu0 0.0
  %532 = vmatpush1.msra.mxu0 0.0
  %533 = vmatprep.subr.mxu0 0.0
  %534 = vmatpush1.msra.mxu0 0.0
  %535 = vmatprep.subr.mxu0 0.0
  %536 = vmatpush1.msra.mxu0 0.0
  %537 = vmatprep.mubr.f32.mxu0 0.0
  %538 = vmatmul.mubr.f32.gmra.mrb[0].mxu0 %v370
  %v539 = vpop.f32.mrb[0].mxu0
  %v540 = vadd.f32 0.0, %v539
  %v541 = vpop.f32.mrb[0].mxu0
  %542 = vdwg.mxu0
  %v543 = vadd.f32 %v472, %v540
  %v544 = vmul.f32 %v543, 0.5
  %v545 = vtanh.pop %v544
  %v546 = vmul.f32 %v545, 0.5
  %v547 = vadd.f32 %v546, 0.5
  %v548 = vtanh.pop %v543
  %v549 = vmul.f32 %v547, %v282
  %551 = vrot.lane.b32.xlu0 %v548, 32
  %v552 = vpop.permute.xlu0 %551
  %v554 = vmul.f32 %v547, %v552
  %556 = vrot.lane.b32.xlu0 %v554, 32
  %v557 = vpop.permute.xlu0 %556
  %v559 = vadd.f32 %v549, %v557
  %v560 = vtanh.pop %v559
  %562 = vrot.lane.b32.xlu0 %v560, 32
  %v563 = vpop.permute.xlu0 %562
  %v565 = vmul.f32 %v547, %v563
  %567 = vrot.lane.b32.xlu0 %v471, 64
  %v568 = vpop.permute.xlu0 %567
  %v569 = vsel %vm192, %v568, 0
  %571 = vmatprep.subr.mxu0 0.0
  %572 = vmatpush1.msra.mxu0 %v293
  %573 = vmatprep.subr.mxu0 0.0
  %574 = vmatpush1.msra.mxu0 %v294
  %575 = vmatprep.subr.mxu0 0.0
  %576 = vmatpush1.msra.mxu0 %v295
  %577 = vmatprep.subr.mxu0 0.0
  %578 = vmatpush1.msra.mxu0 %v296
  %579 = vmatprep.subr.mxu0 0.0
  %580 = vmatpush1.msra.mxu0 0.0
  %581 = vmatprep.subr.mxu0 0.0
  %582 = vmatpush1.msra.mxu0 0.0
  %583 = vmatprep.subr.mxu0 0.0
  %584 = vmatpush1.msra.mxu0 0.0
  %585 = vmatprep.subr.mxu0 0.0
  %586 = vmatpush1.msra.mxu0 0.0
  %587 = vmatprep.subr.mxu0 0.0
  %588 = vmatpush1.msra.mxu0 0.0
  %589 = vmatprep.subr.mxu0 0.0
  %590 = vmatpush1.msra.mxu0 0.0
  %591 = vmatprep.subr.mxu0 0.0
  %592 = vmatpush1.msra.mxu0 0.0
  %593 = vmatprep.subr.mxu0 0.0
  %594 = vmatpush1.msra.mxu0 0.0
  %595 = vmatprep.subr.mxu0 0.0
  %596 = vmatpush1.msra.mxu0 0.0
  %597 = vmatprep.subr.mxu0 0.0
  %598 = vmatpush1.msra.mxu0 0.0
  %599 = vmatprep.subr.mxu0 0.0
  %600 = vmatpush1.msra.mxu0 0.0
  %601 = vmatprep.subr.mxu0 0.0
  %602 = vmatpush1.msra.mxu0 0.0
  %603 = vmatprep.subr.mxu0 0.0
  %604 = vmatpush1.msra.mxu0 0.0
  %605 = vmatprep.subr.mxu0 0.0
  %606 = vmatpush1.msra.mxu0 0.0
  %607 = vmatprep.subr.mxu0 0.0
  %608 = vmatpush1.msra.mxu0 0.0
  %609 = vmatprep.subr.mxu0 0.0
  %610 = vmatpush1.msra.mxu0 0.0
  %611 = vmatprep.subr.mxu0 0.0
  %612 = vmatpush1.msra.mxu0 0.0
  %613 = vmatprep.subr.mxu0 0.0
  %614 = vmatpush1.msra.mxu0 0.0
  %615 = vmatprep.subr.mxu0 0.0
  %616 = vmatpush1.msra.mxu0 0.0
  %617 = vmatprep.subr.mxu0 0.0
  %618 = vmatpush1.msra.mxu0 0.0
  %619 = vmatprep.subr.mxu0 0.0
  %620 = vmatpush1.msra.mxu0 0.0
  %621 = vmatprep.subr.mxu0 0.0
  %622 = vmatpush1.msra.mxu0 0.0
  %623 = vmatprep.subr.mxu0 0.0
  %624 = vmatpush1.msra.mxu0 0.0
  %625 = vmatprep.subr.mxu0 0.0
  %626 = vmatpush1.msra.mxu0 0.0
  %627 = vmatprep.subr.mxu0 0.0
  %628 = vmatpush1.msra.mxu0 0.0
  %629 = vmatprep.subr.mxu0 0.0
  %630 = vmatpush1.msra.mxu0 0.0
  %631 = vmatprep.subr.mxu0 0.0
  %632 = vmatpush1.msra.mxu0 0.0
  %633 = vmatprep.subr.mxu0 0.0
  %634 = vmatpush1.msra.mxu0 0.0
  %635 = vmatprep.mubr.f32.mxu0 0.0
  %636 = vmatmul.mubr.f32.gmra.mrb[0].mxu0 %v569
  %v637 = vpop.f32.mrb[0].mxu0
  %v638 = vadd.f32 0.0, %v637
  %v639 = vpop.f32.mrb[0].mxu0
  %640 = vdwg.mxu0
  %642 = vrot.lane.b32.xlu0 %v565, 64
  %v643 = vpop.permute.xlu0 %642
  %v644 = vsel %vm192, %v643, 0
  %646 = vmatprep.subr.mxu0 0.0
  %647 = vmatpush1.msra.mxu0 %v289
  %648 = vmatprep.subr.mxu0 0.0
  %649 = vmatpush1.msra.mxu0 %v290
  %650 = vmatprep.subr.mxu0 0.0
  %651 = vmatpush1.msra.mxu0 %v291
  %652 = vmatprep.subr.mxu0 0.0
  %653 = vmatpush1.msra.mxu0 %v292
  %654 = vmatprep.subr.mxu0 0.0
  %655 = vmatpush1.msra.mxu0 0.0
  %656 = vmatprep.subr.mxu0 0.0
  %657 = vmatpush1.msra.mxu0 0.0
  %658 = vmatprep.subr.mxu0 0.0
  %659 = vmatpush1.msra.mxu0 0.0
  %660 = vmatprep.subr.mxu0 0.0
  %661 = vmatpush1.msra.mxu0 0.0
  %662 = vmatprep.subr.mxu0 0.0
  %663 = vmatpush1.msra.mxu0 0.0
  %664 = vmatprep.subr.mxu0 0.0
  %665 = vmatpush1.msra.mxu0 0.0
  %666 = vmatprep.subr.mxu0 0.0
  %667 = vmatpush1.msra.mxu0 0.0
  %668 = vmatprep.subr.mxu0 0.0
  %669 = vmatpush1.msra.mxu0 0.0
  %670 = vmatprep.subr.mxu0 0.0
  %671 = vmatpush1.msra.mxu0 0.0
  %672 = vmatprep.subr.mxu0 0.0
  %673 = vmatpush1.msra.mxu0 0.0
  %674 = vmatprep.subr.mxu0 0.0
  %675 = vmatpush1.msra.mxu0 0.0
  %676 = vmatprep.subr.mxu0 0.0
  %677 = vmatpush1.msra.mxu0 0.0
  %678 = vmatprep.subr.mxu0 0.0
  %679 = vmatpush1.msra.mxu0 0.0
  %680 = vmatprep.subr.mxu0 0.0
  %681 = vmatpush1.msra.mxu0 0.0
  %682 = vmatprep.subr.mxu0 0.0
  %683 = vmatpush1.msra.mxu0 0.0
  %684 = vmatprep.subr.mxu0 0.0
  %685 = vmatpush1.msra.mxu0 0.0
  %686 = vmatprep.subr.mxu0 0.0
  %687 = vmatpush1.msra.mxu0 0.0
  %688 = vmatprep.subr.mxu0 0.0
  %689 = vmatpush1.msra.mxu0 0.0
  %690 = vmatprep.subr.mxu0 0.0
  %691 = vmatpush1.msra.mxu0 0.0
  %692 = vmatprep.subr.mxu0 0.0
  %693 = vmatpush1.msra.mxu0 0.0
  %694 = vmatprep.subr.mxu0 0.0
  %695 = vmatpush1.msra.mxu0 0.0
  %696 = vmatprep.subr.mxu0 0.0
  %697 = vmatpush1.msra.mxu0 0.0
  %698 = vmatprep.subr.mxu0 0.0
  %699 = vmatpush1.msra.mxu0 0.0
  %700 = vmatprep.subr.mxu0 0.0
  %701 = vmatpush1.msra.mxu0 0.0
  %702 = vmatprep.subr.mxu0 0.0
  %703 = vmatpush1.msra.mxu0 0.0
  %704 = vmatprep.subr.mxu0 0.0
  %705 = vmatpush1.msra.mxu0 0.0
  %706 = vmatprep.subr.mxu0 0.0
  %707 = vmatpush1.msra.mxu0 0.0
  %708 = vmatprep.subr.mxu0 0.0
  %709 = vmatpush1.msra.mxu0 0.0
  %710 = vmatprep.mubr.f32.mxu0 0.0
  %711 = vmatmul.mubr.f32.gmra.mrb[0].mxu0 %v644
  %v712 = vpop.f32.mrb[0].mxu0
  %v713 = vadd.f32 %v638, %v712
  %v714 = vpop.f32.mrb[0].mxu0
  %715 = vdwg.mxu0
  %v716 = vadd.f32 %v713, %v447
  %v717 = vmul.f32 %v716, 0.5
  %v718 = vtanh.pop %v717
  %v719 = vmul.f32 %v718, 0.5
  %v720 = vadd.f32 %v719, 0.5
  %v721 = vtanh.pop %v716
  %v722 = vmul.f32 %v720, %v465
  %724 = vrot.lane.b32.xlu0 %v721, 32
  %v725 = vpop.permute.xlu0 %724
  %v727 = vmul.f32 %v720, %v725
  %729 = vrot.lane.b32.xlu0 %v727, 32
  %v730 = vpop.permute.xlu0 %729
  %v732 = vadd.f32 %v722, %v730
  %v733 = vtanh.pop %v732
  %735 = vrot.lane.b32.xlu0 %v733, 32
  %v736 = vpop.permute.xlu0 %735
  %v738 = vmul.f32 %v720, %v736
  %v739 = vld [vmem:[#allocation2 + $0x10] sm:$0xff]
  %740 = vmatprep.subr.mxu0 0.0
  %741 = vmatpush1.msra.mxu0 %v188
  %742 = vmatprep.subr.mxu0 0.0
  %743 = vmatpush1.msra.mxu0 %v189
  %744 = vmatprep.subr.mxu0 0.0
  %745 = vmatpush1.msra.mxu0 %v190
  %746 = vmatprep.subr.mxu0 0.0
  %747 = vmatpush1.msra.mxu0 %v191
  %748 = vmatprep.subr.mxu0 0.0
  %749 = vmatpush1.msra.mxu0 0.0
  %750 = vmatprep.subr.mxu0 0.0
  %751 = vmatpush1.msra.mxu0 0.0
  %752 = vmatprep.subr.mxu0 0.0
  %753 = vmatpush1.msra.mxu0 0.0
  %754 = vmatprep.subr.mxu0 0.0
  %755 = vmatpush1.msra.mxu0 0.0
  %756 = vmatprep.subr.mxu0 0.0
  %757 = vmatpush1.msra.mxu0 0.0
  %758 = vmatprep.subr.mxu0 0.0
  %759 = vmatpush1.msra.mxu0 0.0
  %760 = vmatprep.subr.mxu0 0.0
  %761 = vmatpush1.msra.mxu0 0.0
  %762 = vmatprep.subr.mxu0 0.0
  %763 = vmatpush1.msra.mxu0 0.0
  %764 = vmatprep.subr.mxu0 0.0
  %765 = vmatpush1.msra.mxu0 0.0
  %766 = vmatprep.subr.mxu0 0.0
  %767 = vmatpush1.msra.mxu0 0.0
  %768 = vmatprep.subr.mxu0 0.0
  %769 = vmatpush1.msra.mxu0 0.0
  %770 = vmatprep.subr.mxu0 0.0
  %771 = vmatpush1.msra.mxu0 0.0
  %772 = vmatprep.subr.mxu0 0.0
  %773 = vmatpush1.msra.mxu0 0.0
  %774 = vmatprep.subr.mxu0 0.0
  %775 = vmatpush1.msra.mxu0 0.0
  %776 = vmatprep.subr.mxu0 0.0
  %777 = vmatpush1.msra.mxu0 0.0
  %778 = vmatprep.subr.mxu0 0.0
  %779 = vmatpush1.msra.mxu0 0.0
  %780 = vmatprep.subr.mxu0 0.0
  %781 = vmatpush1.msra.mxu0 0.0
  %782 = vmatprep.subr.mxu0 0.0
  %783 = vmatpush1.msra.mxu0 0.0
  %784 = vmatprep.subr.mxu0 0.0
  %785 = vmatpush1.msra.mxu0 0.0
  %786 = vmatprep.subr.mxu0 0.0
  %787 = vmatpush1.msra.mxu0 0.0
  %788 = vmatprep.subr.mxu0 0.0
  %789 = vmatpush1.msra.mxu0 0.0
  %790 = vmatprep.subr.mxu0 0.0
  %791 = vmatpush1.msra.mxu0 0.0
  %792 = vmatprep.subr.mxu0 0.0
  %793 = vmatpush1.msra.mxu0 0.0
  %794 = vmatprep.subr.mxu0 0.0
  %795 = vmatpush1.msra.mxu0 0.0
  %796 = vmatprep.subr.mxu0 0.0
  %797 = vmatpush1.msra.mxu0 0.0
  %798 = vmatprep.subr.mxu0 0.0
  %799 = vmatpush1.msra.mxu0 0.0
  %800 = vmatprep.subr.mxu0 0.0
  %801 = vmatpush1.msra.mxu0 0.0
  %802 = vmatprep.subr.mxu0 0.0
  %803 = vmatpush1.msra.mxu0 0.0
  %804 = vmatprep.mubr.f32.mxu0 0.0
  %805 = vmatmul.mubr.f32.gmra.mrb[0].mxu0 %v644
  %v806 = vpop.f32.mrb[0].mxu0
  %v807 = vadd.f32 0.0, %v806
  %v808 = vpop.f32.mrb[0].mxu0
  %809 = vdwg.mxu0
  %v810 = vadd.f32 %v739, %v807
  %v811 = vmul.f32 %v810, 0.5
  %v812 = vtanh.pop %v811
  %v813 = vmul.f32 %v812, 0.5
  %v814 = vadd.f32 %v813, 0.5
  %v815 = vtanh.pop %v810
  %v816 = vmul.f32 %v814, %v559
  %818 = vrot.lane.b32.xlu0 %v815, 32
  %v819 = vpop.permute.xlu0 %818
  %v821 = vmul.f32 %v814, %v819
  %823 = vrot.lane.b32.xlu0 %v821, 32
  %v824 = vpop.permute.xlu0 %823
  %v826 = vadd.f32 %v816, %v824
  %v827 = vtanh.pop %v826
  %829 = vrot.lane.b32.xlu0 %v827, 32
  %v830 = vpop.permute.xlu0 %829
  %v832 = vmul.f32 %v814, %v830
  %834 = vrot.lane.b32.xlu0 %v738, 64
  %v835 = vpop.permute.xlu0 %834
  %v836 = vsel %vm192, %v835, 0
  %838 = vmatprep.subr.mxu0 0.0
  %839 = vmatpush1.msra.mxu0 %v293
  %840 = vmatprep.subr.mxu0 0.0
  %841 = vmatpush1.msra.mxu0 %v294
  %842 = vmatprep.subr.mxu0 0.0
  %843 = vmatpush1.msra.mxu0 %v295
  %844 = vmatprep.subr.mxu0 0.0
  %845 = vmatpush1.msra.mxu0 %v296
  %846 = vmatprep.subr.mxu0 0.0
  %847 = vmatpush1.msra.mxu0 0.0
  %848 = vmatprep.subr.mxu0 0.0
  %849 = vmatpush1.msra.mxu0 0.0
  %850 = vmatprep.subr.mxu0 0.0
  %851 = vmatpush1.msra.mxu0 0.0
  %852 = vmatprep.subr.mxu0 0.0
  %853 = vmatpush1.msra.mxu0 0.0
  %854 = vmatprep.subr.mxu0 0.0
  %855 = vmatpush1.msra.mxu0 0.0
  %856 = vmatprep.subr.mxu0 0.0
  %857 = vmatpush1.msra.mxu0 0.0
  %858 = vmatprep.subr.mxu0 0.0
  %859 = vmatpush1.msra.mxu0 0.0
  %860 = vmatprep.subr.mxu0 0.0
  %861 = vmatpush1.msra.mxu0 0.0
  %862 = vmatprep.subr.mxu0 0.0
  %863 = vmatpush1.msra.mxu0 0.0
  %864 = vmatprep.subr.mxu0 0.0
  %865 = vmatpush1.msra.mxu0 0.0
  %866 = vmatprep.subr.mxu0 0.0
  %867 = vmatpush1.msra.mxu0 0.0
  %868 = vmatprep.subr.mxu0 0.0
  %869 = vmatpush1.msra.mxu0 0.0
  %870 = vmatprep.subr.mxu0 0.0
  %871 = vmatpush1.msra.mxu0 0.0
  %872 = vmatprep.subr.mxu0 0.0
  %873 = vmatpush1.msra.mxu0 0.0
  %874 = vmatprep.subr.mxu0 0.0
  %875 = vmatpush1.msra.mxu0 0.0
  %876 = vmatprep.subr.mxu0 0.0
  %877 = vmatpush1.msra.mxu0 0.0
  %878 = vmatprep.subr.mxu0 0.0
  %879 = vmatpush1.msra.mxu0 0.0
  %880 = vmatprep.subr.mxu0 0.0
  %881 = vmatpush1.msra.mxu0 0.0
  %882 = vmatprep.subr.mxu0 0.0
  %883 = vmatpush1.msra.mxu0 0.0
  %884 = vmatprep.subr.mxu0 0.0
  %885 = vmatpush1.msra.mxu0 0.0
  %886 = vmatprep.subr.mxu0 0.0
  %887 = vmatpush1.msra.mxu0 0.0
  %888 = vmatprep.subr.mxu0 0.0
  %889 = vmatpush1.msra.mxu0 0.0
  %890 = vmatprep.subr.mxu0 0.0
  %891 = vmatpush1.msra.mxu0 0.0
  %892 = vmatprep.subr.mxu0 0.0
  %893 = vmatpush1.msra.mxu0 0.0
  %894 = vmatprep.subr.mxu0 0.0
  %895 = vmatpush1.msra.mxu0 0.0
  %896 = vmatprep.subr.mxu0 0.0
  %897 = vmatpush1.msra.mxu0 0.0
  %898 = vmatprep.subr.mxu0 0.0
  %899 = vmatpush1.msra.mxu0 0.0
  %900 = vmatprep.subr.mxu0 0.0
  %901 = vmatpush1.msra.mxu0 0.0
  %902 = vmatprep.mubr.f32.mxu0 0.0
  %903 = vmatmul.mubr.f32.gmra.mrb[0].mxu0 %v836
  %v904 = vpop.f32.mrb[0].mxu0
  %v905 = vadd.f32 0.0, %v904
  %v906 = vpop.f32.mrb[0].mxu0
  %907 = vdwg.mxu0
  %909 = vrot.lane.b32.xlu0 %v832, 64
  %v910 = vpop.permute.xlu0 %909
  %v911 = vsel %vm192, %v910, 0
  %913 = vmatprep.subr.mxu0 0.0
  %914 = vmatpush1.msra.mxu0 %v289
  %915 = vmatprep.subr.mxu0 0.0
  %916 = vmatpush1.msra.mxu0 %v290
  %917 = vmatprep.subr.mxu0 0.0
  %918 = vmatpush1.msra.mxu0 %v291
  %919 = vmatprep.subr.mxu0 0.0
  %920 = vmatpush1.msra.mxu0 %v292
  %921 = vmatprep.subr.mxu0 0.0
  %922 = vmatpush1.msra.mxu0 0.0
  %923 = vmatprep.subr.mxu0 0.0
  %924 = vmatpush1.msra.mxu0 0.0
  %925 = vmatprep.subr.mxu0 0.0
  %926 = vmatpush1.msra.mxu0 0.0
  %927 = vmatprep.subr.mxu0 0.0
  %928 = vmatpush1.msra.mxu0 0.0
  %929 = vmatprep.subr.mxu0 0.0
  %930 = vmatpush1.msra.mxu0 0.0
  %931 = vmatprep.subr.mxu0 0.0
  %932 = vmatpush1.msra.mxu0 0.0
  %933 = vmatprep.subr.mxu0 0.0
  %934 = vmatpush1.msra.mxu0 0.0
  %935 = vmatprep.subr.mxu0 0.0
  %936 = vmatpush1.msra.mxu0 0.0
  %937 = vmatprep.subr.mxu0 0.0
  %938 = vmatpush1.msra.mxu0 0.0
  %939 = vmatprep.subr.mxu0 0.0
  %940 = vmatpush1.msra.mxu0 0.0
  %941 = vmatprep.subr.mxu0 0.0
  %942 = vmatpush1.msra.mxu0 0.0
  %943 = vmatprep.subr.mxu0 0.0
  %944 = vmatpush1.msra.mxu0 0.0
  %945 = vmatprep.subr.mxu0 0.0
  %946 = vmatpush1.msra.mxu0 0.0
  %947 = vmatprep.subr.mxu0 0.0
  %948 = vmatpush1.msra.mxu0 0.0
  %949 = vmatprep.subr.mxu0 0.0
  %950 = vmatpush1.msra.mxu0 0.0
  %951 = vmatprep.subr.mxu0 0.0
  %952 = vmatpush1.msra.mxu0 0.0
  %953 = vmatprep.subr.mxu0 0.0
  %954 = vmatpush1.msra.mxu0 0.0
  %955 = vmatprep.subr.mxu0 0.0
  %956 = vmatpush1.msra.mxu0 0.0
  %957 = vmatprep.subr.mxu0 0.0
  %958 = vmatpush1.msra.mxu0 0.0
  %959 = vmatprep.subr.mxu0 0.0
  %960 = vmatpush1.msra.mxu0 0.0
  %961 = vmatprep.subr.mxu0 0.0
  %962 = vmatpush1.msra.mxu0 0.0
  %963 = vmatprep.subr.mxu0 0.0
  %964 = vmatpush1.msra.mxu0 0.0
  %965 = vmatprep.subr.mxu0 0.0
  %966 = vmatpush1.msra.mxu0 0.0
  %967 = vmatprep.subr.mxu0 0.0
  %968 = vmatpush1.msra.mxu0 0.0
  %969 = vmatprep.subr.mxu0 0.0
  %970 = vmatpush1.msra.mxu0 0.0
  %971 = vmatprep.subr.mxu0 0.0
  %972 = vmatpush1.msra.mxu0 0.0
  %973 = vmatprep.subr.mxu0 0.0
  %974 = vmatpush1.msra.mxu0 0.0
  %975 = vmatprep.subr.mxu0 0.0
  %976 = vmatpush1.msra.mxu0 0.0
  %977 = vmatprep.mubr.f32.mxu0 0.0
  %978 = vmatmul.mubr.f32.gmra.mrb[0].mxu0 %v911
  %v979 = vpop.f32.mrb[0].mxu0
  %v980 = vadd.f32 %v905, %v979
  %v981 = vpop.f32.mrb[0].mxu0
  %982 = vdwg.mxu0
  %v983 = vadd.f32 %v980, %v447
  %v984 = vmul.f32 %v983, 0.5
  %v985 = vtanh.pop %v984
  %v986 = vmul.f32 %v985, 0.5
  %v987 = vadd.f32 %v986, 0.5
  %v988 = vtanh.pop %v983
  %v989 = vmul.f32 %v987, %v732
  %991 = vrot.lane.b32.xlu0 %v988, 32
  %v992 = vpop.permute.xlu0 %991
  %v994 = vmul.f32 %v987, %v992
  %996 = vrot.lane.b32.xlu0 %v994, 32
  %v997 = vpop.permute.xlu0 %996
  %v999 = vadd.f32 %v989, %v997
  %v1000 = vtanh.pop %v999
  %1002 = vrot.lane.b32.xlu0 %v1000, 32
  %v1003 = vpop.permute.xlu0 %1002
  %v1005 = vmul.f32 %v987, %v1003
  %v1006 = vld [vmem:[#allocation2 + $0x18] sm:$0xff]
  %1007 = vmatprep.subr.mxu0 0.0
  %1008 = vmatpush1.msra.mxu0 %v188
  %1009 = vmatprep.subr.mxu0 0.0
  %1010 = vmatpush1.msra.mxu0 %v189
  %1011 = vmatprep.subr.mxu0 0.0
  %1012 = vmatpush1.msra.mxu0 %v190
  %1013 = vmatprep.subr.mxu0 0.0
  %1014 = vmatpush1.msra.mxu0 %v191
  %1015 = vmatprep.subr.mxu0 0.0
  %1016 = vmatpush1.msra.mxu0 0.0
  %1017 = vmatprep.subr.mxu0 0.0
  %1018 = vmatpush1.msra.mxu0 0.0
  %1019 = vmatprep.subr.mxu0 0.0
  %1020 = vmatpush1.msra.mxu0 0.0
  %1021 = vmatprep.subr.mxu0 0.0
  %1022 = vmatpush1.msra.mxu0 0.0
  %1023 = vmatprep.subr.mxu0 0.0
  %1024 = vmatpush1.msra.mxu0 0.0
  %1025 = vmatprep.subr.mxu0 0.0
  %1026 = vmatpush1.msra.mxu0 0.0
  %1027 = vmatprep.subr.mxu0 0.0
  %1028 = vmatpush1.msra.mxu0 0.0
  %1029 = vmatprep.subr.mxu0 0.0
  %1030 = vmatpush1.msra.mxu0 0.0
  %1031 = vmatprep.subr.mxu0 0.0
  %1032 = vmatpush1.msra.mxu0 0.0
  %1033 = vmatprep.subr.mxu0 0.0
  %1034 = vmatpush1.msra.mxu0 0.0
  %1035 = vmatprep.subr.mxu0 0.0
  %1036 = vmatpush1.msra.mxu0 0.0
  %1037 = vmatprep.subr.mxu0 0.0
  %1038 = vmatpush1.msra.mxu0 0.0
  %1039 = vmatprep.subr.mxu0 0.0
  %1040 = vmatpush1.msra.mxu0 0.0
  %1041 = vmatprep.subr.mxu0 0.0
  %1042 = vmatpush1.msra.mxu0 0.0
  %1043 = vmatprep.subr.mxu0 0.0
  %1044 = vmatpush1.msra.mxu0 0.0
  %1045 = vmatprep.subr.mxu0 0.0
  %1046 = vmatpush1.msra.mxu0 0.0
  %1047 = vmatprep.subr.mxu0 0.0
  %1048 = vmatpush1.msra.mxu0 0.0
  %1049 = vmatprep.subr.mxu0 0.0
  %1050 = vmatpush1.msra.mxu0 0.0
  %1051 = vmatprep.subr.mxu0 0.0
  %1052 = vmatpush1.msra.mxu0 0.0
  %1053 = vmatprep.subr.mxu0 0.0
  %1054 = vmatpush1.msra.mxu0 0.0
  %1055 = vmatprep.subr.mxu0 0.0
  %1056 = vmatpush1.msra.mxu0 0.0
  %1057 = vmatprep.subr.mxu0 0.0
  %1058 = vmatpush1.msra.mxu0 0.0
  %1059 = vmatprep.subr.mxu0 0.0
  %1060 = vmatpush1.msra.mxu0 0.0
  %1061 = vmatprep.subr.mxu0 0.0
  %1062 = vmatpush1.msra.mxu0 0.0
  %1063 = vmatprep.subr.mxu0 0.0
  %1064 = vmatpush1.msra.mxu0 0.0
  %1065 = vmatprep.subr.mxu0 0.0
  %1066 = vmatpush1.msra.mxu0 0.0
  %1067 = vmatprep.subr.mxu0 0.0
  %1068 = vmatpush1.msra.mxu0 0.0
  %1069 = vmatprep.subr.mxu0 0.0
  %1070 = vmatpush1.msra.mxu0 0.0
  %1071 = vmatprep.mubr.f32.mxu0 0.0
  %1072 = vmatmul.mubr.f32.gmra.mrb[0].mxu0 %v911
  %v1073 = vpop.f32.mrb[0].mxu0
  %v1074 = vadd.f32 0.0, %v1073
  %v1075 = vpop.f32.mrb[0].mxu0
  %1076 = vdwg.mxu0
  %v1077 = vadd.f32 %v1006, %v1074
  %v1078 = vmul.f32 %v1077, 0.5
  %v1079 = vtanh.pop %v1078
  %v1080 = vmul.f32 %v1079, 0.5
  %v1081 = vadd.f32 %v1080, 0.5
  %v1082 = vtanh.pop %v1077
  %v1083 = vmul.f32 %v1081, %v826
  %1085 = vrot.lane.b32.xlu0 %v1082, 32
  %v1086 = vpop.permute.xlu0 %1085
  %v1088 = vmul.f32 %v1081, %v1086
  %1090 = vrot.lane.b32.xlu0 %v1088, 32
  %v1091 = vpop.permute.xlu0 %1090
  %v1093 = vadd.f32 %v1083, %v1091
  %v1094 = vtanh.pop %v1093
  %1096 = vrot.lane.b32.xlu0 %v1094, 32
  %v1097 = vpop.permute.xlu0 %1096
  %v1099 = vmul.f32 %v1081, %v1097
  %1101 = vrot.lane.b32.xlu0 %v1005, 64
  %v1102 = vpop.permute.xlu0 %1101
  %v1103 = vsel %vm192, %v1102, 0
  %1105 = vmatprep.subr.mxu0 0.0
  %1106 = vmatpush1.msra.mxu0 %v293
  %1107 = vmatprep.subr.mxu0 0.0
  %1108 = vmatpush1.msra.mxu0 %v294
  %1109 = vmatprep.subr.mxu0 0.0
  %1110 = vmatpush1.msra.mxu0 %v295
  %1111 = vmatprep.subr.mxu0 0.0
  %1112 = vmatpush1.msra.mxu0 %v296
  %1113 = vmatprep.subr.mxu0 0.0
  %1114 = vmatpush1.msra.mxu0 0.0
  %1115 = vmatprep.subr.mxu0 0.0
  %1116 = vmatpush1.msra.mxu0 0.0
  %1117 = vmatprep.subr.mxu0 0.0
  %1118 = vmatpush1.msra.mxu0 0.0
  %1119 = vmatprep.subr.mxu0 0.0
  %1120 = vmatpush1.msra.mxu0 0.0
  %1121 = vmatprep.subr.mxu0 0.0
  %1122 = vmatpush1.msra.mxu0 0.0
  %1123 = vmatprep.subr.mxu0 0.0
  %1124 = vmatpush1.msra.mxu0 0.0
  %1125 = vmatprep.subr.mxu0 0.0
  %1126 = vmatpush1.msra.mxu0 0.0
  %1127 = vmatprep.subr.mxu0 0.0
  %1128 = vmatpush1.msra.mxu0 0.0
  %1129 = vmatprep.subr.mxu0 0.0
  %1130 = vmatpush1.msra.mxu0 0.0
  %1131 = vmatprep.subr.mxu0 0.0
  %1132 = vmatpush1.msra.mxu0 0.0
  %1133 = vmatprep.subr.mxu0 0.0
  %1134 = vmatpush1.msra.mxu0 0.0
  %1135 = vmatprep.subr.mxu0 0.0
  %1136 = vmatpush1.msra.mxu0 0.0
  %1137 = vmatprep.subr.mxu0 0.0
  %1138 = vmatpush1.msra.mxu0 0.0
  %1139 = vmatprep.subr.mxu0 0.0
  %1140 = vmatpush1.msra.mxu0 0.0
  %1141 = vmatprep.subr.mxu0 0.0
  %1142 = vmatpush1.msra.mxu0 0.0
  %1143 = vmatprep.subr.mxu0 0.0
  %1144 = vmatpush1.msra.mxu0 0.0
  %1145 = vmatprep.subr.mxu0 0.0
  %1146 = vmatpush1.msra.mxu0 0.0
  %1147 = vmatprep.subr.mxu0 0.0
  %1148 = vmatpush1.msra.mxu0 0.0
  %1149 = vmatprep.subr.mxu0 0.0
  %1150 = vmatpush1.msra.mxu0 0.0
  %1151 = vmatprep.subr.mxu0 0.0
  %1152 = vmatpush1.msra.mxu0 0.0
  %1153 = vmatprep.subr.mxu0 0.0
  %1154 = vmatpush1.msra.mxu0 0.0
  %1155 = vmatprep.subr.mxu0 0.0
  %1156 = vmatpush1.msra.mxu0 0.0
  %1157 = vmatprep.subr.mxu0 0.0
  %1158 = vmatpush1.msra.mxu0 0.0
  %1159 = vmatprep.subr.mxu0 0.0
  %1160 = vmatpush1.msra.mxu0 0.0
  %1161 = vmatprep.subr.mxu0 0.0
  %1162 = vmatpush1.msra.mxu0 0.0
  %1163 = vmatprep.subr.mxu0 0.0
  %1164 = vmatpush1.msra.mxu0 0.0
  %1165 = vmatprep.subr.mxu0 0.0
  %1166 = vmatpush1.msra.mxu0 0.0
  %1167 = vmatprep.subr.mxu0 0.0
  %1168 = vmatpush1.msra.mxu0 0.0
  %1169 = vmatprep.mubr.f32.mxu0 0.0
  %1170 = vmatmul.mubr.f32.gmra.mrb[0].mxu0 %v1103
  %v1171 = vpop.f32.mrb[0].mxu0
  %v1172 = vadd.f32 0.0, %v1171
  %v1173 = vpop.f32.mrb[0].mxu0
  %1174 = vdwg.mxu0
  %1176 = vrot.lane.b32.xlu0 %v1099, 64
  %v1177 = vpop.permute.xlu0 %1176
  %v1178 = vsel %vm192, %v1177, 0
  %1180 = vmatprep.subr.mxu0 0.0
  %1181 = vmatpush1.msra.mxu0 %v289
  %1182 = vmatprep.subr.mxu0 0.0
  %1183 = vmatpush1.msra.mxu0 %v290
  %1184 = vmatprep.subr.mxu0 0.0
  %1185 = vmatpush1.msra.mxu0 %v291
  %1186 = vmatprep.subr.mxu0 0.0
  %1187 = vmatpush1.msra.mxu0 %v292
  %1188 = vmatprep.subr.mxu0 0.0
  %1189 = vmatpush1.msra.mxu0 0.0
  %1190 = vmatprep.subr.mxu0 0.0
  %1191 = vmatpush1.msra.mxu0 0.0
  %1192 = vmatprep.subr.mxu0 0.0
  %1193 = vmatpush1.msra.mxu0 0.0
  %1194 = vmatprep.subr.mxu0 0.0
  %1195 = vmatpush1.msra.mxu0 0.0
  %1196 = vmatprep.subr.mxu0 0.0
  %1197 = vmatpush1.msra.mxu0 0.0
  %1198 = vmatprep.subr.mxu0 0.0
  %1199 = vmatpush1.msra.mxu0 0.0
  %1200 = vmatprep.subr.mxu0 0.0
  %1201 = vmatpush1.msra.mxu0 0.0
  %1202 = vmatprep.subr.mxu0 0.0
  %1203 = vmatpush1.msra.mxu0 0.0
  %1204 = vmatprep.subr.mxu0 0.0
  %1205 = vmatpush1.msra.mxu0 0.0
  %1206 = vmatprep.subr.mxu0 0.0
  %1207 = vmatpush1.msra.mxu0 0.0
  %1208 = vmatprep.subr.mxu0 0.0
  %1209 = vmatpush1.msra.mxu0 0.0
  %1210 = vmatprep.subr.mxu0 0.0
  %1211 = vmatpush1.msra.mxu0 0.0
  %1212 = vmatprep.subr.mxu0 0.0
  %1213 = vmatpush1.msra.mxu0 0.0
  %1214 = vmatprep.subr.mxu0 0.0
  %1215 = vmatpush1.msra.mxu0 0.0
  %1216 = vmatprep.subr.mxu0 0.0
  %1217 = vmatpush1.msra.mxu0 0.0
  %1218 = vmatprep.subr.mxu0 0.0
  %1219 = vmatpush1.msra.mxu0 0.0
  %1220 = vmatprep.subr.mxu0 0.0
  %1221 = vmatpush1.msra.mxu0 0.0
  %1222 = vmatprep.subr.mxu0 0.0
  %1223 = vmatpush1.msra.mxu0 0.0
  %1224 = vmatprep.subr.mxu0 0.0
  %1225 = vmatpush1.msra.mxu0 0.0
  %1226 = vmatprep.subr.mxu0 0.0
  %1227 = vmatpush1.msra.mxu0 0.0
  %1228 = vmatprep.subr.mxu0 0.0
  %1229 = vmatpush1.msra.mxu0 0.0
  %1230 = vmatprep.subr.mxu0 0.0
  %1231 = vmatpush1.msra.mxu0 0.0
  %1232 = vmatprep.subr.mxu0 0.0
  %1233 = vmatpush1.msra.mxu0 0.0
  %1234 = vmatprep.subr.mxu0 0.0
  %1235 = vmatpush1.msra.mxu0 0.0
  %1236 = vmatprep.subr.mxu0 0.0
  %1237 = vmatpush1.msra.mxu0 0.0
  %1238 = vmatprep.subr.mxu0 0.0
  %1239 = vmatpush1.msra.mxu0 0.0
  %1240 = vmatprep.subr.mxu0 0.0
  %1241 = vmatpush1.msra.mxu0 0.0
  %1242 = vmatprep.subr.mxu0 0.0
  %1243 = vmatpush1.msra.mxu0 0.0
  %1244 = vmatprep.mubr.f32.mxu0 0.0
  %1245 = vmatmul.mubr.f32.gmra.mrb[0].mxu0 %v1178
  %v1246 = vpop.f32.mrb[0].mxu0
  %v1247 = vadd.f32 %v1172, %v1246
  %v1248 = vpop.f32.mrb[0].mxu0
  %1249 = vdwg.mxu0
  %v1250 = vadd.f32 %v1247, %v447
  %v1251 = vmul.f32 %v1250, 0.5
  %v1252 = vtanh.pop %v1251
  %v1253 = vmul.f32 %v1252, 0.5
  %v1254 = vadd.f32 %v1253, 0.5
  %v1255 = vtanh.pop %v1250
  %v1256 = vmul.f32 %v1254, %v999
  %1258 = vrot.lane.b32.xlu0 %v1255, 32
  %v1259 = vpop.permute.xlu0 %1258
  %v1261 = vmul.f32 %v1254, %v1259
  %1263 = vrot.lane.b32.xlu0 %v1261, 32
  %v1264 = vpop.permute.xlu0 %1263
  %v1266 = vadd.f32 %v1256, %v1264
  %v1267 = vtanh.pop %v1266
  %1269 = vrot.lane.b32.xlu0 %v1267, 32
  %v1270 = vpop.permute.xlu0 %1269
  %v1272 = vmul.f32 %v1254, %v1270
  %v1273 = vld [vmem:[#allocation2 + $0x20] sm:$0xff]
  %1274 = vmatprep.subr.mxu0 0.0
  %1275 = vmatpush1.msra.mxu0 %v188
  %1276 = vmatprep.subr.mxu0 0.0
  %1277 = vmatpush1.msra.mxu0 %v189
  %1278 = vmatprep.subr.mxu0 0.0
  %1279 = vmatpush1.msra.mxu0 %v190
  %1280 = vmatprep.subr.mxu0 0.0
  %1281 = vmatpush1.msra.mxu0 %v191
  %1282 = vmatprep.subr.mxu0 0.0
  %1283 = vmatpush1.msra.mxu0 0.0
  %1284 = vmatprep.subr.mxu0 0.0
  %1285 = vmatpush1.msra.mxu0 0.0
  %1286 = vmatprep.subr.mxu0 0.0
  %1287 = vmatpush1.msra.mxu0 0.0
  %1288 = vmatprep.subr.mxu0 0.0
  %1289 = vmatpush1.msra.mxu0 0.0
  %1290 = vmatprep.subr.mxu0 0.0
  %1291 = vmatpush1.msra.mxu0 0.0
  %1292 = vmatprep.subr.mxu0 0.0
  %1293 = vmatpush1.msra.mxu0 0.0
  %1294 = vmatprep.subr.mxu0 0.0
  %1295 = vmatpush1.msra.mxu0 0.0
  %1296 = vmatprep.subr.mxu0 0.0
  %1297 = vmatpush1.msra.mxu0 0.0
  %1298 = vmatprep.subr.mxu0 0.0
  %1299 = vmatpush1.msra.mxu0 0.0
  %1300 = vmatprep.subr.mxu0 0.0
  %1301 = vmatpush1.msra.mxu0 0.0
  %1302 = vmatprep.subr.mxu0 0.0
  %1303 = vmatpush1.msra.mxu0 0.0
  %1304 = vmatprep.subr.mxu0 0.0
  %1305 = vmatpush1.msra.mxu0 0.0
  %1306 = vmatprep.subr.mxu0 0.0
  %1307 = vmatpush1.msra.mxu0 0.0
  %1308 = vmatprep.subr.mxu0 0.0
  %1309 = vmatpush1.msra.mxu0 0.0
  %1310 = vmatprep.subr.mxu0 0.0
  %1311 = vmatpush1.msra.mxu0 0.0
  %1312 = vmatprep.subr.mxu0 0.0
  %1313 = vmatpush1.msra.mxu0 0.0
  %1314 = vmatprep.subr.mxu0 0.0
  %1315 = vmatpush1.msra.mxu0 0.0
  %1316 = vmatprep.subr.mxu0 0.0
  %1317 = vmatpush1.msra.mxu0 0.0
  %1318 = vmatprep.subr.mxu0 0.0
  %1319 = vmatpush1.msra.mxu0 0.0
  %1320 = vmatprep.subr.mxu0 0.0
  %1321 = vmatpush1.msra.mxu0 0.0
  %1322 = vmatprep.subr.mxu0 0.0
  %1323 = vmatpush1.msra.mxu0 0.0
  %1324 = vmatprep.subr.mxu0 0.0
  %1325 = vmatpush1.msra.mxu0 0.0
  %1326 = vmatprep.subr.mxu0 0.0
  %1327 = vmatpush1.msra.mxu0 0.0
  %1328 = vmatprep.subr.mxu0 0.0
  %1329 = vmatpush1.msra.mxu0 0.0
  %1330 = vmatprep.subr.mxu0 0.0
  %1331 = vmatpush1.msra.mxu0 0.0
  %1332 = vmatprep.subr.mxu0 0.0
  %1333 = vmatpush1.msra.mxu0 0.0
  %1334 = vmatprep.subr.mxu0 0.0
  %1335 = vmatpush1.msra.mxu0 0.0
  %1336 = vmatprep.subr.mxu0 0.0
  %1337 = vmatpush1.msra.mxu0 0.0
  %1338 = vmatprep.mubr.f32.mxu0 0.0
  %1339 = vmatmul.mubr.f32.gmra.mrb[0].mxu0 %v1178
  %v1340 = vpop.f32.mrb[0].mxu0
  %v1341 = vadd.f32 0.0, %v1340
  %v1342 = vpop.f32.mrb[0].mxu0
  %1343 = vdwg.mxu0
  %v1344 = vadd.f32 %v1273, %v1341
  %v1345 = vmul.f32 %v1344, 0.5
  %v1346 = vtanh.pop %v1345
  %v1347 = vmul.f32 %v1346, 0.5
  %v1348 = vadd.f32 %v1347, 0.5
  %v1349 = vtanh.pop %v1344
  %v1350 = vmul.f32 %v1348, %v1093
  %1352 = vrot.lane.b32.xlu0 %v1349, 32
  %v1353 = vpop.permute.xlu0 %1352
  %v1355 = vmul.f32 %v1348, %v1353
  %1357 = vrot.lane.b32.xlu0 %v1355, 32
  %v1358 = vpop.permute.xlu0 %1357
  %v1360 = vadd.f32 %v1350, %v1358
  %v1361 = vtanh.pop %v1360
  %1363 = vrot.lane.b32.xlu0 %v1361, 32
  %v1364 = vpop.permute.xlu0 %1363
  %v1366 = vmul.f32 %v1348, %v1364
  %1368 = vrot.lane.b32.xlu0 %v1272, 64
  %v1369 = vpop.permute.xlu0 %1368
  %v1370 = vsel %vm192, %v1369, 0
  %1372 = vmatprep.subr.mxu0 0.0
  %1373 = vmatpush1.msra.mxu0 %v293
  %1374 = vmatprep.subr.mxu0 0.0
  %1375 = vmatpush1.msra.mxu0 %v294
  %1376 = vmatprep.subr.mxu0 0.0
  %1377 = vmatpush1.msra.mxu0 %v295
  %1378 = vmatprep.subr.mxu0 0.0
  %1379 = vmatpush1.msra.mxu0 %v296
  %1380 = vmatprep.subr.mxu0 0.0
  %1381 = vmatpush1.msra.mxu0 0.0
  %1382 = vmatprep.subr.mxu0 0.0
  %1383 = vmatpush1.msra.mxu0 0.0
  %1384 = vmatprep.subr.mxu0 0.0
  %1385 = vmatpush1.msra.mxu0 0.0
  %1386 = vmatprep.subr.mxu0 0.0
  %1387 = vmatpush1.msra.mxu0 0.0
  %1388 = vmatprep.subr.mxu0 0.0
  %1389 = vmatpush1.msra.mxu0 0.0
  %1390 = vmatprep.subr.mxu0 0.0
  %1391 = vmatpush1.msra.mxu0 0.0
  %1392 = vmatprep.subr.mxu0 0.0
  %1393 = vmatpush1.msra.mxu0 0.0
  %1394 = vmatprep.subr.mxu0 0.0
  %1395 = vmatpush1.msra.mxu0 0.0
  %1396 = vmatprep.subr.mxu0 0.0
  %1397 = vmatpush1.msra.mxu0 0.0
  %1398 = vmatprep.subr.mxu0 0.0
  %1399 = vmatpush1.msra.mxu0 0.0
  %1400 = vmatprep.subr.mxu0 0.0
  %1401 = vmatpush1.msra.mxu0 0.0
  %1402 = vmatprep.subr.mxu0 0.0
  %1403 = vmatpush1.msra.mxu0 0.0
  %1404 = vmatprep.subr.mxu0 0.0
  %1405 = vmatpush1.msra.mxu0 0.0
  %1406 = vmatprep.subr.mxu0 0.0
  %1407 = vmatpush1.msra.mxu0 0.0
  %1408 = vmatprep.subr.mxu0 0.0
  %1409 = vmatpush1.msra.mxu0 0.0
  %1410 = vmatprep.subr.mxu0 0.0
  %1411 = vmatpush1.msra.mxu0 0.0
  %1412 = vmatprep.subr.mxu0 0.0
  %1413 = vmatpush1.msra.mxu0 0.0
  %1414 = vmatprep.subr.mxu0 0.0
  %1415 = vmatpush1.msra.mxu0 0.0
  %1416 = vmatprep.subr.mxu0 0.0
  %1417 = vmatpush1.msra.mxu0 0.0
  %1418 = vmatprep.subr.mxu0 0.0
  %1419 = vmatpush1.msra.mxu0 0.0
  %1420 = vmatprep.subr.mxu0 0.0
  %1421 = vmatpush1.msra.mxu0 0.0
  %1422 = vmatprep.subr.mxu0 0.0
  %1423 = vmatpush1.msra.mxu0 0.0
  %1424 = vmatprep.subr.mxu0 0.0
  %1425 = vmatpush1.msra.mxu0 0.0
  %1426 = vmatprep.subr.mxu0 0.0
  %1427 = vmatpush1.msra.mxu0 0.0
  %1428 = vmatprep.subr.mxu0 0.0
  %1429 = vmatpush1.msra.mxu0 0.0
  %1430 = vmatprep.subr.mxu0 0.0
  %1431 = vmatpush1.msra.mxu0 0.0
  %1432 = vmatprep.subr.mxu0 0.0
  %1433 = vmatpush1.msra.mxu0 0.0
  %1434 = vmatprep.subr.mxu0 0.0
  %1435 = vmatpush1.msra.mxu0 0.0
  %1436 = vmatprep.mubr.f32.mxu0 0.0
  %1437 = vmatmul.mubr.f32.gmra.mrb[0].mxu0 %v1370
  %v1438 = vpop.f32.mrb[0].mxu0
  %v1439 = vadd.f32 0.0, %v1438
  %v1440 = vpop.f32.mrb[0].mxu0
  %1441 = vdwg.mxu0
  %1443 = vrot.lane.b32.xlu0 %v1366, 64
  %v1444 = vpop.permute.xlu0 %1443
  %v1445 = vsel %vm192, %v1444, 0
  %1447 = vmatprep.subr.mxu0 0.0
  %1448 = vmatpush1.msra.mxu0 %v289
  %1449 = vmatprep.subr.mxu0 0.0
  %1450 = vmatpush1.msra.mxu0 %v290
  %1451 = vmatprep.subr.mxu0 0.0
  %1452 = vmatpush1.msra.mxu0 %v291
  %1453 = vmatprep.subr.mxu0 0.0
  %1454 = vmatpush1.msra.mxu0 %v292
  %1455 = vmatprep.subr.mxu0 0.0
  %1456 = vmatpush1.msra.mxu0 0.0
  %1457 = vmatprep.subr.mxu0 0.0
  %1458 = vmatpush1.msra.mxu0 0.0
  %1459 = vmatprep.subr.mxu0 0.0
  %1460 = vmatpush1.msra.mxu0 0.0
  %1461 = vmatprep.subr.mxu0 0.0
  %1462 = vmatpush1.msra.mxu0 0.0
  %1463 = vmatprep.subr.mxu0 0.0
  %1464 = vmatpush1.msra.mxu0 0.0
  %1465 = vmatprep.subr.mxu0 0.0
  %1466 = vmatpush1.msra.mxu0 0.0
  %1467 = vmatprep.subr.mxu0 0.0
  %1468 = vmatpush1.msra.mxu0 0.0
  %1469 = vmatprep.subr.mxu0 0.0
  %1470 = vmatpush1.msra.mxu0 0.0
  %1471 = vmatprep.subr.mxu0 0.0
  %1472 = vmatpush1.msra.mxu0 0.0
  %1473 = vmatprep.subr.mxu0 0.0
  %1474 = vmatpush1.msra.mxu0 0.0
  %1475 = vmatprep.subr.mxu0 0.0
  %1476 = vmatpush1.msra.mxu0 0.0
  %1477 = vmatprep.subr.mxu0 0.0
  %1478 = vmatpush1.msra.mxu0 0.0
  %1479 = vmatprep.subr.mxu0 0.0
  %1480 = vmatpush1.msra.mxu0 0.0
  %1481 = vmatprep.subr.mxu0 0.0
  %1482 = vmatpush1.msra.mxu0 0.0
  %1483 = vmatprep.subr.mxu0 0.0
  %1484 = vmatpush1.msra.mxu0 0.0
  %1485 = vmatprep.subr.mxu0 0.0
  %1486 = vmatpush1.msra.mxu0 0.0
  %1487 = vmatprep.subr.mxu0 0.0
  %1488 = vmatpush1.msra.mxu0 0.0
  %1489 = vmatprep.subr.mxu0 0.0
  %1490 = vmatpush1.msra.mxu0 0.0
  %1491 = vmatprep.subr.mxu0 0.0
  %1492 = vmatpush1.msra.mxu0 0.0
  %1493 = vmatprep.subr.mxu0 0.0
  %1494 = vmatpush1.msra.mxu0 0.0
  %1495 = vmatprep.subr.mxu0 0.0
  %1496 = vmatpush1.msra.mxu0 0.0
  %1497 = vmatprep.subr.mxu0 0.0
  %1498 = vmatpush1.msra.mxu0 0.0
  %1499 = vmatprep.subr.mxu0 0.0
  %1500 = vmatpush1.msra.mxu0 0.0
  %1501 = vmatprep.subr.mxu0 0.0
  %1502 = vmatpush1.msra.mxu0 0.0
  %1503 = vmatprep.subr.mxu0 0.0
  %1504 = vmatpush1.msra.mxu0 0.0
  %1505 = vmatprep.subr.mxu0 0.0
  %1506 = vmatpush1.msra.mxu0 0.0
  %1507 = vmatprep.subr.mxu0 0.0
  %1508 = vmatpush1.msra.mxu0 0.0
  %1509 = vmatprep.subr.mxu0 0.0
  %1510 = vmatpush1.msra.mxu0 0.0
  %1511 = vmatprep.mubr.f32.mxu0 0.0
  %1512 = vmatmul.mubr.f32.gmra.mrb[0].mxu0 %v1445
  %v1513 = vpop.f32.mrb[0].mxu0
  %v1514 = vadd.f32 %v1439, %v1513
  %v1515 = vpop.f32.mrb[0].mxu0
  %1516 = vdwg.mxu0
  %v1517 = vadd.f32 %v1514, %v447
  %v1518 = vmul.f32 %v1517, 0.5
  %v1519 = vtanh.pop %v1518
  %v1520 = vmul.f32 %v1519, 0.5
  %v1521 = vadd.f32 %v1520, 0.5
  %v1522 = vtanh.pop %v1517
  %v1523 = vmul.f32 %v1521, %v1266
  %1525 = vrot.lane.b32.xlu0 %v1522, 32
  %v1526 = vpop.permute.xlu0 %1525
  %v1528 = vmul.f32 %v1521, %v1526
  %1530 = vrot.lane.b32.xlu0 %v1528, 32
  %v1531 = vpop.permute.xlu0 %1530
  %v1533 = vadd.f32 %v1523, %v1531
  %v1534 = vtanh.pop %v1533
  %1536 = vrot.lane.b32.xlu0 %v1534, 32
  %v1537 = vpop.permute.xlu0 %1536
  %v1539 = vmul.f32 %v1521, %v1537
  %v1540 = vld [vmem:[#allocation2 + $0x28] sm:$0xff]
  %1541 = vmatprep.subr.mxu0 0.0
  %1542 = vmatpush1.msra.mxu0 %v188
  %1543 = vmatprep.subr.mxu0 0.0
  %1544 = vmatpush1.msra.mxu0 %v189
  %1545 = vmatprep.subr.mxu0 0.0
  %1546 = vmatpush1.msra.mxu0 %v190
  %1547 = vmatprep.subr.mxu0 0.0
  %1548 = vmatpush1.msra.mxu0 %v191
  %1549 = vmatprep.subr.mxu0 0.0
  %1550 = vmatpush1.msra.mxu0 0.0
  %1551 = vmatprep.subr.mxu0 0.0
  %1552 = vmatpush1.msra.mxu0 0.0
  %1553 = vmatprep.subr.mxu0 0.0
  %1554 = vmatpush1.msra.mxu0 0.0
  %1555 = vmatprep.subr.mxu0 0.0
  %1556 = vmatpush1.msra.mxu0 0.0
  %1557 = vmatprep.subr.mxu0 0.0
  %1558 = vmatpush1.msra.mxu0 0.0
  %1559 = vmatprep.subr.mxu0 0.0
  %1560 = vmatpush1.msra.mxu0 0.0
  %1561 = vmatprep.subr.mxu0 0.0
  %1562 = vmatpush1.msra.mxu0 0.0
  %1563 = vmatprep.subr.mxu0 0.0
  %1564 = vmatpush1.msra.mxu0 0.0
  %1565 = vmatprep.subr.mxu0 0.0
  %1566 = vmatpush1.msra.mxu0 0.0
  %1567 = vmatprep.subr.mxu0 0.0
  %1568 = vmatpush1.msra.mxu0 0.0
  %1569 = vmatprep.subr.mxu0 0.0
  %1570 = vmatpush1.msra.mxu0 0.0
  %1571 = vmatprep.subr.mxu0 0.0
  %1572 = vmatpush1.msra.mxu0 0.0
  %1573 = vmatprep.subr.mxu0 0.0
  %1574 = vmatpush1.msra.mxu0 0.0
  %1575 = vmatprep.subr.mxu0 0.0
  %1576 = vmatpush1.msra.mxu0 0.0
  %1577 = vmatprep.subr.mxu0 0.0
  %1578 = vmatpush1.msra.mxu0 0.0
  %1579 = vmatprep.subr.mxu0 0.0
  %1580 = vmatpush1.msra.mxu0 0.0
  %1581 = vmatprep.subr.mxu0 0.0
  %1582 = vmatpush1.msra.mxu0 0.0
  %1583 = vmatprep.subr.mxu0 0.0
  %1584 = vmatpush1.msra.mxu0 0.0
  %1585 = vmatprep.subr.mxu0 0.0
  %1586 = vmatpush1.msra.mxu0 0.0
  %1587 = vmatprep.subr.mxu0 0.0
  %1588 = vmatpush1.msra.mxu0 0.0
  %1589 = vmatprep.subr.mxu0 0.0
  %1590 = vmatpush1.msra.mxu0 0.0
  %1591 = vmatprep.subr.mxu0 0.0
  %1592 = vmatpush1.msra.mxu0 0.0
  %1593 = vmatprep.subr.mxu0 0.0
  %1594 = vmatpush1.msra.mxu0 0.0
  %1595 = vmatprep.subr.mxu0 0.0
  %1596 = vmatpush1.msra.mxu0 0.0
  %1597 = vmatprep.subr.mxu0 0.0
  %1598 = vmatpush1.msra.mxu0 0.0
  %1599 = vmatprep.subr.mxu0 0.0
  %1600 = vmatpush1.msra.mxu0 0.0
  %1601 = vmatprep.subr.mxu0 0.0
  %1602 = vmatpush1.msra.mxu0 0.0
  %1603 = vmatprep.subr.mxu0 0.0
  %1604 = vmatpush1.msra.mxu0 0.0
  %1605 = vmatprep.mubr.f32.mxu0 0.0
  %1606 = vmatmul.mubr.f32.gmra.mrb[0].mxu0 %v1445
  %v1607 = vpop.f32.mrb[0].mxu0
  %v1608 = vadd.f32 0.0, %v1607
  %v1609 = vpop.f32.mrb[0].mxu0
  %1610 = vdwg.mxu0
  %v1611 = vadd.f32 %v1540, %v1608
  %v1612 = vmul.f32 %v1611, 0.5
  %v1613 = vtanh.pop %v1612
  %v1614 = vmul.f32 %v1613, 0.5
  %v1615 = vadd.f32 %v1614, 0.5
  %v1616 = vtanh.pop %v1611
  %v1617 = vmul.f32 %v1615, %v1360
  %1619 = vrot.lane.b32.xlu0 %v1616, 32
  %v1620 = vpop.permute.xlu0 %1619
  %v1622 = vmul.f32 %v1615, %v1620
  %1624 = vrot.lane.b32.xlu0 %v1622, 32
  %v1625 = vpop.permute.xlu0 %1624
  %v1627 = vadd.f32 %v1617, %v1625
  %v1628 = vtanh.pop %v1627
  %1630 = vrot.lane.b32.xlu0 %v1628, 32
  %v1631 = vpop.permute.xlu0 %1630
  %v1633 = vmul.f32 %v1615, %v1631
  %1635 = vrot.lane.b32.xlu0 %v1539, 64
  %v1636 = vpop.permute.xlu0 %1635
  %v1637 = vsel %vm192, %v1636, 0
  %1639 = vmatprep.subr.mxu0 0.0
  %1640 = vmatpush1.msra.mxu0 %v293
  %1641 = vmatprep.subr.mxu0 0.0
  %1642 = vmatpush1.msra.mxu0 %v294
  %1643 = vmatprep.subr.mxu0 0.0
  %1644 = vmatpush1.msra.mxu0 %v295
  %1645 = vmatprep.subr.mxu0 0.0
  %1646 = vmatpush1.msra.mxu0 %v296
  %1647 = vmatprep.subr.mxu0 0.0
  %1648 = vmatpush1.msra.mxu0 0.0
  %1649 = vmatprep.subr.mxu0 0.0
  %1650 = vmatpush1.msra.mxu0 0.0
  %1651 = vmatprep.subr.mxu0 0.0
  %1652 = vmatpush1.msra.mxu0 0.0
  %1653 = vmatprep.subr.mxu0 0.0
  %1654 = vmatpush1.msra.mxu0 0.0
  %1655 = vmatprep.subr.mxu0 0.0
  %1656 = vmatpush1.msra.mxu0 0.0
  %1657 = vmatprep.subr.mxu0 0.0
  %1658 = vmatpush1.msra.mxu0 0.0
  %1659 = vmatprep.subr.mxu0 0.0
  %1660 = vmatpush1.msra.mxu0 0.0
  %1661 = vmatprep.subr.mxu0 0.0
  %1662 = vmatpush1.msra.mxu0 0.0
  %1663 = vmatprep.subr.mxu0 0.0
  %1664 = vmatpush1.msra.mxu0 0.0
  %1665 = vmatprep.subr.mxu0 0.0
  %1666 = vmatpush1.msra.mxu0 0.0
  %1667 = vmatprep.subr.mxu0 0.0
  %1668 = vmatpush1.msra.mxu0 0.0
  %1669 = vmatprep.subr.mxu0 0.0
  %1670 = vmatpush1.msra.mxu0 0.0
  %1671 = vmatprep.subr.mxu0 0.0
  %1672 = vmatpush1.msra.mxu0 0.0
  %1673 = vmatprep.subr.mxu0 0.0
  %1674 = vmatpush1.msra.mxu0 0.0
  %1675 = vmatprep.subr.mxu0 0.0
  %1676 = vmatpush1.msra.mxu0 0.0
  %1677 = vmatprep.subr.mxu0 0.0
  %1678 = vmatpush1.msra.mxu0 0.0
  %1679 = vmatprep.subr.mxu0 0.0
  %1680 = vmatpush1.msra.mxu0 0.0
  %1681 = vmatprep.subr.mxu0 0.0
  %1682 = vmatpush1.msra.mxu0 0.0
  %1683 = vmatprep.subr.mxu0 0.0
  %1684 = vmatpush1.msra.mxu0 0.0
  %1685 = vmatprep.subr.mxu0 0.0
  %1686 = vmatpush1.msra.mxu0 0.0
  %1687 = vmatprep.subr.mxu0 0.0
  %1688 = vmatpush1.msra.mxu0 0.0
  %1689 = vmatprep.subr.mxu0 0.0
  %1690 = vmatpush1.msra.mxu0 0.0
  %1691 = vmatprep.subr.mxu0 0.0
  %1692 = vmatpush1.msra.mxu0 0.0
  %1693 = vmatprep.subr.mxu0 0.0
  %1694 = vmatpush1.msra.mxu0 0.0
  %1695 = vmatprep.subr.mxu0 0.0
  %1696 = vmatpush1.msra.mxu0 0.0
  %1697 = vmatprep.subr.mxu0 0.0
  %1698 = vmatpush1.msra.mxu0 0.0
  %1699 = vmatprep.subr.mxu0 0.0
  %1700 = vmatpush1.msra.mxu0 0.0
  %1701 = vmatprep.subr.mxu0 0.0
  %1702 = vmatpush1.msra.mxu0 0.0
  %1703 = vmatprep.mubr.f32.mxu0 0.0
  %1704 = vmatmul.mubr.f32.gmra.mrb[0].mxu0 %v1637
  %v1705 = vpop.f32.mrb[0].mxu0
  %v1706 = vadd.f32 0.0, %v1705
  %v1707 = vpop.f32.mrb[0].mxu0
  %1708 = vdwg.mxu0
  %1710 = vrot.lane.b32.xlu0 %v1633, 64
  %v1711 = vpop.permute.xlu0 %1710
  %v1712 = vsel %vm192, %v1711, 0
  %1714 = vmatprep.subr.mxu0 0.0
  %1715 = vmatpush1.msra.mxu0 %v289
  %1716 = vmatprep.subr.mxu0 0.0
  %1717 = vmatpush1.msra.mxu0 %v290
  %1718 = vmatprep.subr.mxu0 0.0
  %1719 = vmatpush1.msra.mxu0 %v291
  %1720 = vmatprep.subr.mxu0 0.0
  %1721 = vmatpush1.msra.mxu0 %v292
  %1722 = vmatprep.subr.mxu0 0.0
  %1723 = vmatpush1.msra.mxu0 0.0
  %1724 = vmatprep.subr.mxu0 0.0
  %1725 = vmatpush1.msra.mxu0 0.0
  %1726 = vmatprep.subr.mxu0 0.0
  %1727 = vmatpush1.msra.mxu0 0.0
  %1728 = vmatprep.subr.mxu0 0.0
  %1729 = vmatpush1.msra.mxu0 0.0
  %1730 = vmatprep.subr.mxu0 0.0
  %1731 = vmatpush1.msra.mxu0 0.0
  %1732 = vmatprep.subr.mxu0 0.0
  %1733 = vmatpush1.msra.mxu0 0.0
  %1734 = vmatprep.subr.mxu0 0.0
  %1735 = vmatpush1.msra.mxu0 0.0
  %1736 = vmatprep.subr.mxu0 0.0
  %1737 = vmatpush1.msra.mxu0 0.0
  %1738 = vmatprep.subr.mxu0 0.0
  %1739 = vmatpush1.msra.mxu0 0.0
  %1740 = vmatprep.subr.mxu0 0.0
  %1741 = vmatpush1.msra.mxu0 0.0
  %1742 = vmatprep.subr.mxu0 0.0
  %1743 = vmatpush1.msra.mxu0 0.0
  %1744 = vmatprep.subr.mxu0 0.0
  %1745 = vmatpush1.msra.mxu0 0.0
  %1746 = vmatprep.subr.mxu0 0.0
  %1747 = vmatpush1.msra.mxu0 0.0
  %1748 = vmatprep.subr.mxu0 0.0
  %1749 = vmatpush1.msra.mxu0 0.0
  %1750 = vmatprep.subr.mxu0 0.0
  %1751 = vmatpush1.msra.mxu0 0.0
  %1752 = vmatprep.subr.mxu0 0.0
  %1753 = vmatpush1.msra.mxu0 0.0
  %1754 = vmatprep.subr.mxu0 0.0
  %1755 = vmatpush1.msra.mxu0 0.0
  %1756 = vmatprep.subr.mxu0 0.0
  %1757 = vmatpush1.msra.mxu0 0.0
  %1758 = vmatprep.subr.mxu0 0.0
  %1759 = vmatpush1.msra.mxu0 0.0
  %1760 = vmatprep.subr.mxu0 0.0
  %1761 = vmatpush1.msra.mxu0 0.0
  %1762 = vmatprep.subr.mxu0 0.0
  %1763 = vmatpush1.msra.mxu0 0.0
  %1764 = vmatprep.subr.mxu0 0.0
  %1765 = vmatpush1.msra.mxu0 0.0
  %1766 = vmatprep.subr.mxu0 0.0
  %1767 = vmatpush1.msra.mxu0 0.0
  %1768 = vmatprep.subr.mxu0 0.0
  %1769 = vmatpush1.msra.mxu0 0.0
  %1770 = vmatprep.subr.mxu0 0.0
  %1771 = vmatpush1.msra.mxu0 0.0
  %1772 = vmatprep.subr.mxu0 0.0
  %1773 = vmatpush1.msra.mxu0 0.0
  %1774 = vmatprep.subr.mxu0 0.0
  %1775 = vmatpush1.msra.mxu0 0.0
  %1776 = vmatprep.subr.mxu0 0.0
  %1777 = vmatpush1.msra.mxu0 0.0
  %1778 = vmatprep.mubr.f32.mxu0 0.0
  %1779 = vmatmul.mubr.f32.gmra.mrb[0].mxu0 %v1712
  %v1780 = vpop.f32.mrb[0].mxu0
  %v1781 = vadd.f32 %v1706, %v1780
  %v1782 = vpop.f32.mrb[0].mxu0
  %1783 = vdwg.mxu0
  %v1784 = vadd.f32 %v1781, %v447
  %v1785 = vmul.f32 %v1784, 0.5
  %v1786 = vtanh.pop %v1785
  %v1787 = vmul.f32 %v1786, 0.5
  %v1788 = vadd.f32 %v1787, 0.5
  %v1789 = vtanh.pop %v1784
  %v1790 = vmul.f32 %v1788, %v1533
  %1792 = vrot.lane.b32.xlu0 %v1789, 32
  %v1793 = vpop.permute.xlu0 %1792
  %v1795 = vmul.f32 %v1788, %v1793
  %1797 = vrot.lane.b32.xlu0 %v1795, 32
  %v1798 = vpop.permute.xlu0 %1797
  %v1800 = vadd.f32 %v1790, %v1798
  %v1801 = vtanh.pop %v1800
  %1803 = vrot.lane.b32.xlu0 %v1801, 32
  %v1804 = vpop.permute.xlu0 %1803
  %v1806 = vmul.f32 %v1788, %v1804
  %v1807 = vld [vmem:[#allocation2 + $0x30] sm:$0xff]
  %1808 = vmatprep.subr.mxu0 0.0
  %1809 = vmatpush1.msra.mxu0 %v188
  %1810 = vmatprep.subr.mxu0 0.0
  %1811 = vmatpush1.msra.mxu0 %v189
  %1812 = vmatprep.subr.mxu0 0.0
  %1813 = vmatpush1.msra.mxu0 %v190
  %1814 = vmatprep.subr.mxu0 0.0
  %1815 = vmatpush1.msra.mxu0 %v191
  %1816 = vmatprep.subr.mxu0 0.0
  %1817 = vmatpush1.msra.mxu0 0.0
  %1818 = vmatprep.subr.mxu0 0.0
  %1819 = vmatpush1.msra.mxu0 0.0
  %1820 = vmatprep.subr.mxu0 0.0
  %1821 = vmatpush1.msra.mxu0 0.0
  %1822 = vmatprep.subr.mxu0 0.0
  %1823 = vmatpush1.msra.mxu0 0.0
  %1824 = vmatprep.subr.mxu0 0.0
  %1825 = vmatpush1.msra.mxu0 0.0
  %1826 = vmatprep.subr.mxu0 0.0
  %1827 = vmatpush1.msra.mxu0 0.0
  %1828 = vmatprep.subr.mxu0 0.0
  %1829 = vmatpush1.msra.mxu0 0.0
  %1830 = vmatprep.subr.mxu0 0.0
  %1831 = vmatpush1.msra.mxu0 0.0
  %1832 = vmatprep.subr.mxu0 0.0
  %1833 = vmatpush1.msra.mxu0 0.0
  %1834 = vmatprep.subr.mxu0 0.0
  %1835 = vmatpush1.msra.mxu0 0.0
  %1836 = vmatprep.subr.mxu0 0.0
  %1837 = vmatpush1.msra.mxu0 0.0
  %1838 = vmatprep.subr.mxu0 0.0
  %1839 = vmatpush1.msra.mxu0 0.0
  %1840 = vmatprep.subr.mxu0 0.0
  %1841 = vmatpush1.msra.mxu0 0.0
  %1842 = vmatprep.subr.mxu0 0.0
  %1843 = vmatpush1.msra.mxu0 0.0
  %1844 = vmatprep.subr.mxu0 0.0
  %1845 = vmatpush1.msra.mxu0 0.0
  %1846 = vmatprep.subr.mxu0 0.0
  %1847 = vmatpush1.msra.mxu0 0.0
  %1848 = vmatprep.subr.mxu0 0.0
  %1849 = vmatpush1.msra.mxu0 0.0
  %1850 = vmatprep.subr.mxu0 0.0
  %1851 = vmatpush1.msra.mxu0 0.0
  %1852 = vmatprep.subr.mxu0 0.0
  %1853 = vmatpush1.msra.mxu0 0.0
  %1854 = vmatprep.subr.mxu0 0.0
  %1855 = vmatpush1.msra.mxu0 0.0
  %1856 = vmatprep.subr.mxu0 0.0
  %1857 = vmatpush1.msra.mxu0 0.0
  %1858 = vmatprep.subr.mxu0 0.0
  %1859 = vmatpush1.msra.mxu0 0.0
  %1860 = vmatprep.subr.mxu0 0.0
  %1861 = vmatpush1.msra.mxu0 0.0
  %1862 = vmatprep.subr.mxu0 0.0
  %1863 = vmatpush1.msra.mxu0 0.0
  %1864 = vmatprep.subr.mxu0 0.0
  %1865 = vmatpush1.msra.mxu0 0.0
  %1866 = vmatprep.subr.mxu0 0.0
  %1867 = vmatpush1.msra.mxu0 0.0
  %1868 = vmatprep.subr.mxu0 0.0
  %1869 = vmatpush1.msra.mxu0 0.0
  %1870 = vmatprep.subr.mxu0 0.0
  %1871 = vmatpush1.msra.mxu0 0.0
  %1872 = vmatprep.mubr.f32.mxu0 0.0
  %1873 = vmatmul.mubr.f32.gmra.mrb[0].mxu0 %v1712
  %v1874 = vpop.f32.mrb[0].mxu0
  %v1875 = vadd.f32 0.0, %v1874
  %v1876 = vpop.f32.mrb[0].mxu0
  %1877 = vdwg.mxu0
  %v1878 = vadd.f32 %v1807, %v1875
  %v1879 = vmul.f32 %v1878, 0.5
  %v1880 = vtanh.pop %v1879
  %v1881 = vmul.f32 %v1880, 0.5
  %v1882 = vadd.f32 %v1881, 0.5
  %v1883 = vtanh.pop %v1878
  %v1884 = vmul.f32 %v1882, %v1627
  %1886 = vrot.lane.b32.xlu0 %v1883, 32
  %v1887 = vpop.permute.xlu0 %1886
  %v1889 = vmul.f32 %v1882, %v1887
  %1891 = vrot.lane.b32.xlu0 %v1889, 32
  %v1892 = vpop.permute.xlu0 %1891
  %v1894 = vadd.f32 %v1884, %v1892
  %v1895 = vtanh.pop %v1894
  %1897 = vrot.lane.b32.xlu0 %v1895, 32
  %v1898 = vpop.permute.xlu0 %1897
  %v1900 = vmul.f32 %v1882, %v1898
  %1902 = vrot.lane.b32.xlu0 %v1806, 64
  %v1903 = vpop.permute.xlu0 %1902
  %v1904 = vsel %vm192, %v1903, 0
  %1906 = vmatprep.subr.mxu0 0.0
  %1907 = vmatpush1.msra.mxu0 %v293
  %1908 = vmatprep.subr.mxu0 0.0
  %1909 = vmatpush1.msra.mxu0 %v294
  %1910 = vmatprep.subr.mxu0 0.0
  %1911 = vmatpush1.msra.mxu0 %v295
  %1912 = vmatprep.subr.mxu0 0.0
  %1913 = vmatpush1.msra.mxu0 %v296
  %1914 = vmatprep.subr.mxu0 0.0
  %1915 = vmatpush1.msra.mxu0 0.0
  %1916 = vmatprep.subr.mxu0 0.0
  %1917 = vmatpush1.msra.mxu0 0.0
  %1918 = vmatprep.subr.mxu0 0.0
  %1919 = vmatpush1.msra.mxu0 0.0
  %1920 = vmatprep.subr.mxu0 0.0
  %1921 = vmatpush1.msra.mxu0 0.0
  %1922 = vmatprep.subr.mxu0 0.0
  %1923 = vmatpush1.msra.mxu0 0.0
  %1924 = vmatprep.subr.mxu0 0.0
  %1925 = vmatpush1.msra.mxu0 0.0
  %1926 = vmatprep.subr.mxu0 0.0
  %1927 = vmatpush1.msra.mxu0 0.0
  %1928 = vmatprep.subr.mxu0 0.0
  %1929 = vmatpush1.msra.mxu0 0.0
  %1930 = vmatprep.subr.mxu0 0.0
  %1931 = vmatpush1.msra.mxu0 0.0
  %1932 = vmatprep.subr.mxu0 0.0
  %1933 = vmatpush1.msra.mxu0 0.0
  %1934 = vmatprep.subr.mxu0 0.0
  %1935 = vmatpush1.msra.mxu0 0.0
  %1936 = vmatprep.subr.mxu0 0.0
  %1937 = vmatpush1.msra.mxu0 0.0
  %1938 = vmatprep.subr.mxu0 0.0
  %1939 = vmatpush1.msra.mxu0 0.0
  %1940 = vmatprep.subr.mxu0 0.0
  %1941 = vmatpush1.msra.mxu0 0.0
  %1942 = vmatprep.subr.mxu0 0.0
  %1943 = vmatpush1.msra.mxu0 0.0
  %1944 = vmatprep.subr.mxu0 0.0
  %1945 = vmatpush1.msra.mxu0 0.0
  %1946 = vmatprep.subr.mxu0 0.0
  %1947 = vmatpush1.msra.mxu0 0.0
  %1948 = vmatprep.subr.mxu0 0.0
  %1949 = vmatpush1.msra.mxu0 0.0
  %1950 = vmatprep.subr.mxu0 0.0
  %1951 = vmatpush1.msra.mxu0 0.0
  %1952 = vmatprep.subr.mxu0 0.0
  %1953 = vmatpush1.msra.mxu0 0.0
  %1954 = vmatprep.subr.mxu0 0.0
  %1955 = vmatpush1.msra.mxu0 0.0
  %1956 = vmatprep.subr.mxu0 0.0
  %1957 = vmatpush1.msra.mxu0 0.0
  %1958 = vmatprep.subr.mxu0 0.0
  %1959 = vmatpush1.msra.mxu0 0.0
  %1960 = vmatprep.subr.mxu0 0.0
  %1961 = vmatpush1.msra.mxu0 0.0
  %1962 = vmatprep.subr.mxu0 0.0
  %1963 = vmatpush1.msra.mxu0 0.0
  %1964 = vmatprep.subr.mxu0 0.0
  %1965 = vmatpush1.msra.mxu0 0.0
  %1966 = vmatprep.subr.mxu0 0.0
  %1967 = vmatpush1.msra.mxu0 0.0
  %1968 = vmatprep.subr.mxu0 0.0
  %1969 = vmatpush1.msra.mxu0 0.0
  %1970 = vmatprep.mubr.f32.mxu0 0.0
  %1971 = vmatmul.mubr.f32.gmra.mrb[0].mxu0 %v1904
  %v1972 = vpop.f32.mrb[0].mxu0
  %v1973 = vadd.f32 0.0, %v1972
  %v1974 = vpop.f32.mrb[0].mxu0
  %1975 = vdwg.mxu0
  %1977 = vrot.lane.b32.xlu0 %v1900, 64
  %v1978 = vpop.permute.xlu0 %1977
  %v1979 = vsel %vm192, %v1978, 0
  %1981 = vmatprep.subr.mxu0 0.0
  %1982 = vmatpush1.msra.mxu0 %v289
  %1983 = vmatprep.subr.mxu0 0.0
  %1984 = vmatpush1.msra.mxu0 %v290
  %1985 = vmatprep.subr.mxu0 0.0
  %1986 = vmatpush1.msra.mxu0 %v291
  %1987 = vmatprep.subr.mxu0 0.0
  %1988 = vmatpush1.msra.mxu0 %v292
  %1989 = vmatprep.subr.mxu0 0.0
  %1990 = vmatpush1.msra.mxu0 0.0
  %1991 = vmatprep.subr.mxu0 0.0
  %1992 = vmatpush1.msra.mxu0 0.0
  %1993 = vmatprep.subr.mxu0 0.0
  %1994 = vmatpush1.msra.mxu0 0.0
  %1995 = vmatprep.subr.mxu0 0.0
  %1996 = vmatpush1.msra.mxu0 0.0
  %1997 = vmatprep.subr.mxu0 0.0
  %1998 = vmatpush1.msra.mxu0 0.0
  %1999 = vmatprep.subr.mxu0 0.0
  %2000 = vmatpush1.msra.mxu0 0.0
  %2001 = vmatprep.subr.mxu0 0.0
  %2002 = vmatpush1.msra.mxu0 0.0
  %2003 = vmatprep.subr.mxu0 0.0
  %2004 = vmatpush1.msra.mxu0 0.0
  %2005 = vmatprep.subr.mxu0 0.0
  %2006 = vmatpush1.msra.mxu0 0.0
  %2007 = vmatprep.subr.mxu0 0.0
  %2008 = vmatpush1.msra.mxu0 0.0
  %2009 = vmatprep.subr.mxu0 0.0
  %2010 = vmatpush1.msra.mxu0 0.0
  %2011 = vmatprep.subr.mxu0 0.0
  %2012 = vmatpush1.msra.mxu0 0.0
  %2013 = vmatprep.subr.mxu0 0.0
  %2014 = vmatpush1.msra.mxu0 0.0
  %2015 = vmatprep.subr.mxu0 0.0
  %2016 = vmatpush1.msra.mxu0 0.0
  %2017 = vmatprep.subr.mxu0 0.0
  %2018 = vmatpush1.msra.mxu0 0.0
  %2019 = vmatprep.subr.mxu0 0.0
  %2020 = vmatpush1.msra.mxu0 0.0
  %2021 = vmatprep.subr.mxu0 0.0
  %2022 = vmatpush1.msra.mxu0 0.0
  %2023 = vmatprep.subr.mxu0 0.0
  %2024 = vmatpush1.msra.mxu0 0.0
  %2025 = vmatprep.subr.mxu0 0.0
  %2026 = vmatpush1.msra.mxu0 0.0
  %2027 = vmatprep.subr.mxu0 0.0
  %2028 = vmatpush1.msra.mxu0 0.0
  %2029 = vmatprep.subr.mxu0 0.0
  %2030 = vmatpush1.msra.mxu0 0.0
  %2031 = vmatprep.subr.mxu0 0.0
  %2032 = vmatpush1.msra.mxu0 0.0
  %2033 = vmatprep.subr.mxu0 0.0
  %2034 = vmatpush1.msra.mxu0 0.0
  %2035 = vmatprep.subr.mxu0 0.0
  %2036 = vmatpush1.msra.mxu0 0.0
  %2037 = vmatprep.subr.mxu0 0.0
  %2038 = vmatpush1.msra.mxu0 0.0
  %2039 = vmatprep.subr.mxu0 0.0
  %2040 = vmatpush1.msra.mxu0 0.0
  %2041 = vmatprep.subr.mxu0 0.0
  %2042 = vmatpush1.msra.mxu0 0.0
  %2043 = vmatprep.subr.mxu0 0.0
  %2044 = vmatpush1.msra.mxu0 0.0
  %2045 = vmatprep.mubr.f32.mxu0 0.0
  %2046 = vmatmul.mubr.f32.gmra.mrb[0].mxu0 %v1979
  %v2047 = vpop.f32.mrb[0].mxu0
  %v2048 = vadd.f32 %v1973, %v2047
  %v2049 = vpop.f32.mrb[0].mxu0
  %2050 = vdwg.mxu0
  %v2051 = vadd.f32 %v2048, %v447
  %v2052 = vmul.f32 %v2051, 0.5
  %v2053 = vtanh.pop %v2052
  %v2054 = vmul.f32 %v2053, 0.5
  %v2055 = vadd.f32 %v2054, 0.5
  %v2056 = vtanh.pop %v2051
  %v2057 = vmul.f32 %v2055, %v1800
  %2059 = vrot.lane.b32.xlu0 %v2056, 32
  %v2060 = vpop.permute.xlu0 %2059
  %v2062 = vmul.f32 %v2055, %v2060
  %2064 = vrot.lane.b32.xlu0 %v2062, 32
  %v2065 = vpop.permute.xlu0 %2064
  %v2067 = vadd.f32 %v2057, %v2065
  %v2068 = vtanh.pop %v2067
  %2070 = vrot.lane.b32.xlu0 %v2068, 32
  %v2071 = vpop.permute.xlu0 %2070
  %v2073 = vmul.f32 %v2055, %v2071
  %v2074 = vld [vmem:[#allocation2 + $0x38] sm:$0xff]
  %2075 = vmatprep.subr.mxu0 0.0
  %2076 = vmatpush1.msra.mxu0 %v188
  %2077 = vmatprep.subr.mxu0 0.0
  %2078 = vmatpush1.msra.mxu0 %v189
  %2079 = vmatprep.subr.mxu0 0.0
  %2080 = vmatpush1.msra.mxu0 %v190
  %2081 = vmatprep.subr.mxu0 0.0
  %2082 = vmatpush1.msra.mxu0 %v191
  %2083 = vmatprep.subr.mxu0 0.0
  %2084 = vmatpush1.msra.mxu0 0.0
  %2085 = vmatprep.subr.mxu0 0.0
  %2086 = vmatpush1.msra.mxu0 0.0
  %2087 = vmatprep.subr.mxu0 0.0
  %2088 = vmatpush1.msra.mxu0 0.0
  %2089 = vmatprep.subr.mxu0 0.0
  %2090 = vmatpush1.msra.mxu0 0.0
  %2091 = vmatprep.subr.mxu0 0.0
  %2092 = vmatpush1.msra.mxu0 0.0
  %2093 = vmatprep.subr.mxu0 0.0
  %2094 = vmatpush1.msra.mxu0 0.0
  %2095 = vmatprep.subr.mxu0 0.0
  %2096 = vmatpush1.msra.mxu0 0.0
  %2097 = vmatprep.subr.mxu0 0.0
  %2098 = vmatpush1.msra.mxu0 0.0
  %2099 = vmatprep.subr.mxu0 0.0
  %2100 = vmatpush1.msra.mxu0 0.0
  %2101 = vmatprep.subr.mxu0 0.0
  %2102 = vmatpush1.msra.mxu0 0.0
  %2103 = vmatprep.subr.mxu0 0.0
  %2104 = vmatpush1.msra.mxu0 0.0
  %2105 = vmatprep.subr.mxu0 0.0
  %2106 = vmatpush1.msra.mxu0 0.0
  %2107 = vmatprep.subr.mxu0 0.0
  %2108 = vmatpush1.msra.mxu0 0.0
  %2109 = vmatprep.subr.mxu0 0.0
  %2110 = vmatpush1.msra.mxu0 0.0
  %2111 = vmatprep.subr.mxu0 0.0
  %2112 = vmatpush1.msra.mxu0 0.0
  %2113 = vmatprep.subr.mxu0 0.0
  %2114 = vmatpush1.msra.mxu0 0.0
  %2115 = vmatprep.subr.mxu0 0.0
  %2116 = vmatpush1.msra.mxu0 0.0
  %2117 = vmatprep.subr.mxu0 0.0
  %2118 = vmatpush1.msra.mxu0 0.0
  %2119 = vmatprep.subr.mxu0 0.0
  %2120 = vmatpush1.msra.mxu0 0.0
  %2121 = vmatprep.subr.mxu0 0.0
  %2122 = vmatpush1.msra.mxu0 0.0
  %2123 = vmatprep.subr.mxu0 0.0
  %2124 = vmatpush1.msra.mxu0 0.0
  %2125 = vmatprep.subr.mxu0 0.0
  %2126 = vmatpush1.msra.mxu0 0.0
  %2127 = vmatprep.subr.mxu0 0.0
  %2128 = vmatpush1.msra.mxu0 0.0
  %2129 = vmatprep.subr.mxu0 0.0
  %2130 = vmatpush1.msra.mxu0 0.0
  %2131 = vmatprep.subr.mxu0 0.0
  %2132 = vmatpush1.msra.mxu0 0.0
  %2133 = vmatprep.subr.mxu0 0.0
  %2134 = vmatpush1.msra.mxu0 0.0
  %2135 = vmatprep.subr.mxu0 0.0
  %2136 = vmatpush1.msra.mxu0 0.0
  %2137 = vmatprep.subr.mxu0 0.0
  %2138 = vmatpush1.msra.mxu0 0.0
  %2139 = vmatprep.mubr.f32.mxu0 0.0
  %2140 = vmatmul.mubr.f32.gmra.mrb[0].mxu0 %v1979
  %v2141 = vpop.f32.mrb[0].mxu0
  %v2142 = vadd.f32 0.0, %v2141
  %v2143 = vpop.f32.mrb[0].mxu0
  %2144 = vdwg.mxu0
  %v2145 = vadd.f32 %v2074, %v2142
  %v2146 = vmul.f32 %v2145, 0.5
  %v2147 = vtanh.pop %v2146
  %v2148 = vmul.f32 %v2147, 0.5
  %v2149 = vadd.f32 %v2148, 0.5
  %v2150 = vtanh.pop %v2145
  %v2151 = vmul.f32 %v2149, %v1894
  %2153 = vrot.lane.b32.xlu0 %v2150, 32
  %v2154 = vpop.permute.xlu0 %2153
  %v2156 = vmul.f32 %v2149, %v2154
  %2158 = vrot.lane.b32.xlu0 %v2156, 32
  %v2159 = vpop.permute.xlu0 %2158
  %v2161 = vadd.f32 %v2151, %v2159
  %v2162 = vtanh.pop %v2161
  %2164 = vrot.lane.b32.xlu0 %v2162, 32
  %v2165 = vpop.permute.xlu0 %2164
  %v2167 = vmul.f32 %v2149, %v2165
  %2169 = vrot.lane.b32.xlu0 %v2073, 64
  %v2170 = vpop.permute.xlu0 %2169
  %v2171 = vsel %vm192, %v2170, 0
  %2173 = vmatprep.subr.mxu0 0.0
  %2174 = vmatpush1.msra.mxu0 %v293
  %2175 = vmatprep.subr.mxu0 0.0
  %2176 = vmatpush1.msra.mxu0 %v294
  %2177 = vmatprep.subr.mxu0 0.0
  %2178 = vmatpush1.msra.mxu0 %v295
  %2179 = vmatprep.subr.mxu0 0.0
  %2180 = vmatpush1.msra.mxu0 %v296
  %2181 = vmatprep.subr.mxu0 0.0
  %2182 = vmatpush1.msra.mxu0 0.0
  %2183 = vmatprep.subr.mxu0 0.0
  %2184 = vmatpush1.msra.mxu0 0.0
  %2185 = vmatprep.subr.mxu0 0.0
  %2186 = vmatpush1.msra.mxu0 0.0
  %2187 = vmatprep.subr.mxu0 0.0
  %2188 = vmatpush1.msra.mxu0 0.0
  %2189 = vmatprep.subr.mxu0 0.0
  %2190 = vmatpush1.msra.mxu0 0.0
  %2191 = vmatprep.subr.mxu0 0.0
  %2192 = vmatpush1.msra.mxu0 0.0
  %2193 = vmatprep.subr.mxu0 0.0
  %2194 = vmatpush1.msra.mxu0 0.0
  %2195 = vmatprep.subr.mxu0 0.0
  %2196 = vmatpush1.msra.mxu0 0.0
  %2197 = vmatprep.subr.mxu0 0.0
  %2198 = vmatpush1.msra.mxu0 0.0
  %2199 = vmatprep.subr.mxu0 0.0
  %2200 = vmatpush1.msra.mxu0 0.0
  %2201 = vmatprep.subr.mxu0 0.0
  %2202 = vmatpush1.msra.mxu0 0.0
  %2203 = vmatprep.subr.mxu0 0.0
  %2204 = vmatpush1.msra.mxu0 0.0
  %2205 = vmatprep.subr.mxu0 0.0
  %2206 = vmatpush1.msra.mxu0 0.0
  %2207 = vmatprep.subr.mxu0 0.0
  %2208 = vmatpush1.msra.mxu0 0.0
  %2209 = vmatprep.subr.mxu0 0.0
  %2210 = vmatpush1.msra.mxu0 0.0
  %2211 = vmatprep.subr.mxu0 0.0
  %2212 = vmatpush1.msra.mxu0 0.0
  %2213 = vmatprep.subr.mxu0 0.0
  %2214 = vmatpush1.msra.mxu0 0.0
  %2215 = vmatprep.subr.mxu0 0.0
  %2216 = vmatpush1.msra.mxu0 0.0
  %2217 = vmatprep.subr.mxu0 0.0
  %2218 = vmatpush1.msra.mxu0 0.0
  %2219 = vmatprep.subr.mxu0 0.0
  %2220 = vmatpush1.msra.mxu0 0.0
  %2221 = vmatprep.subr.mxu0 0.0
  %2222 = vmatpush1.msra.mxu0 0.0
  %2223 = vmatprep.subr.mxu0 0.0
  %2224 = vmatpush1.msra.mxu0 0.0
  %2225 = vmatprep.subr.mxu0 0.0
  %2226 = vmatpush1.msra.mxu0 0.0
  %2227 = vmatprep.subr.mxu0 0.0
  %2228 = vmatpush1.msra.mxu0 0.0
  %2229 = vmatprep.subr.mxu0 0.0
  %2230 = vmatpush1.msra.mxu0 0.0
  %2231 = vmatprep.subr.mxu0 0.0
  %2232 = vmatpush1.msra.mxu0 0.0
  %2233 = vmatprep.subr.mxu0 0.0
  %2234 = vmatpush1.msra.mxu0 0.0
  %2235 = vmatprep.subr.mxu0 0.0
  %2236 = vmatpush1.msra.mxu0 0.0
  %2237 = vmatprep.mubr.f32.mxu0 0.0
  %2238 = vmatmul.mubr.f32.gmra.mrb[0].mxu0 %v2171
  %v2239 = vpop.f32.mrb[0].mxu0
  %v2240 = vadd.f32 0.0, %v2239
  %v2241 = vpop.f32.mrb[0].mxu0
  %2242 = vdwg.mxu0
  %2244 = vrot.lane.b32.xlu0 %v2167, 64
  %v2245 = vpop.permute.xlu0 %2244
  %v2246 = vsel %vm192, %v2245, 0
  %2248 = vmatprep.subr.mxu0 0.0
  %2249 = vmatpush1.msra.mxu0 %v289
  %2250 = vmatprep.subr.mxu0 0.0
  %2251 = vmatpush1.msra.mxu0 %v290
  %2252 = vmatprep.subr.mxu0 0.0
  %2253 = vmatpush1.msra.mxu0 %v291
  %2254 = vmatprep.subr.mxu0 0.0
  %2255 = vmatpush1.msra.mxu0 %v292
  %2256 = vmatprep.subr.mxu0 0.0
  %2257 = vmatpush1.msra.mxu0 0.0
  %2258 = vmatprep.subr.mxu0 0.0
  %2259 = vmatpush1.msra.mxu0 0.0
  %2260 = vmatprep.subr.mxu0 0.0
  %2261 = vmatpush1.msra.mxu0 0.0
  %2262 = vmatprep.subr.mxu0 0.0
  %2263 = vmatpush1.msra.mxu0 0.0
  %2264 = vmatprep.subr.mxu0 0.0
  %2265 = vmatpush1.msra.mxu0 0.0
  %2266 = vmatprep.subr.mxu0 0.0
  %2267 = vmatpush1.msra.mxu0 0.0
  %2268 = vmatprep.subr.mxu0 0.0
  %2269 = vmatpush1.msra.mxu0 0.0
  %2270 = vmatprep.subr.mxu0 0.0
  %2271 = vmatpush1.msra.mxu0 0.0
  %2272 = vmatprep.subr.mxu0 0.0
  %2273 = vmatpush1.msra.mxu0 0.0
  %2274 = vmatprep.subr.mxu0 0.0
  %2275 = vmatpush1.msra.mxu0 0.0
  %2276 = vmatprep.subr.mxu0 0.0
  %2277 = vmatpush1.msra.mxu0 0.0
  %2278 = vmatprep.subr.mxu0 0.0
  %2279 = vmatpush1.msra.mxu0 0.0
  %2280 = vmatprep.subr.mxu0 0.0
  %2281 = vmatpush1.msra.mxu0 0.0
  %2282 = vmatprep.subr.mxu0 0.0
  %2283 = vmatpush1.msra.mxu0 0.0
  %2284 = vmatprep.subr.mxu0 0.0
  %2285 = vmatpush1.msra.mxu0 0.0
  %2286 = vmatprep.subr.mxu0 0.0
  %2287 = vmatpush1.msra.mxu0 0.0
  %2288 = vmatprep.subr.mxu0 0.0
  %2289 = vmatpush1.msra.mxu0 0.0
  %2290 = vmatprep.subr.mxu0 0.0
  %2291 = vmatpush1.msra.mxu0 0.0
  %2292 = vmatprep.subr.mxu0 0.0
  %2293 = vmatpush1.msra.mxu0 0.0
  %2294 = vmatprep.subr.mxu0 0.0
  %2295 = vmatpush1.msra.mxu0 0.0
  %2296 = vmatprep.subr.mxu0 0.0
  %2297 = vmatpush1.msra.mxu0 0.0
  %2298 = vmatprep.subr.mxu0 0.0
  %2299 = vmatpush1.msra.mxu0 0.0
  %2300 = vmatprep.subr.mxu0 0.0
  %2301 = vmatpush1.msra.mxu0 0.0
  %2302 = vmatprep.subr.mxu0 0.0
  %2303 = vmatpush1.msra.mxu0 0.0
  %2304 = vmatprep.subr.mxu0 0.0
  %2305 = vmatpush1.msra.mxu0 0.0
  %2306 = vmatprep.subr.mxu0 0.0
  %2307 = vmatpush1.msra.mxu0 0.0
  %2308 = vmatprep.subr.mxu0 0.0
  %2309 = vmatpush1.msra.mxu0 0.0
  %2310 = vmatprep.subr.mxu0 0.0
  %2311 = vmatpush1.msra.mxu0 0.0
  %2312 = vmatprep.mubr.f32.mxu0 0.0
  %2313 = vmatmul.mubr.f32.gmra.mrb[0].mxu0 %v2246
  %v2314 = vpop.f32.mrb[0].mxu0
  %v2315 = vadd.f32 %v2240, %v2314
  %v2316 = vpop.f32.mrb[0].mxu0
  %2317 = vdwg.mxu0
  %v2318 = vadd.f32 %v2315, %v447
  %v2319 = vmul.f32 %v2318, 0.5
  %v2320 = vtanh.pop %v2319
  %v2321 = vmul.f32 %v2320, 0.5
  %v2322 = vadd.f32 %v2321, 0.5
  %v2323 = vtanh.pop %v2318
  %v2324 = vmul.f32 %v2322, %v2067
  %2326 = vrot.lane.b32.xlu0 %v2323, 32
  %v2327 = vpop.permute.xlu0 %2326
  %v2329 = vmul.f32 %v2322, %v2327
  %2331 = vrot.lane.b32.xlu0 %v2329, 32
  %v2332 = vpop.permute.xlu0 %2331
  %v2334 = vadd.f32 %v2324, %v2332
  %v2335 = vtanh.pop %v2334
  %2337 = vrot.lane.b32.xlu0 %v2335, 32
  %v2338 = vpop.permute.xlu0 %2337
  %v2340 = vmul.f32 %v2322, %v2338
  %v2341 = vld [vmem:[%s7] sm:$0xff]
  %v2342 = vld [vmem:[%s7 + $0x8] sm:$0xff]
  %v2343 = vld [vmem:[%s7 + $0x10] sm:$0xff]
  %v2344 = vld [vmem:[%s7 + $0x18] sm:$0xff]
  %v2345 = vld [vmem:[%s8] sm:$0x1]
  %v2347 = vlaneseq
  %v2348 = vshrl.u32 %v2347, 7
  %v2349 = vsub.s32 0, %v2348
  %v2350 = vrot.slane %v2345, %v2349
  %2353 = vrot.lane.b32.xlu0 %v2340, 64
  %v2354 = vpop.permute.xlu0 %2353
  %v2355 = vsel %vm192, %v2354, 0
  %2357 = vmatprep.subr.mxu0 0.0
  %2358 = vmatpush1.msra.mxu0 %v2341
  %2359 = vmatprep.subr.mxu0 0.0
  %2360 = vmatpush1.msra.mxu0 %v2342
  %2361 = vmatprep.subr.mxu0 0.0
  %2362 = vmatpush1.msra.mxu0 %v2343
  %2363 = vmatprep.subr.mxu0 0.0
  %2364 = vmatpush1.msra.mxu0 %v2344
  %2365 = vmatprep.subr.mxu0 0.0
  %2366 = vmatpush1.msra.mxu0 0.0
  %2367 = vmatprep.subr.mxu0 0.0
  %2368 = vmatpush1.msra.mxu0 0.0
  %2369 = vmatprep.subr.mxu0 0.0
  %2370 = vmatpush1.msra.mxu0 0.0
  %2371 = vmatprep.subr.mxu0 0.0
  %2372 = vmatpush1.msra.mxu0 0.0
  %2373 = vmatprep.subr.mxu0 0.0
  %2374 = vmatpush1.msra.mxu0 0.0
  %2375 = vmatprep.subr.mxu0 0.0
  %2376 = vmatpush1.msra.mxu0 0.0
  %2377 = vmatprep.subr.mxu0 0.0
  %2378 = vmatpush1.msra.mxu0 0.0
  %2379 = vmatprep.subr.mxu0 0.0
  %2380 = vmatpush1.msra.mxu0 0.0
  %2381 = vmatprep.subr.mxu0 0.0
  %2382 = vmatpush1.msra.mxu0 0.0
  %2383 = vmatprep.subr.mxu0 0.0
  %2384 = vmatpush1.msra.mxu0 0.0
  %2385 = vmatprep.subr.mxu0 0.0
  %2386 = vmatpush1.msra.mxu0 0.0
  %2387 = vmatprep.subr.mxu0 0.0
  %2388 = vmatpush1.msra.mxu0 0.0
  %2389 = vmatprep.subr.mxu0 0.0
  %2390 = vmatpush1.msra.mxu0 0.0
  %2391 = vmatprep.subr.mxu0 0.0
  %2392 = vmatpush1.msra.mxu0 0.0
  %2393 = vmatprep.subr.mxu0 0.0
  %2394 = vmatpush1.msra.mxu0 0.0
  %2395 = vmatprep.subr.mxu0 0.0
  %2396 = vmatpush1.msra.mxu0 0.0
  %2397 = vmatprep.subr.mxu0 0.0
  %2398 = vmatpush1.msra.mxu0 0.0
  %2399 = vmatprep.subr.mxu0 0.0
  %2400 = vmatpush1.msra.mxu0 0.0
  %2401 = vmatprep.subr.mxu0 0.0
  %2402 = vmatpush1.msra.mxu0 0.0
  %2403 = vmatprep.subr.mxu0 0.0
  %2404 = vmatpush1.msra.mxu0 0.0
  %2405 = vmatprep.subr.mxu0 0.0
  %2406 = vmatpush1.msra.mxu0 0.0
  %2407 = vmatprep.subr.mxu0 0.0
  %2408 = vmatpush1.msra.mxu0 0.0
  %2409 = vmatprep.subr.mxu0 0.0
  %2410 = vmatpush1.msra.mxu0 0.0
  %2411 = vmatprep.subr.mxu0 0.0
  %2412 = vmatpush1.msra.mxu0 0.0
  %2413 = vmatprep.subr.mxu0 0.0
  %2414 = vmatpush1.msra.mxu0 0.0
  %2415 = vmatprep.subr.mxu0 0.0
  %2416 = vmatpush1.msra.mxu0 0.0
  %2417 = vmatprep.subr.mxu0 0.0
  %2418 = vmatpush1.msra.mxu0 0.0
  %2419 = vmatprep.subr.mxu0 0.0
  %2420 = vmatpush1.msra.mxu0 0.0
  %2421 = vmatprep.mubr.f32.mxu0 0.0
  %2422 = vmatmul.mubr.f32.gmra.mrb[0].mxu0 %v2355
  %v2423 = vpop.f32.mrb[0].mxu0
  %v2424 = vadd.f32 %v2350, %v2423
  %v2425 = vpop.f32.mrb[0].mxu0
  %2426 = vdwg.mxu0
  %2427 = vst [vmem:[%s9] sm:$0xff] %v2424
  // Predicated region
  $region38: #{stacked_lstm_forward.1} parent=0 // pred_check
    _
  $region39: #{stacked_lstm_forward.1} parent=0 // pred_check_branch
    %2429 = sbr.rel (0) target = $region41
  $region40: #{stacked_lstm_forward.1} parent=0 // pred_region
    _
  $region41: #{stacked_lstm_forward.1} parent=0 // pred_fallthru
    _
  // Predicated region
  $region42: #{stacked_lstm_forward.1} parent=0 // pred_check
    _
  $region43: #{stacked_lstm_forward.1} parent=0 // pred_check_branch
    %2431 = sbr.rel (0) target = $region45
  $region44: #{stacked_lstm_forward.1} parent=0 // pred_region
    _
  $region45: #{stacked_lstm_forward.1} parent=0 // pred_fallthru
    _

</llo_original>
